<compile_context>
chip_gen: v7x
topology: tpu7x:2x2x1
jax: 0.10.0
libtpu: 0.0.40
codegen_flags: <defaults>
</compile_context>

<pallas_src>
import jax
import jax.numpy as jnp
from jax import lax
from jax.experimental import pallas as pl
from jax.experimental.pallas import tpu as pltpu

# ----------------- hyper-parameters ("opt") -----------------
EMB = 32            # opt.emb_size
HID = 32            # opt.hid_size (== EMB: attention contracts hid vs encdim)
LAYERS = 1
K = 3
KMUL = 1
L = 4
LP1 = L + 1
A_DIM = 8
COND_A = 8
GENTYPES = 20       # decoder emits gentypes + 1 classes
WORDTYPES = 50
PAD_IDX = 0
MLP_SZ_MULT = 2
RNNINSZ = MLP_SZ_MULT * EMB       # 64
OH = HID + EMB                    # 64 (out_hid_sz)
NFIELDS = 5
NFEATS_SRC = 3
NFEATS_INP = 4
MAXFIELDS = 4
SEQLEN = 6
BSZ = 2
MAXLOCS = 2
VM1 = GENTYPES + 1 + NFIELDS      # 26 (before appended -inf column)
EOP_IDX = GENTYPES                # 20
INITRANGE = 0.1

KH = K * HID                      # 96  (joint hidden width, k in lanes)
G1 = GENTYPES + 1                 # 21
NROWS = LP1 * K * SEQLEN          # 90  (t, k, s) rows of the batched stage
NGATH = L * K * SEQLEN            # 72  rows used in the target gather (t < L)
KS = K * SEQLEN                   # 18

# TODO(synk): nn.Embedding lookups (gathers) have no clean Pallas hot-path mapping
# at these shapes; they stay in JAX glue. Dropout paths are no-ops (p=0, eval).


# ----------------- Emission hot-path kernel (per batch element) -----------------
def emission_kernel(seg_ref, hc_ref, sfe_ref, sfet_ref, fmask_ref, ct_ref,
                    wih_ref, whh_ref, bl_ref, gp_ref, wdec_ref, bdec_ref,
                    out_ref, st_ref):
    neg_inf = jnp.float32(-jnp.inf)

    # -- batched LSTM input projection: one (LP1*SEQLEN, R) @ (R, 4*K*H) matmul --
    xproj = jnp.dot(seg_ref[0], wih_ref[...],
                    preferred_element_type=jnp.float32)      # (30, 4*K*H)

    # -- the K per-state LSTMs run jointly via a block-diagonal recurrence matrix.
    #    Gate-major column layout: col = gate*K*H + k*H + j. Sequential over t only. --
    h_all = hc_ref[0, 0]                                     # (SEQLEN, K*H)
    c_all = hc_ref[0, 1]
    for t in range(LP1):
        gates = (xproj[t * SEQLEN:(t + 1) * SEQLEN, :]
                 + jnp.dot(h_all, whh_ref[...], preferred_element_type=jnp.float32)
                 + bl_ref[...])                              # (SEQLEN, 4*K*H)
        i_g = jax.nn.sigmoid(gates[:, 0 * KH:1 * KH])
        f_g = jax.nn.sigmoid(gates[:, 1 * KH:2 * KH])
        g_g = jnp.tanh(gates[:, 2 * KH:3 * KH])
        o_g = jax.nn.sigmoid(gates[:, 3 * KH:4 * KH])
        c_all = f_g * c_all + i_g * g_g
        h_all = o_g * jnp.tanh(c_all)
        # stash states in (t, k, s)-row order for the fully batched tail
        for k in range(K):
            base = t * KS + k * SEQLEN
            st_ref[base:base + SEQLEN, :] = h_all[:, k * HID:(k + 1) * HID]

    st = st_ref[...]                                         # (NROWS, H)

    # -- attention over source fields, batched over all (t, k, s) rows --
    a1 = jnp.tanh(st * gp_ref[0] + gp_ref[1])
    asc = (jnp.dot(a1, sfet_ref[0], preferred_element_type=jnp.float32)
           + fmask_ref[0])                                   # (NROWS, NFIELDS)
    am = jnp.max(asc, axis=-1, keepdims=True)
    ae = jnp.exp(asc - am)
    aprobs = ae * pl.reciprocal(jnp.sum(ae, axis=-1, keepdims=True), approx=True)
    ctx = jnp.dot(aprobs, sfe_ref[0], preferred_element_type=jnp.float32)  # (NROWS, EMB)

    # -- output gating + decoder; [state, ctx] concat folded into two matmuls --
    dec = (jnp.dot(jnp.tanh(st * gp_ref[2] + gp_ref[3]), wdec_ref[0],
                   preferred_element_type=jnp.float32)
           + jnp.dot(jnp.tanh(ctx * gp_ref[4] + gp_ref[5]), wdec_ref[1],
                     preferred_element_type=jnp.float32)
           + bdec_ref[...])                                  # (NROWS, G+1)

    # -- log-softmax over the virtual concat [dec, asc] (no 26-lane concat) --
    m = jnp.maximum(jnp.max(dec, axis=-1, keepdims=True),
                    jnp.max(asc, axis=-1, keepdims=True))
    z = jnp.log(jnp.sum(jnp.exp(dec - m), axis=-1, keepdims=True)
                + jnp.sum(jnp.exp(asc - m), axis=-1, keepdims=True))
    dec_lp = dec - m - z
    asc_lp = asc - m - z

    # -- masked-max gather of target log-probs (batched over l, k, s), then
    #    logsumexp over copy locations. Index VM1 hits neither piece -> -inf
    #    (the appended -inf column of the reference implementation). --
    dec_g = dec_lp[:NGATH, :]
    asc_g = asc_lp[:NGATH, :]
    ct = ct_ref[0]                                           # (NGATH, MAXLOCS) int32
    iota_d = lax.broadcasted_iota(jnp.int32, (NGATH, G1), 1)
    iota_a = lax.broadcasted_iota(jnp.int32, (NGATH, NFIELDS), 1) + G1
    ps = []
    for j in range(MAXLOCS):
        idx = ct[:, j:j + 1]
        pd = jnp.max(jnp.where(iota_d == idx, dec_g, neg_inf), axis=1, keepdims=True)
        pa = jnp.max(jnp.where(iota_a == idx, asc_g, neg_inf), axis=1, keepdims=True)
        ps.append(jnp.maximum(pd, pa))
    psk = jnp.concatenate(ps, axis=1)                        # (NGATH, MAXLOCS)
    pm = jnp.max(psk, axis=1, keepdims=True)
    pm_safe = jnp.maximum(pm, jnp.float32(-1e30))            # all -inf -> -inf, not NaN
    lls = pm + jnp.log(jnp.sum(jnp.exp(psk - pm_safe), axis=1, keepdims=True))

    # -- cumulative sum over segment length + end-of-phrase log-prob --
    running = jnp.zeros((KS, 1), jnp.float32)
    cols = []
    for l in range(L):
        running = running + lls[l * KS:(l + 1) * KS, :]
        eop = dec_lp[(l + 1) * KS:(l + 2) * KS, EOP_IDX:EOP_IDX + 1]
        cols.append(running + eop)
    out_ref[0] = jnp.concatenate(cols, axis=1)               # (K*SEQLEN, L), rows (k, s)


def emission_obs_logprobs(seg, hc0, sfe, sfet, fmask3, ct,
                          wih_pack, whh_bd, bl_pack, gate_pack, wdec_pack, bdec):
    return pl.pallas_call(
        emission_kernel,
        out_shape=jax.ShapeDtypeStruct((BSZ, KS, L), jnp.float32),
        grid_spec=pltpu.PrefetchScalarGridSpec(
            num_scalar_prefetch=0,
            grid=(BSZ,),
            in_specs=[
                pl.BlockSpec((1, LP1 * SEQLEN, RNNINSZ), lambda b: (b, 0, 0)),
                pl.BlockSpec((1, 2, SEQLEN, KH), lambda b: (b, 0, 0, 0)),
                pl.BlockSpec((1, NFIELDS, EMB), lambda b: (b, 0, 0)),
                pl.BlockSpec((1, EMB, NFIELDS), lambda b: (b, 0, 0)),
                pl.BlockSpec((1, 1, NFIELDS), lambda b: (b, 0, 0)),
                pl.BlockSpec((1, NGATH, MAXLOCS), lambda b: (b, 0, 0)),
                pl.BlockSpec((RNNINSZ, 4 * KH), lambda b: (0, 0)),
                pl.BlockSpec((KH, 4 * KH), lambda b: (0, 0)),
                pl.BlockSpec((1, 4 * KH), lambda b: (0, 0)),
                pl.BlockSpec((6, NROWS, HID), lambda b: (0, 0, 0)),
                pl.BlockSpec((2, HID, G1), lambda b: (0, 0, 0)),
                pl.BlockSpec((1, G1), lambda b: (0, 0)),
            ],
            out_specs=pl.BlockSpec((1, KS, L), lambda b: (b, 0, 0)),
            scratch_shapes=[pltpu.VMEM((NROWS, HID), jnp.float32)],
        ),
        compiler_params=pltpu.CompilerParams(dimension_semantics=("parallel",)),
    )(seg, hc0, sfe, sfet, fmask3, ct,
      wih_pack, whh_bd, bl_pack, gate_pack, wdec_pack, bdec)


# ----------------- deterministic parameter init -----------------
def init_params(key):
    def u(k, shape):
        return jax.random.uniform(k, shape, jnp.float32, -INITRANGE, INITRANGE)
    keys = iter(jax.random.split(key, 32))
    p = {}
    lut = u(next(keys), (WORDTYPES, EMB))
    lut = lut.at[jnp.array([PAD_IDX, 1, 2, 3])].set(0.0)   # pad + <ncf1..3> zeroed
    p['lut'] = lut
    p['src_bias'] = u(next(keys), (1, EMB))
    p['uniq_bias'] = u(next(keys), (1, EMB))
    # Transition
    p['A_from'] = u(next(keys), (K * KMUL, A_DIM))
    p['A_to'] = u(next(keys), (A_DIM, K * KMUL))
    p['cond_W'] = u(next(keys), (K * KMUL * COND_A * 2, EMB))
    p['cond_b'] = u(next(keys), (K * KMUL * COND_A * 2,))
    p['init_W'] = u(next(keys), (K * KMUL, EMB))
    p['init_b'] = u(next(keys), (K * KMUL,))
    # Length (unif_lenps=True)
    p['len_scores'] = jnp.ones((1, L), jnp.float32)
    # Emission
    p['mlp_W'] = u(next(keys), (RNNINSZ, NFEATS_INP * EMB))
    p['mlp_b'] = u(next(keys), (RNNINSZ,))
    p['start_emb'] = u(next(keys), (1, 1, RNNINSZ))
    p['pad_emb'] = jnp.zeros((1, 1, RNNINSZ), jnp.float32)
    p['w_ih'] = u(next(keys), (K, 4 * HID, RNNINSZ))
    p['w_hh'] = u(next(keys), (K, 4 * HID, HID))
    p['b_ih'] = u(next(keys), (K, 4 * HID))
    p['b_hh'] = u(next(keys), (K, 4 * HID))
    p['h0_W'] = u(next(keys), (2 * HID, EMB))
    p['h0_b'] = u(next(keys), (2 * HID,))
    p['att_g'] = u(next(keys), (K, HID))
    p['att_b'] = u(next(keys), (K, HID))
    p['out_g'] = u(next(keys), (K, OH))
    p['out_b'] = u(next(keys), (K, OH))
    p['dec_W'] = u(next(keys), (GENTYPES + 1, OH))
    p['dec_b'] = u(next(keys), (GENTYPES + 1,))
    return p


def _expand_states(v):
    # (K, D) -> (LP1*K*SEQLEN, D): row = t*K*SEQLEN + k*SEQLEN + s maps to v[k]
    return jnp.broadcast_to(v[None, :, None, :],
                            (LP1, K, SEQLEN, v.shape[-1])).reshape(NROWS, v.shape[-1])


# ----------------- HSMM.forward -----------------
def hsmm_forward(p, src, amask, uniqfields, seqlen, inps, fmask, combotargs, bsz):
    lut = p['lut']
    Ktot = K * KMUL

    # ---- Encoder (max_pool=False) ----
    bszl, nfields, nfeats_src = src.shape
    embs = lut[src.reshape(-1, nfeats_src)]                       # (bsz*nf, nfeats, emb)
    embs = jnp.tanh(embs.sum(1) + p['src_bias'])                  # (bsz*nf, emb)
    srcfieldenc = embs.reshape(bszl, nfields, EMB)
    srcenc = (srcfieldenc * amask[:, :, None]).sum(1)             # (bsz, emb)
    uniqenc = jax.nn.relu(lut[uniqfields].sum(1) + p['uniq_bias'])  # (bsz, emb)

    # ---- Transition (tiny: fused XLA glue, no pallas_call) ----
    ctm = (uniqenc @ p['cond_W'].T + p['cond_b']).reshape(bszl, Ktot, 2 * COND_A)
    nufrom, nuto = ctm[:, :, :COND_A], ctm[:, :, COND_A:]
    selfmask = jnp.where(jnp.eye(Ktot, dtype=bool),
                         jnp.float32(-jnp.inf), jnp.float32(0.0))
    tsc = p['A_from'] @ p['A_to'] + selfmask                      # (K, K), b-independent
    trans_scores = tsc[None] + jnp.einsum('bka,bja->bkj', nufrom, nuto)
    trans_lps = jax.nn.log_softmax(trans_scores, axis=-1)
    init_logps = jax.nn.log_softmax(uniqenc @ p['init_W'].T + p['init_b'], axis=1)
    trans_logps = jnp.broadcast_to(trans_lps[None], (seqlen - 1, bszl, Ktot, Ktot))

    # ---- Length (unif_lenps) ----
    len_scores = jnp.broadcast_to(p['len_scores'], (Ktot, L))
    len_logprobs = [jnp.zeros((1, Ktot), jnp.float32)]
    for l in range(2, L + 1):
        len_logprobs.append(jax.nn.log_softmax(len_scores[:, :l], axis=1).T)

    # ---- Emission glue: embeddings, mlpinp, segment stacking, h0/c0, packing ----
    slen, bszl2, maxlocs, nfeats = inps.shape
    iembs = lut[inps]                                             # (sl, bsz, ml, nf, emb)
    flat = iembs.reshape(slen, bszl2, maxlocs, nfeats * EMB)
    inpembs = jax.nn.relu(flat @ p['mlp_W'].T + p['mlp_b']).mean(2)  # (sl, bsz, rnninsz)
    xemb = jnp.transpose(inpembs, (1, 0, 2))                      # (bsz, sl, rnninsz)
    rows = [jnp.broadcast_to(p['start_emb'], (bszl2, slen, RNNINSZ)), xemb]
    for i in range(1, L):
        pad = jnp.broadcast_to(p['pad_emb'], (bszl2, i, RNNINSZ))
        rows.append(jnp.concatenate([xemb[:, i:], pad], axis=1))
    seg = jnp.stack(rows, axis=1).reshape(bszl2, LP1 * slen, RNNINSZ)  # (bsz, LP1*sl, R)

    inits = srcenc @ p['h0_W'].T + p['h0_b']                      # (bsz, 2*hid)
    h0 = jnp.tanh(inits[:, :HID])
    c0 = inits[:, HID:]
    h0b = jnp.broadcast_to(h0[:, None, :], (bszl2, slen, HID))
    c0b = jnp.broadcast_to(c0[:, None, :], (bszl2, slen, HID))
    hc0 = jnp.stack([jnp.tile(h0b, (1, 1, K)), jnp.tile(c0b, (1, 1, K))],
                    axis=1)                                       # (bsz, 2, sl, K*H)

    # LSTM weights packed gate-major: col = gate*K*H + k*H + j
    wih_pack = jnp.transpose(p['w_ih'].reshape(K, 4, HID, RNNINSZ),
                             (3, 1, 0, 2)).reshape(RNNINSZ, 4 * KH)
    t2p = jnp.transpose(p['w_hh'].reshape(K, 4, HID, HID), (0, 3, 1, 2))   # [k, m, g, j]
    whh_bd = jnp.einsum('kmgj,kl->kmglj', t2p,
                        jnp.eye(K, dtype=jnp.float32)).reshape(KH, 4 * KH)
    bl_pack = jnp.transpose((p['b_ih'] + p['b_hh']).reshape(K, 4, HID),
                            (1, 0, 2)).reshape(1, 4 * KH)

    # per-state gates/biases pre-broadcast to the (t, k, s) row layout
    gate_pack = jnp.stack([_expand_states(p['att_g']), _expand_states(p['att_b']),
                           _expand_states(p['out_g'][:, :HID]),
                           _expand_states(p['out_b'][:, :HID]),
                           _expand_states(p['out_g'][:, HID:]),
                           _expand_states(p['out_b'][:, HID:])])   # (6, NROWS, H)
    wdec_pack = jnp.stack([p['dec_W'].T[:HID], p['dec_W'].T[HID:]])  # (2, H, G+1)
    bdec = p['dec_b'][None, :]

    sfet = jnp.transpose(srcfieldenc, (0, 2, 1))                  # (bsz, emb, nfields)
    fmask3 = fmask[:, None, :]

    ct = combotargs.reshape(L, bszl2, slen, maxlocs).astype(jnp.int32)
    ct = jnp.broadcast_to(ct[:, :, None, :, :], (L, bszl2, K, slen, maxlocs))
    ct = jnp.transpose(ct, (1, 0, 2, 3, 4)).reshape(bszl2, L * K * slen, maxlocs)

    seg_out = emission_obs_logprobs(seg, hc0, srcfieldenc, sfet, fmask3, ct,
                                    wih_pack, whh_bd, bl_pack, gate_pack,
                                    wdec_pack, bdec)              # (bsz, K*sl, L)
    fwd_obs_logps = jnp.transpose(seg_out.reshape(bszl2, K, slen, L),
                                  (3, 2, 0, 1))                   # (L, sl, bsz, K)
    if KMUL > 1:
        fwd_obs_logps = jnp.tile(fwd_obs_logps, (1, 1, 1, KMUL))
    return init_logps, trans_logps, len_logprobs, fwd_obs_logps


if __name__ == "__main__":
    key = jax.random.PRNGKey(0)
    kp, k1, k2, k3, k4, k5 = jax.random.split(key, 6)
    params = init_params(kp)

    src = jax.random.randint(k1, (BSZ, NFIELDS, NFEATS_SRC), 4, WORDTYPES, dtype=jnp.int32)
    uniqfields = jax.random.randint(k2, (BSZ, MAXFIELDS), 4, WORDTYPES, dtype=jnp.int32)
    inps = jax.random.randint(k3, (SEQLEN, BSZ, MAXLOCS, NFEATS_INP), 4, WORDTYPES,
                              dtype=jnp.int32)

    # field masks: batch 0 has NFIELDS real fields, batch 1 has the last one padded
    nreal = jnp.array([NFIELDS, NFIELDS - 1], dtype=jnp.float32)
    field_valid = jnp.arange(NFIELDS)[None, :] < nreal[:, None]
    amask = jnp.where(field_valid, 1.0 / nreal[:, None], 0.0).astype(jnp.float32)
    fmask = jnp.where(field_valid, 0.0, -jnp.inf).astype(jnp.float32)

    # combotargs: first copy-location always a valid word index; second may be
    # anything including the appended -inf column (index VM1)
    ct0 = jax.random.randint(k4, (L, BSZ * SEQLEN, 1), 0, GENTYPES, dtype=jnp.int32)
    ct1 = jax.random.randint(k5, (L, BSZ * SEQLEN, 1), 0, VM1 + 1, dtype=jnp.int32)
    combotargs = jnp.concatenate([ct0, ct1], axis=2)

    fwd = jax.jit(hsmm_forward, static_argnums=(4, 8))
    init_logps, trans_logps, len_logprobs, fwd_obs_logps = fwd(
        params, src, amask, uniqfields, SEQLEN, inps, fmask, combotargs, BSZ)
    jax.block_until_ready((init_logps, trans_logps, len_logprobs, fwd_obs_logps))

    assert init_logps.shape == (BSZ, K * KMUL)
    assert trans_logps.shape == (SEQLEN - 1, BSZ, K * KMUL, K * KMUL)
    assert len(len_logprobs) == L
    assert fwd_obs_logps.shape == (L, SEQLEN, BSZ, K * KMUL)
    assert not bool(jnp.any(jnp.isnan(fwd_obs_logps)))
    print("KERNEL_OK")
</pallas_src>

<mosaic_0001>
module attributes {stable_mosaic.version = 11 : i64} {
  func.func @emission_kernel(%arg0: i32, %arg1: memref<1x30x64xf32, #tpu.memory_space<vmem>>, %arg2: memref<1x2x6x96xf32, #tpu.memory_space<vmem>>, %arg3: memref<1x5x32xf32, #tpu.memory_space<vmem>>, %arg4: memref<1x32x5xf32, #tpu.memory_space<vmem>>, %arg5: memref<1x1x5xf32, #tpu.memory_space<vmem>>, %arg6: memref<1x72x2xi32, #tpu.memory_space<vmem>>, %arg7: memref<64x384xf32, #tpu.memory_space<vmem>>, %arg8: memref<96x384xf32, #tpu.memory_space<vmem>>, %arg9: memref<1x384xf32, #tpu.memory_space<vmem>>, %arg10: memref<6x90x32xf32, #tpu.memory_space<vmem>>, %arg11: memref<2x32x21xf32, #tpu.memory_space<vmem>>, %arg12: memref<1x21xf32, #tpu.memory_space<vmem>>, %arg13: memref<1x18x4xf32, #tpu.memory_space<vmem>>, %arg14: memref<90x32xf32, #tpu.memory_space<vmem>>) attributes {dimension_semantics = [#tpu.dimension_semantics<parallel>], iteration_bounds = array<i64: 2>, scalar_prefetch = 0 : i64, scratch_operands = 1 : i64, tpu.core_type = #tpu.core_type<tc>, window_params = [{transform_indices = @transform_0, window_bounds = array<i64: 1, 30, 64>}, {transform_indices = @transform_1, window_bounds = array<i64: 1, 2, 6, 96>}, {transform_indices = @transform_2, window_bounds = array<i64: 1, 5, 32>}, {transform_indices = @transform_3, window_bounds = array<i64: 1, 32, 5>}, {transform_indices = @transform_4, window_bounds = array<i64: 1, 1, 5>}, {transform_indices = @transform_5, window_bounds = array<i64: 1, 72, 2>}, {pipeline_mode = #tpu.pipeline_mode<synchronous>, transform_indices = @transform_6, window_bounds = array<i64: 64, 384>}, {pipeline_mode = #tpu.pipeline_mode<synchronous>, transform_indices = @transform_7, window_bounds = array<i64: 96, 384>}, {pipeline_mode = #tpu.pipeline_mode<synchronous>, transform_indices = @transform_8, window_bounds = array<i64: 1, 384>}, {pipeline_mode = #tpu.pipeline_mode<synchronous>, transform_indices = @transform_9, window_bounds = array<i64: 6, 90, 32>}, {pipeline_mode = #tpu.pipeline_mode<synchronous>, transform_indices = @transform_10, window_bounds = array<i64: 2, 32, 21>}, {pipeline_mode = #tpu.pipeline_mode<synchronous>, transform_indices = @transform_11, window_bounds = array<i64: 1, 21>}, {transform_indices = @transform_12, window_bounds = array<i64: 1, 18, 4>}]} {
    %c0 = arith.constant 0 : index
    %c0_0 = arith.constant 0 : index
    %c0_1 = arith.constant 0 : index
    %0 = vector.load %arg1[%c0, %c0_0, %c0_1] : memref<1x30x64xf32, #tpu.memory_space<vmem>>, vector<1x30x64xf32>
    %1 = vector.shape_cast %0 : vector<1x30x64xf32> to vector<30x64xf32>
    %c0_2 = arith.constant 0 : index
    %c0_3 = arith.constant 0 : index
    %2 = vector.load %arg7[%c0_2, %c0_3] : memref<64x384xf32, #tpu.memory_space<vmem>>, vector<64x384xf32>
    %cst = arith.constant dense<0.000000e+00> : vector<30x384xf32>
    %3 = tpu.matmul %1, %2, %cst {dimension_numbers = #tpu.dot_dimension_numbers<[1], [0], [0], [1], [0, 0, 1, 1], [], []>} : vector<30x64xf32>, vector<64x384xf32>, vector<30x384xf32> -> vector<30x384xf32>
    %c0_4 = arith.constant 0 : index
    %c0_5 = arith.constant 0 : index
    %c0_6 = arith.constant 0 : index
    %c0_7 = arith.constant 0 : index
    %4 = vector.load %arg2[%c0_4, %c0_5, %c0_6, %c0_7] : memref<1x2x6x96xf32, #tpu.memory_space<vmem>>, vector<1x1x6x96xf32>
    %5 = vector.shape_cast %4 : vector<1x1x6x96xf32> to vector<6x96xf32>
    %c0_8 = arith.constant 0 : index
    %c1 = arith.constant 1 : index
    %c0_9 = arith.constant 0 : index
    %c0_10 = arith.constant 0 : index
    %6 = vector.load %arg2[%c0_8, %c1, %c0_9, %c0_10] : memref<1x2x6x96xf32, #tpu.memory_space<vmem>>, vector<1x1x6x96xf32>
    %7 = vector.shape_cast %6 : vector<1x1x6x96xf32> to vector<6x96xf32>
    %8 = vector.extract_strided_slice %3 {offsets = [0, 0], sizes = [6, 384], strides = [1, 1]} : vector<30x384xf32> to vector<6x384xf32>
    %c0_11 = arith.constant 0 : index
    %c0_12 = arith.constant 0 : index
    %9 = vector.load %arg8[%c0_11, %c0_12] : memref<96x384xf32, #tpu.memory_space<vmem>>, vector<96x384xf32>
    %cst_13 = arith.constant dense<0.000000e+00> : vector<6x384xf32>
    %10 = tpu.matmul %5, %9, %cst_13 {dimension_numbers = #tpu.dot_dimension_numbers<[1], [0], [0], [1], [0, 0, 1, 1], [], []>} : vector<6x96xf32>, vector<96x384xf32>, vector<6x384xf32> -> vector<6x384xf32>
    %11 = arith.addf %8, %10 : vector<6x384xf32>
    %c0_14 = arith.constant 0 : index
    %c0_15 = arith.constant 0 : index
    %12 = vector.load %arg9[%c0_14, %c0_15] : memref<1x384xf32, #tpu.memory_space<vmem>>, vector<1x384xf32>
    %13 = vector.broadcast %12 : vector<1x384xf32> to vector<6x384xf32>
    %14 = arith.addf %11, %13 : vector<6x384xf32>
    %15 = vector.extract_strided_slice %14 {offsets = [0, 0], sizes = [6, 96], strides = [1, 1]} : vector<6x384xf32> to vector<6x96xf32>
    %16 = arith.negf %15 : vector<6x96xf32>
    %17 = math.exp %16 : vector<6x96xf32>
    %cst_16 = arith.constant 1.000000e+00 : f32
    %18 = vector.broadcast %cst_16 : f32 to vector<6x96xf32>
    %19 = arith.addf %18, %17 : vector<6x96xf32>
    %20 = arith.divf %18, %19 : vector<6x96xf32>
    %21 = vector.extract_strided_slice %14 {offsets = [0, 96], sizes = [6, 96], strides = [1, 1]} : vector<6x384xf32> to vector<6x96xf32>
    %22 = arith.negf %21 : vector<6x96xf32>
    %23 = math.exp %22 : vector<6x96xf32>
    %cst_17 = arith.constant 1.000000e+00 : f32
    %24 = vector.broadcast %cst_17 : f32 to vector<6x96xf32>
    %25 = arith.addf %24, %23 : vector<6x96xf32>
    %26 = arith.divf %24, %25 : vector<6x96xf32>
    %27 = vector.extract_strided_slice %14 {offsets = [0, 192], sizes = [6, 96], strides = [1, 1]} : vector<6x384xf32> to vector<6x96xf32>
    %28 = math.tanh %27 : vector<6x96xf32>
    %29 = vector.extract_strided_slice %14 {offsets = [0, 288], sizes = [6, 96], strides = [1, 1]} : vector<6x384xf32> to vector<6x96xf32>
    %30 = arith.negf %29 : vector<6x96xf32>
    %31 = math.exp %30 : vector<6x96xf32>
    %cst_18 = arith.constant 1.000000e+00 : f32
    %32 = vector.broadcast %cst_18 : f32 to vector<6x96xf32>
    %33 = arith.addf %32, %31 : vector<6x96xf32>
    %34 = arith.divf %32, %33 : vector<6x96xf32>
    %35 = arith.mulf %26, %7 : vector<6x96xf32>
    %36 = arith.mulf %20, %28 : vector<6x96xf32>
    %37 = arith.addf %35, %36 : vector<6x96xf32>
    %38 = math.tanh %37 : vector<6x96xf32>
    %39 = arith.mulf %34, %38 : vector<6x96xf32>
    %40 = vector.extract_strided_slice %39 {offsets = [0, 0], sizes = [6, 32], strides = [1, 1]} : vector<6x96xf32> to vector<6x32xf32>
    %c0_19 = arith.constant 0 : index
    %c0_20 = arith.constant 0 : index
    %41 = vector.load %arg14[%c0_19, %c0_20] : memref<90x32xf32, #tpu.memory_space<vmem>>, vector<6x32xf32>
    tpu.vector_store %arg14[%c0_19, %c0_20], %40 {strides = array<i32>} : memref<90x32xf32, #tpu.memory_space<vmem>>, vector<6x32xf32>,
    %42 = vector.extract_strided_slice %39 {offsets = [0, 32], sizes = [6, 32], strides = [1, 1]} : vector<6x96xf32> to vector<6x32xf32>
    %c6 = arith.constant 6 : index
    %c0_21 = arith.constant 0 : index
    %43 = vector.load %arg14[%c6, %c0_21] : memref<90x32xf32, #tpu.memory_space<vmem>>, vector<6x32xf32>
    tpu.vector_store %arg14[%c6, %c0_21], %42 {strides = array<i32>} : memref<90x32xf32, #tpu.memory_space<vmem>>, vector<6x32xf32>,
    %44 = vector.extract_strided_slice %39 {offsets = [0, 64], sizes = [6, 32], strides = [1, 1]} : vector<6x96xf32> to vector<6x32xf32>
    %c12 = arith.constant 12 : index
    %c0_22 = arith.constant 0 : index
    %45 = vector.load %arg14[%c12, %c0_22] : memref<90x32xf32, #tpu.memory_space<vmem>>, vector<6x32xf32>
    tpu.vector_store %arg14[%c12, %c0_22], %44 {strides = array<i32>} : memref<90x32xf32, #tpu.memory_space<vmem>>, vector<6x32xf32>,
    %46 = vector.extract_strided_slice %3 {offsets = [6, 0], sizes = [6, 384], strides = [1, 1]} : vector<30x384xf32> to vector<6x384xf32>
    %c0_23 = arith.constant 0 : index
    %c0_24 = arith.constant 0 : index
    %47 = vector.load %arg8[%c0_23, %c0_24] : memref<96x384xf32, #tpu.memory_space<vmem>>, vector<96x384xf32>
    %cst_25 = arith.constant dense<0.000000e+00> : vector<6x384xf32>
    %48 = tpu.matmul %39, %47, %cst_25 {dimension_numbers = #tpu.dot_dimension_numbers<[1], [0], [0], [1], [0, 0, 1, 1], [], []>} : vector<6x96xf32>, vector<96x384xf32>, vector<6x384xf32> -> vector<6x384xf32>
    %49 = arith.addf %46, %48 : vector<6x384xf32>
    %c0_26 = arith.constant 0 : index
    %c0_27 = arith.constant 0 : index
    %50 = vector.load %arg9[%c0_26, %c0_27] : memref<1x384xf32, #tpu.memory_space<vmem>>, vector<1x384xf32>
    %51 = vector.broadcast %50 : vector<1x384xf32> to vector<6x384xf32>
    %52 = arith.addf %49, %51 : vector<6x384xf32>
    %53 = vector.extract_strided_slice %52 {offsets = [0, 0], sizes = [6, 96], strides = [1, 1]} : vector<6x384xf32> to vector<6x96xf32>
    %54 = arith.negf %53 : vector<6x96xf32>
    %55 = math.exp %54 : vector<6x96xf32>
    %cst_28 = arith.constant 1.000000e+00 : f32
    %56 = vector.broadcast %cst_28 : f32 to vector<6x96xf32>
    %57 = arith.addf %56, %55 : vector<6x96xf32>
    %58 = arith.divf %56, %57 : vector<6x96xf32>
    %59 = vector.extract_strided_slice %52 {offsets = [0, 96], sizes = [6, 96], strides = [1, 1]} : vector<6x384xf32> to vector<6x96xf32>
    %60 = arith.negf %59 : vector<6x96xf32>
    %61 = math.exp %60 : vector<6x96xf32>
    %cst_29 = arith.constant 1.000000e+00 : f32
    %62 = vector.broadcast %cst_29 : f32 to vector<6x96xf32>
    %63 = arith.addf %62, %61 : vector<6x96xf32>
    %64 = arith.divf %62, %63 : vector<6x96xf32>
    %65 = vector.extract_strided_slice %52 {offsets = [0, 192], sizes = [6, 96], strides = [1, 1]} : vector<6x384xf32> to vector<6x96xf32>
    %66 = math.tanh %65 : vector<6x96xf32>
    %67 = vector.extract_strided_slice %52 {offsets = [0, 288], sizes = [6, 96], strides = [1, 1]} : vector<6x384xf32> to vector<6x96xf32>
    %68 = arith.negf %67 : vector<6x96xf32>
    %69 = math.exp %68 : vector<6x96xf32>
    %cst_30 = arith.constant 1.000000e+00 : f32
    %70 = vector.broadcast %cst_30 : f32 to vector<6x96xf32>
    %71 = arith.addf %70, %69 : vector<6x96xf32>
    %72 = arith.divf %70, %71 : vector<6x96xf32>
    %73 = arith.mulf %64, %37 : vector<6x96xf32>
    %74 = arith.mulf %58, %66 : vector<6x96xf32>
    %75 = arith.addf %73, %74 : vector<6x96xf32>
    %76 = math.tanh %75 : vector<6x96xf32>
    %77 = arith.mulf %72, %76 : vector<6x96xf32>
    %78 = vector.extract_strided_slice %77 {offsets = [0, 0], sizes = [6, 32], strides = [1, 1]} : vector<6x96xf32> to vector<6x32xf32>
    %c18 = arith.constant 18 : index
    %c0_31 = arith.constant 0 : index
    %79 = vector.load %arg14[%c18, %c0_31] : memref<90x32xf32, #tpu.memory_space<vmem>>, vector<6x32xf32>
    tpu.vector_store %arg14[%c18, %c0_31], %78 {strides = array<i32>} : memref<90x32xf32, #tpu.memory_space<vmem>>, vector<6x32xf32>,
    %80 = vector.extract_strided_slice %77 {offsets = [0, 32], sizes = [6, 32], strides = [1, 1]} : vector<6x96xf32> to vector<6x32xf32>
    %c24 = arith.constant 24 : index
    %c0_32 = arith.constant 0 : index
    %81 = vector.load %arg14[%c24, %c0_32] : memref<90x32xf32, #tpu.memory_space<vmem>>, vector<6x32xf32>
    tpu.vector_store %arg14[%c24, %c0_32], %80 {strides = array<i32>} : memref<90x32xf32, #tpu.memory_space<vmem>>, vector<6x32xf32>,
    %82 = vector.extract_strided_slice %77 {offsets = [0, 64], sizes = [6, 32], strides = [1, 1]} : vector<6x96xf32> to vector<6x32xf32>
    %c30 = arith.constant 30 : index
    %c0_33 = arith.constant 0 : index
    %83 = vector.load %arg14[%c30, %c0_33] : memref<90x32xf32, #tpu.memory_space<vmem>>, vector<6x32xf32>
    tpu.vector_store %arg14[%c30, %c0_33], %82 {strides = array<i32>} : memref<90x32xf32, #tpu.memory_space<vmem>>, vector<6x32xf32>,
    %84 = vector.extract_strided_slice %3 {offsets = [12, 0], sizes = [6, 384], strides = [1, 1]} : vector<30x384xf32> to vector<6x384xf32>
    %c0_34 = arith.constant 0 : index
    %c0_35 = arith.constant 0 : index
    %85 = vector.load %arg8[%c0_34, %c0_35] : memref<96x384xf32, #tpu.memory_space<vmem>>, vector<96x384xf32>
    %cst_36 = arith.constant dense<0.000000e+00> : vector<6x384xf32>
    %86 = tpu.matmul %77, %85, %cst_36 {dimension_numbers = #tpu.dot_dimension_numbers<[1], [0], [0], [1], [0, 0, 1, 1], [], []>} : vector<6x96xf32>, vector<96x384xf32>, vector<6x384xf32> -> vector<6x384xf32>
    %87 = arith.addf %84, %86 : vector<6x384xf32>
    %c0_37 = arith.constant 0 : index
    %c0_38 = arith.constant 0 : index
    %88 = vector.load %arg9[%c0_37, %c0_38] : memref<1x384xf32, #tpu.memory_space<vmem>>, vector<1x384xf32>
    %89 = vector.broadcast %88 : vector<1x384xf32> to vector<6x384xf32>
    %90 = arith.addf %87, %89 : vector<6x384xf32>
    %91 = vector.extract_strided_slice %90 {offsets = [0, 0], sizes = [6, 96], strides = [1, 1]} : vector<6x384xf32> to vector<6x96xf32>
    %92 = arith.negf %91 : vector<6x96xf32>
    %93 = math.exp %92 : vector<6x96xf32>
    %cst_39 = arith.constant 1.000000e+00 : f32
    %94 = vector.broadcast %cst_39 : f32 to vector<6x96xf32>
    %95 = arith.addf %94, %93 : vector<6x96xf32>
    %96 = arith.divf %94, %95 : vector<6x96xf32>
    %97 = vector.extract_strided_slice %90 {offsets = [0, 96], sizes = [6, 96], strides = [1, 1]} : vector<6x384xf32> to vector<6x96xf32>
    %98 = arith.negf %97 : vector<6x96xf32>
    %99 = math.exp %98 : vector<6x96xf32>
    %cst_40 = arith.constant 1.000000e+00 : f32
    %100 = vector.broadcast %cst_40 : f32 to vector<6x96xf32>
    %101 = arith.addf %100, %99 : vector<6x96xf32>
    %102 = arith.divf %100, %101 : vector<6x96xf32>
    %103 = vector.extract_strided_slice %90 {offsets = [0, 192], sizes = [6, 96], strides = [1, 1]} : vector<6x384xf32> to vector<6x96xf32>
    %104 = math.tanh %103 : vector<6x96xf32>
    %105 = vector.extract_strided_slice %90 {offsets = [0, 288], sizes = [6, 96], strides = [1, 1]} : vector<6x384xf32> to vector<6x96xf32>
    %106 = arith.negf %105 : vector<6x96xf32>
    %107 = math.exp %106 : vector<6x96xf32>
    %cst_41 = arith.constant 1.000000e+00 : f32
    %108 = vector.broadcast %cst_41 : f32 to vector<6x96xf32>
    %109 = arith.addf %108, %107 : vector<6x96xf32>
    %110 = arith.divf %108, %109 : vector<6x96xf32>
    %111 = arith.mulf %102, %75 : vector<6x96xf32>
    %112 = arith.mulf %96, %104 : vector<6x96xf32>
    %113 = arith.addf %111, %112 : vector<6x96xf32>
    %114 = math.tanh %113 : vector<6x96xf32>
    %115 = arith.mulf %110, %114 : vector<6x96xf32>
    %116 = vector.extract_strided_slice %115 {offsets = [0, 0], sizes = [6, 32], strides = [1, 1]} : vector<6x96xf32> to vector<6x32xf32>
    %c36 = arith.constant 36 : index
    %c0_42 = arith.constant 0 : index
    %117 = vector.load %arg14[%c36, %c0_42] : memref<90x32xf32, #tpu.memory_space<vmem>>, vector<6x32xf32>
    tpu.vector_store %arg14[%c36, %c0_42], %116 {strides = array<i32>} : memref<90x32xf32, #tpu.memory_space<vmem>>, vector<6x32xf32>,
    %118 = vector.extract_strided_slice %115 {offsets = [0, 32], sizes = [6, 32], strides = [1, 1]} : vector<6x96xf32> to vector<6x32xf32>
    %c42 = arith.constant 42 : index
    %c0_43 = arith.constant 0 : index
    %119 = vector.load %arg14[%c42, %c0_43] : memref<90x32xf32, #tpu.memory_space<vmem>>, vector<6x32xf32>
    tpu.vector_store %arg14[%c42, %c0_43], %118 {strides = array<i32>} : memref<90x32xf32, #tpu.memory_space<vmem>>, vector<6x32xf32>,
    %120 = vector.extract_strided_slice %115 {offsets = [0, 64], sizes = [6, 32], strides = [1, 1]} : vector<6x96xf32> to vector<6x32xf32>
    %c48 = arith.constant 48 : index
    %c0_44 = arith.constant 0 : index
    %121 = vector.load %arg14[%c48, %c0_44] : memref<90x32xf32, #tpu.memory_space<vmem>>, vector<6x32xf32>
    tpu.vector_store %arg14[%c48, %c0_44], %120 {strides = array<i32>} : memref<90x32xf32, #tpu.memory_space<vmem>>, vector<6x32xf32>,
    %122 = vector.extract_strided_slice %3 {offsets = [18, 0], sizes = [6, 384], strides = [1, 1]} : vector<30x384xf32> to vector<6x384xf32>
    %c0_45 = arith.constant 0 : index
    %c0_46 = arith.constant 0 : index
    %123 = vector.load %arg8[%c0_45, %c0_46] : memref<96x384xf32, #tpu.memory_space<vmem>>, vector<96x384xf32>
    %cst_47 = arith.constant dense<0.000000e+00> : vector<6x384xf32>
    %124 = tpu.matmul %115, %123, %cst_47 {dimension_numbers = #tpu.dot_dimension_numbers<[1], [0], [0], [1], [0, 0, 1, 1], [], []>} : vector<6x96xf32>, vector<96x384xf32>, vector<6x384xf32> -> vector<6x384xf32>
    %125 = arith.addf %122, %124 : vector<6x384xf32>
    %c0_48 = arith.constant 0 : index
    %c0_49 = arith.constant 0 : index
    %126 = vector.load %arg9[%c0_48, %c0_49] : memref<1x384xf32, #tpu.memory_space<vmem>>, vector<1x384xf32>
    %127 = vector.broadcast %126 : vector<1x384xf32> to vector<6x384xf32>
    %128 = arith.addf %125, %127 : vector<6x384xf32>
    %129 = vector.extract_strided_slice %128 {offsets = [0, 0], sizes = [6, 96], strides = [1, 1]} : vector<6x384xf32> to vector<6x96xf32>
    %130 = arith.negf %129 : vector<6x96xf32>
    %131 = math.exp %130 : vector<6x96xf32>
    %cst_50 = arith.constant 1.000000e+00 : f32
    %132 = vector.broadcast %cst_50 : f32 to vector<6x96xf32>
    %133 = arith.addf %132, %131 : vector<6x96xf32>
    %134 = arith.divf %132, %133 : vector<6x96xf32>
    %135 = vector.extract_strided_slice %128 {offsets = [0, 96], sizes = [6, 96], strides = [1, 1]} : vector<6x384xf32> to vector<6x96xf32>
    %136 = arith.negf %135 : vector<6x96xf32>
    %137 = math.exp %136 : vector<6x96xf32>
    %cst_51 = arith.constant 1.000000e+00 : f32
    %138 = vector.broadcast %cst_51 : f32 to vector<6x96xf32>
    %139 = arith.addf %138, %137 : vector<6x96xf32>
    %140 = arith.divf %138, %139 : vector<6x96xf32>
    %141 = vector.extract_strided_slice %128 {offsets = [0, 192], sizes = [6, 96], strides = [1, 1]} : vector<6x384xf32> to vector<6x96xf32>
    %142 = math.tanh %141 : vector<6x96xf32>
    %143 = vector.extract_strided_slice %128 {offsets = [0, 288], sizes = [6, 96], strides = [1, 1]} : vector<6x384xf32> to vector<6x96xf32>
    %144 = arith.negf %143 : vector<6x96xf32>
    %145 = math.exp %144 : vector<6x96xf32>
    %cst_52 = arith.constant 1.000000e+00 : f32
    %146 = vector.broadcast %cst_52 : f32 to vector<6x96xf32>
    %147 = arith.addf %146, %145 : vector<6x96xf32>
    %148 = arith.divf %146, %147 : vector<6x96xf32>
    %149 = arith.mulf %140, %113 : vector<6x96xf32>
    %150 = arith.mulf %134, %142 : vector<6x96xf32>
    %151 = arith.addf %149, %150 : vector<6x96xf32>
    %152 = math.tanh %151 : vector<6x96xf32>
    %153 = arith.mulf %148, %152 : vector<6x96xf32>
    %154 = vector.extract_strided_slice %153 {offsets = [0, 0], sizes = [6, 32], strides = [1, 1]} : vector<6x96xf32> to vector<6x32xf32>
    %c54 = arith.constant 54 : index
    %c0_53 = arith.constant 0 : index
    %155 = vector.load %arg14[%c54, %c0_53] : memref<90x32xf32, #tpu.memory_space<vmem>>, vector<6x32xf32>
    tpu.vector_store %arg14[%c54, %c0_53], %154 {strides = array<i32>} : memref<90x32xf32, #tpu.memory_space<vmem>>, vector<6x32xf32>,
    %156 = vector.extract_strided_slice %153 {offsets = [0, 32], sizes = [6, 32], strides = [1, 1]} : vector<6x96xf32> to vector<6x32xf32>
    %c60 = arith.constant 60 : index
    %c0_54 = arith.constant 0 : index
    %157 = vector.load %arg14[%c60, %c0_54] : memref<90x32xf32, #tpu.memory_space<vmem>>, vector<6x32xf32>
    tpu.vector_store %arg14[%c60, %c0_54], %156 {strides = array<i32>} : memref<90x32xf32, #tpu.memory_space<vmem>>, vector<6x32xf32>,
    %158 = vector.extract_strided_slice %153 {offsets = [0, 64], sizes = [6, 32], strides = [1, 1]} : vector<6x96xf32> to vector<6x32xf32>
    %c66 = arith.constant 66 : index
    %c0_55 = arith.constant 0 : index
    %159 = vector.load %arg14[%c66, %c0_55] : memref<90x32xf32, #tpu.memory_space<vmem>>, vector<6x32xf32>
    tpu.vector_store %arg14[%c66, %c0_55], %158 {strides = array<i32>} : memref<90x32xf32, #tpu.memory_space<vmem>>, vector<6x32xf32>,
    %160 = vector.extract_strided_slice %3 {offsets = [24, 0], sizes = [6, 384], strides = [1, 1]} : vector<30x384xf32> to vector<6x384xf32>
    %c0_56 = arith.constant 0 : index
    %c0_57 = arith.constant 0 : index
    %161 = vector.load %arg8[%c0_56, %c0_57] : memref<96x384xf32, #tpu.memory_space<vmem>>, vector<96x384xf32>
    %cst_58 = arith.constant dense<0.000000e+00> : vector<6x384xf32>
    %162 = tpu.matmul %153, %161, %cst_58 {dimension_numbers = #tpu.dot_dimension_numbers<[1], [0], [0], [1], [0, 0, 1, 1], [], []>} : vector<6x96xf32>, vector<96x384xf32>, vector<6x384xf32> -> vector<6x384xf32>
    %163 = arith.addf %160, %162 : vector<6x384xf32>
    %c0_59 = arith.constant 0 : index
    %c0_60 = arith.constant 0 : index
    %164 = vector.load %arg9[%c0_59, %c0_60] : memref<1x384xf32, #tpu.memory_space<vmem>>, vector<1x384xf32>
    %165 = vector.broadcast %164 : vector<1x384xf32> to vector<6x384xf32>
    %166 = arith.addf %163, %165 : vector<6x384xf32>
    %167 = vector.extract_strided_slice %166 {offsets = [0, 0], sizes = [6, 96], strides = [1, 1]} : vector<6x384xf32> to vector<6x96xf32>
    %168 = arith.negf %167 : vector<6x96xf32>
    %169 = math.exp %168 : vector<6x96xf32>
    %cst_61 = arith.constant 1.000000e+00 : f32
    %170 = vector.broadcast %cst_61 : f32 to vector<6x96xf32>
    %171 = arith.addf %170, %169 : vector<6x96xf32>
    %172 = arith.divf %170, %171 : vector<6x96xf32>
    %173 = vector.extract_strided_slice %166 {offsets = [0, 96], sizes = [6, 96], strides = [1, 1]} : vector<6x384xf32> to vector<6x96xf32>
    %174 = arith.negf %173 : vector<6x96xf32>
    %175 = math.exp %174 : vector<6x96xf32>
    %cst_62 = arith.constant 1.000000e+00 : f32
    %176 = vector.broadcast %cst_62 : f32 to vector<6x96xf32>
    %177 = arith.addf %176, %175 : vector<6x96xf32>
    %178 = arith.divf %176, %177 : vector<6x96xf32>
    %179 = vector.extract_strided_slice %166 {offsets = [0, 192], sizes = [6, 96], strides = [1, 1]} : vector<6x384xf32> to vector<6x96xf32>
    %180 = math.tanh %179 : vector<6x96xf32>
    %181 = vector.extract_strided_slice %166 {offsets = [0, 288], sizes = [6, 96], strides = [1, 1]} : vector<6x384xf32> to vector<6x96xf32>
    %182 = arith.negf %181 : vector<6x96xf32>
    %183 = math.exp %182 : vector<6x96xf32>
    %cst_63 = arith.constant 1.000000e+00 : f32
    %184 = vector.broadcast %cst_63 : f32 to vector<6x96xf32>
    %185 = arith.addf %184, %183 : vector<6x96xf32>
    %186 = arith.divf %184, %185 : vector<6x96xf32>
    %187 = arith.mulf %178, %151 : vector<6x96xf32>
    %188 = arith.mulf %172, %180 : vector<6x96xf32>
    %189 = arith.addf %187, %188 : vector<6x96xf32>
    %190 = math.tanh %189 : vector<6x96xf32>
    %191 = arith.mulf %186, %190 : vector<6x96xf32>
    %192 = vector.extract_strided_slice %191 {offsets = [0, 0], sizes = [6, 32], strides = [1, 1]} : vector<6x96xf32> to vector<6x32xf32>
    %c72 = arith.constant 72 : index
    %c0_64 = arith.constant 0 : index
    %193 = vector.load %arg14[%c72, %c0_64] : memref<90x32xf32, #tpu.memory_space<vmem>>, vector<6x32xf32>
    tpu.vector_store %arg14[%c72, %c0_64], %192 {strides = array<i32>} : memref<90x32xf32, #tpu.memory_space<vmem>>, vector<6x32xf32>,
    %194 = vector.extract_strided_slice %191 {offsets = [0, 32], sizes = [6, 32], strides = [1, 1]} : vector<6x96xf32> to vector<6x32xf32>
    %c78 = arith.constant 78 : index
    %c0_65 = arith.constant 0 : index
    %195 = vector.load %arg14[%c78, %c0_65] : memref<90x32xf32, #tpu.memory_space<vmem>>, vector<6x32xf32>
    tpu.vector_store %arg14[%c78, %c0_65], %194 {strides = array<i32>} : memref<90x32xf32, #tpu.memory_space<vmem>>, vector<6x32xf32>,
    %196 = vector.extract_strided_slice %191 {offsets = [0, 64], sizes = [6, 32], strides = [1, 1]} : vector<6x96xf32> to vector<6x32xf32>
    %c84 = arith.constant 84 : index
    %c0_66 = arith.constant 0 : index
    %197 = vector.load %arg14[%c84, %c0_66] : memref<90x32xf32, #tpu.memory_space<vmem>>, vector<6x32xf32>
    tpu.vector_store %arg14[%c84, %c0_66], %196 {strides = array<i32>} : memref<90x32xf32, #tpu.memory_space<vmem>>, vector<6x32xf32>,
    %c0_67 = arith.constant 0 : index
    %c0_68 = arith.constant 0 : index
    %198 = vector.load %arg14[%c0_67, %c0_68] : memref<90x32xf32, #tpu.memory_space<vmem>>, vector<90x32xf32>
    %c0_69 = arith.constant 0 : index
    %c0_70 = arith.constant 0 : index
    %c0_71 = arith.constant 0 : index
    %199 = vector.load %arg10[%c0_69, %c0_70, %c0_71] : memref<6x90x32xf32, #tpu.memory_space<vmem>>, vector<1x90x32xf32>
    %200 = vector.shape_cast %199 : vector<1x90x32xf32> to vector<90x32xf32>
    %201 = arith.mulf %198, %200 : vector<90x32xf32>
    %c1_72 = arith.constant 1 : index
    %c0_73 = arith.constant 0 : index
    %c0_74 = arith.constant 0 : index
    %202 = vector.load %arg10[%c1_72, %c0_73, %c0_74] : memref<6x90x32xf32, #tpu.memory_space<vmem>>, vector<1x90x32xf32>
    %203 = vector.shape_cast %202 : vector<1x90x32xf32> to vector<90x32xf32>
    %204 = arith.addf %201, %203 : vector<90x32xf32>
    %205 = math.tanh %204 : vector<90x32xf32>
    %c0_75 = arith.constant 0 : index
    %c0_76 = arith.constant 0 : index
    %c0_77 = arith.constant 0 : index
    %206 = vector.load %arg4[%c0_75, %c0_76, %c0_77] : memref<1x32x5xf32, #tpu.memory_space<vmem>>, vector<1x32x5xf32>
    %207 = vector.shape_cast %206 : vector<1x32x5xf32> to vector<32x5xf32>
    %cst_78 = arith.constant dense<0.000000e+00> : vector<90x5xf32>
    %208 = tpu.matmul %205, %207, %cst_78 {dimension_numbers = #tpu.dot_dimension_numbers<[1], [0], [0], [1], [0, 0, 1, 1], [], []>} : vector<90x32xf32>, vector<32x5xf32>, vector<90x5xf32> -> vector<90x5xf32>
    %c0_79 = arith.constant 0 : index
    %c0_80 = arith.constant 0 : index
    %c0_81 = arith.constant 0 : index
    %209 = vector.load %arg5[%c0_79, %c0_80, %c0_81] : memref<1x1x5xf32, #tpu.memory_space<vmem>>, vector<1x1x5xf32>
    %210 = vector.shape_cast %209 : vector<1x1x5xf32> to vector<1x5xf32>
    %211 = vector.broadcast %210 : vector<1x5xf32> to vector<90x5xf32>
    %212 = arith.addf %208, %211 : vector<90x5xf32>
    %cst_82 = arith.constant dense<0xFF800000> : vector<90xf32>
    %213 = vector.multi_reduction <maximumf>, %212, %cst_82 [1] : vector<90x5xf32> to vector<90xf32>
    %214 = vector.shape_cast %213 : vector<90xf32> to vector<90x1xf32>
    %215 = vector.broadcast %214 : vector<90x1xf32> to vector<90x5xf32>
    %216 = arith.subf %212, %215 : vector<90x5xf32>
    %217 = math.exp %216 : vector<90x5xf32>
    %cst_83 = arith.constant dense<0.000000e+00> : vector<90xf32>
    %218 = vector.multi_reduction <add>, %217, %cst_83 [1] : vector<90x5xf32> to vector<90xf32>
    %219 = vector.shape_cast %218 : vector<90xf32> to vector<90x1xf32>
    %220 = tpu.reciprocal %219 {approx = true} : vector<90x1xf32> -> vector<90x1xf32>
    %221 = vector.broadcast %220 : vector<90x1xf32> to vector<90x5xf32>
    %222 = arith.mulf %217, %221 : vector<90x5xf32>
    %c0_84 = arith.constant 0 : index
    %c0_85 = arith.constant 0 : index
    %c0_86 = arith.constant 0 : index
    %223 = vector.load %arg3[%c0_84, %c0_85, %c0_86] : memref<1x5x32xf32, #tpu.memory_space<vmem>>, vector<1x5x32xf32>
    %224 = vector.shape_cast %223 : vector<1x5x32xf32> to vector<5x32xf32>
    %cst_87 = arith.constant dense<0.000000e+00> : vector<90x32xf32>
    %225 = tpu.matmul %222, %224, %cst_87 {dimension_numbers = #tpu.dot_dimension_numbers<[1], [0], [0], [1], [0, 0, 1, 1], [], []>} : vector<90x5xf32>, vector<5x32xf32>, vector<90x32xf32> -> vector<90x32xf32>
    %c2 = arith.constant 2 : index
    %c0_88 = arith.constant 0 : index
    %c0_89 = arith.constant 0 : index
    %226 = vector.load %arg10[%c2, %c0_88, %c0_89] : memref<6x90x32xf32, #tpu.memory_space<vmem>>, vector<1x90x32xf32>
    %227 = vector.shape_cast %226 : vector<1x90x32xf32> to vector<90x32xf32>
    %228 = arith.mulf %198, %227 : vector<90x32xf32>
    %c3 = arith.constant 3 : index
    %c0_90 = arith.constant 0 : index
    %c0_91 = arith.constant 0 : index
    %229 = vector.load %arg10[%c3, %c0_90, %c0_91] : memref<6x90x32xf32, #tpu.memory_space<vmem>>, vector<1x90x32xf32>
    %230 = vector.shape_cast %229 : vector<1x90x32xf32> to vector<90x32xf32>
    %231 = arith.addf %228, %230 : vector<90x32xf32>
    %232 = math.tanh %231 : vector<90x32xf32>
    %c0_92 = arith.constant 0 : index
    %c0_93 = arith.constant 0 : index
    %c0_94 = arith.constant 0 : index
    %233 = vector.load %arg11[%c0_92, %c0_93, %c0_94] : memref<2x32x21xf32, #tpu.memory_space<vmem>>, vector<1x32x21xf32>
    %234 = vector.shape_cast %233 : vector<1x32x21xf32> to vector<32x21xf32>
    %cst_95 = arith.constant dense<0.000000e+00> : vector<90x21xf32>
    %235 = tpu.matmul %232, %234, %cst_95 {dimension_numbers = #tpu.dot_dimension_numbers<[1], [0], [0], [1], [0, 0, 1, 1], [], []>} : vector<90x32xf32>, vector<32x21xf32>, vector<90x21xf32> -> vector<90x21xf32>
    %c4 = arith.constant 4 : index
    %c0_96 = arith.constant 0 : index
    %c0_97 = arith.constant 0 : index
    %236 = vector.load %arg10[%c4, %c0_96, %c0_97] : memref<6x90x32xf32, #tpu.memory_space<vmem>>, vector<1x90x32xf32>
    %237 = vector.shape_cast %236 : vector<1x90x32xf32> to vector<90x32xf32>
    %238 = arith.mulf %225, %237 : vector<90x32xf32>
    %c5 = arith.constant 5 : index
    %c0_98 = arith.constant 0 : index
    %c0_99 = arith.constant 0 : index
    %239 = vector.load %arg10[%c5, %c0_98, %c0_99] : memref<6x90x32xf32, #tpu.memory_space<vmem>>, vector<1x90x32xf32>
    %240 = vector.shape_cast %239 : vector<1x90x32xf32> to vector<90x32xf32>
    %241 = arith.addf %238, %240 : vector<90x32xf32>
    %242 = math.tanh %241 : vector<90x32xf32>
    %c1_100 = arith.constant 1 : index
    %c0_101 = arith.constant 0 : index
    %c0_102 = arith.constant 0 : index
    %243 = vector.load %arg11[%c1_100, %c0_101, %c0_102] : memref<2x32x21xf32, #tpu.memory_space<vmem>>, vector<1x32x21xf32>
    %244 = vector.shape_cast %243 : vector<1x32x21xf32> to vector<32x21xf32>
    %cst_103 = arith.constant dense<0.000000e+00> : vector<90x21xf32>
    %245 = tpu.matmul %242, %244, %cst_103 {dimension_numbers = #tpu.dot_dimension_numbers<[1], [0], [0], [1], [0, 0, 1, 1], [], []>} : vector<90x32xf32>, vector<32x21xf32>, vector<90x21xf32> -> vector<90x21xf32>
    %246 = arith.addf %235, %245 : vector<90x21xf32>
    %c0_104 = arith.constant 0 : index
    %c0_105 = arith.constant 0 : index
    %247 = vector.load %arg12[%c0_104, %c0_105] : memref<1x21xf32, #tpu.memory_space<vmem>>, vector<1x21xf32>
    %248 = vector.broadcast %247 : vector<1x21xf32> to vector<90x21xf32>
    %249 = arith.addf %246, %248 : vector<90x21xf32>
    %cst_106 = arith.constant dense<0xFF800000> : vector<90xf32>
    %250 = vector.multi_reduction <maximumf>, %249, %cst_106 [1] : vector<90x21xf32> to vector<90xf32>
    %251 = vector.shape_cast %250 : vector<90xf32> to vector<90x1xf32>
    %cst_107 = arith.constant dense<0xFF800000> : vector<90xf32>
    %252 = vector.multi_reduction <maximumf>, %212, %cst_107 [1] : vector<90x5xf32> to vector<90xf32>
    %253 = vector.shape_cast %252 : vector<90xf32> to vector<90x1xf32>
    %254 = arith.maximumf %251, %253 : vector<90x1xf32>
    %255 = vector.broadcast %254 : vector<90x1xf32> to vector<90x21xf32>
    %256 = arith.subf %249, %255 : vector<90x21xf32>
    %257 = math.exp %256 : vector<90x21xf32>
    %cst_108 = arith.constant dense<0.000000e+00> : vector<90xf32>
    %258 = vector.multi_reduction <add>, %257, %cst_108 [1] : vector<90x21xf32> to vector<90xf32>
    %259 = vector.shape_cast %258 : vector<90xf32> to vector<90x1xf32>
    %260 = vector.broadcast %254 : vector<90x1xf32> to vector<90x5xf32>
    %261 = arith.subf %212, %260 : vector<90x5xf32>
    %262 = math.exp %261 : vector<90x5xf32>
    %cst_109 = arith.constant dense<0.000000e+00> : vector<90xf32>
    %263 = vector.multi_reduction <add>, %262, %cst_109 [1] : vector<90x5xf32> to vector<90xf32>
    %264 = vector.shape_cast %263 : vector<90xf32> to vector<90x1xf32>
    %265 = arith.addf %259, %264 : vector<90x1xf32>
    %266 = math.log %265 : vector<90x1xf32>
    %267 = vector.broadcast %254 : vector<90x1xf32> to vector<90x21xf32>
    %268 = arith.subf %249, %267 : vector<90x21xf32>
    %269 = vector.broadcast %266 : vector<90x1xf32> to vector<90x21xf32>
    %270 = arith.subf %268, %269 : vector<90x21xf32>
    %271 = vector.broadcast %254 : vector<90x1xf32> to vector<90x5xf32>
    %272 = arith.subf %212, %271 : vector<90x5xf32>
    %273 = vector.broadcast %266 : vector<90x1xf32> to vector<90x5xf32>
    %274 = arith.subf %272, %273 : vector<90x5xf32>
    %275 = vector.extract_strided_slice %270 {offsets = [0, 0], sizes = [72, 21], strides = [1, 1]} : vector<90x21xf32> to vector<72x21xf32>
    %276 = vector.extract_strided_slice %274 {offsets = [0, 0], sizes = [72, 5], strides = [1, 1]} : vector<90x5xf32> to vector<72x5xf32>
    %c0_110 = arith.constant 0 : index
    %c0_111 = arith.constant 0 : index
    %c0_112 = arith.constant 0 : index
    %277 = vector.load %arg6[%c0_110, %c0_111, %c0_112] : memref<1x72x2xi32, #tpu.memory_space<vmem>>, vector<1x72x2xi32>
    %278 = vector.shape_cast %277 : vector<1x72x2xi32> to vector<72x2xi32>
    %279 = tpu.iota {dimensions = array<i32: 1>} : vector<72x21xi32>
    %280 = tpu.iota {dimensions = array<i32: 1>} : vector<72x5xi32>
    %c21_i32 = arith.constant 21 : i32
    %281 = vector.broadcast %c21_i32 : i32 to vector<72x5xi32>
    %282 = arith.addi %280, %281 : vector<72x5xi32>
    %283 = vector.extract_strided_slice %278 {offsets = [0, 0], sizes = [72, 1], strides = [1, 1]} : vector<72x2xi32> to vector<72x1xi32>
    %284 = vector.broadcast %283 : vector<72x1xi32> to vector<72x21xi32>
    %285 = arith.cmpi eq, %279, %284 : vector<72x21xi32>
    %cst_113 = arith.constant 0xFF800000 : f32
    %286 = vector.broadcast %cst_113 : f32 to vector<72x21xf32>
    %287 = arith.select %285, %275, %286 : vector<72x21xi1>, vector<72x21xf32>
    %cst_114 = arith.constant dense<0xFF800000> : vector<72xf32>
    %288 = vector.multi_reduction <maximumf>, %287, %cst_114 [1] : vector<72x21xf32> to vector<72xf32>
    %289 = vector.shape_cast %288 : vector<72xf32> to vector<72x1xf32>
    %290 = vector.broadcast %283 : vector<72x1xi32> to vector<72x5xi32>
    %291 = arith.cmpi eq, %282, %290 : vector<72x5xi32>
    %cst_115 = arith.constant 0xFF800000 : f32
    %292 = vector.broadcast %cst_115 : f32 to vector<72x5xf32>
    %293 = arith.select %291, %276, %292 : vector<72x5xi1>, vector<72x5xf32>
    %cst_116 = arith.constant dense<0xFF800000> : vector<72xf32>
    %294 = vector.multi_reduction <maximumf>, %293, %cst_116 [1] : vector<72x5xf32> to vector<72xf32>
    %295 = vector.shape_cast %294 : vector<72xf32> to vector<72x1xf32>
    %296 = arith.maximumf %289, %295 : vector<72x1xf32>
    %297 = vector.extract_strided_slice %278 {offsets = [0, 1], sizes = [72, 1], strides = [1, 1]} : vector<72x2xi32> to vector<72x1xi32>
    %298 = vector.broadcast %297 : vector<72x1xi32> to vector<72x21xi32>
    %299 = arith.cmpi eq, %279, %298 : vector<72x21xi32>
    %cst_117 = arith.constant 0xFF800000 : f32
    %300 = vector.broadcast %cst_117 : f32 to vector<72x21xf32>
    %301 = arith.select %299, %275, %300 : vector<72x21xi1>, vector<72x21xf32>
    %cst_118 = arith.constant dense<0xFF800000> : vector<72xf32>
    %302 = vector.multi_reduction <maximumf>, %301, %cst_118 [1] : vector<72x21xf32> to vector<72xf32>
    %303 = vector.shape_cast %302 : vector<72xf32> to vector<72x1xf32>
    %304 = vector.broadcast %297 : vector<72x1xi32> to vector<72x5xi32>
    %305 = arith.cmpi eq, %282, %304 : vector<72x5xi32>
    %cst_119 = arith.constant 0xFF800000 : f32
    %306 = vector.broadcast %cst_119 : f32 to vector<72x5xf32>
    %307 = arith.select %305, %276, %306 : vector<72x5xi1>, vector<72x5xf32>
    %cst_120 = arith.constant dense<0xFF800000> : vector<72xf32>
    %308 = vector.multi_reduction <maximumf>, %307, %cst_120 [1] : vector<72x5xf32> to vector<72xf32>
    %309 = vector.shape_cast %308 : vector<72xf32> to vector<72x1xf32>
    %310 = arith.maximumf %303, %309 : vector<72x1xf32>
    %311 = tpu.concatenate %296, %310 in 1 : vector<72x1xf32>, vector<72x1xf32> -> vector<72x2xf32>
    %cst_121 = arith.constant dense<0xFF800000> : vector<72xf32>
    %312 = vector.multi_reduction <maximumf>, %311, %cst_121 [1] : vector<72x2xf32> to vector<72xf32>
    %313 = vector.shape_cast %312 : vector<72xf32> to vector<72x1xf32>
    %cst_122 = arith.constant -1.000000e+30 : f32
    %314 = vector.broadcast %cst_122 : f32 to vector<72x1xf32>
    %315 = arith.maximumf %313, %314 : vector<72x1xf32>
    %316 = vector.broadcast %315 : vector<72x1xf32> to vector<72x2xf32>
    %317 = arith.subf %311, %316 : vector<72x2xf32>
    %318 = math.exp %317 : vector<72x2xf32>
    %cst_123 = arith.constant dense<0.000000e+00> : vector<72xf32>
    %319 = vector.multi_reduction <add>, %318, %cst_123 [1] : vector<72x2xf32> to vector<72xf32>
    %320 = vector.shape_cast %319 : vector<72xf32> to vector<72x1xf32>
    %321 = math.log %320 : vector<72x1xf32>
    %322 = arith.addf %313, %321 : vector<72x1xf32>
    %cst_124 = arith.constant 0.000000e+00 : f32
    %323 = vector.broadcast %cst_124 : f32 to vector<18x1xf32>
    %324 = vector.extract_strided_slice %322 {offsets = [0, 0], sizes = [18, 1], strides = [1, 1]} : vector<72x1xf32> to vector<18x1xf32>
    %325 = arith.addf %323, %324 : vector<18x1xf32>
    %326 = vector.extract_strided_slice %270 {offsets = [18, 20], sizes = [18, 1], strides = [1, 1]} : vector<90x21xf32> to vector<18x1xf32>
    %327 = arith.addf %325, %326 : vector<18x1xf32>
    %328 = vector.extract_strided_slice %322 {offsets = [18, 0], sizes = [18, 1], strides = [1, 1]} : vector<72x1xf32> to vector<18x1xf32>
    %329 = arith.addf %325, %328 : vector<18x1xf32>
    %330 = vector.extract_strided_slice %270 {offsets = [36, 20], sizes = [18, 1], strides = [1, 1]} : vector<90x21xf32> to vector<18x1xf32>
    %331 = arith.addf %329, %330 : vector<18x1xf32>
    %332 = vector.extract_strided_slice %322 {offsets = [36, 0], sizes = [18, 1], strides = [1, 1]} : vector<72x1xf32> to vector<18x1xf32>
    %333 = arith.addf %329, %332 : vector<18x1xf32>
    %334 = vector.extract_strided_slice %270 {offsets = [54, 20], sizes = [18, 1], strides = [1, 1]} : vector<90x21xf32> to vector<18x1xf32>
    %335 = arith.addf %333, %334 : vector<18x1xf32>
    %336 = vector.extract_strided_slice %322 {offsets = [54, 0], sizes = [18, 1], strides = [1, 1]} : vector<72x1xf32> to vector<18x1xf32>
    %337 = arith.addf %333, %336 : vector<18x1xf32>
    %338 = vector.extract_strided_slice %270 {offsets = [72, 20], sizes = [18, 1], strides = [1, 1]} : vector<90x21xf32> to vector<18x1xf32>
    %339 = arith.addf %337, %338 : vector<18x1xf32>
    %340 = tpu.concatenate %327, %331, %335, %339 in 1 : vector<18x1xf32>, vector<18x1xf32>, vector<18x1xf32>, vector<18x1xf32> -> vector<18x4xf32>
    %c0_125 = arith.constant 0 : index
    %c0_126 = arith.constant 0 : index
    %c0_127 = arith.constant 0 : index
    %341 = vector.load %arg13[%c0_125, %c0_126, %c0_127] : memref<1x18x4xf32, #tpu.memory_space<vmem>>, vector<1x18x4xf32>
    %342 = vector.shape_cast %341 : vector<1x18x4xf32> to vector<18x4xf32>
    %343 = vector.shape_cast %340 : vector<18x4xf32> to vector<1x18x4xf32>
    tpu.vector_store %arg13[%c0_125, %c0_126, %c0_127], %343 {strides = array<i32>} : memref<1x18x4xf32, #tpu.memory_space<vmem>>, vector<1x18x4xf32>,
    return
  }
  func.func @transform_0(%arg0: i32) -> (i32, i32, i32) {
    %c0_i32 = arith.constant 0 : i32
    %c0_i32_0 = arith.constant 0 : i32
    %c0_i32_1 = arith.constant 0 : i32
    return %arg0, %c0_i32, %c0_i32_0 : i32, i32, i32
  }
  func.func @transform_1(%arg0: i32) -> (i32, i32, i32, i32) {
    %c0_i32 = arith.constant 0 : i32
    %c0_i32_0 = arith.constant 0 : i32
    %c0_i32_1 = arith.constant 0 : i32
    %c0_i32_2 = arith.constant 0 : i32
    return %arg0, %c0_i32, %c0_i32_0, %c0_i32_1 : i32, i32, i32, i32
  }
  func.func @transform_2(%arg0: i32) -> (i32, i32, i32) {
    %c0_i32 = arith.constant 0 : i32
    %c0_i32_0 = arith.constant 0 : i32
    %c0_i32_1 = arith.constant 0 : i32
    return %arg0, %c0_i32, %c0_i32_0 : i32, i32, i32
  }
  func.func @transform_3(%arg0: i32) -> (i32, i32, i32) {
    %c0_i32 = arith.constant 0 : i32
    %c0_i32_0 = arith.constant 0 : i32
    %c0_i32_1 = arith.constant 0 : i32
    return %arg0, %c0_i32, %c0_i32_0 : i32, i32, i32
  }
  func.func @transform_4(%arg0: i32) -> (i32, i32, i32) {
    %c0_i32 = arith.constant 0 : i32
    %c0_i32_0 = arith.constant 0 : i32
    %c0_i32_1 = arith.constant 0 : i32
    return %arg0, %c0_i32, %c0_i32_0 : i32, i32, i32
  }
  func.func @transform_5(%arg0: i32) -> (i32, i32, i32) {
    %c0_i32 = arith.constant 0 : i32
    %c0_i32_0 = arith.constant 0 : i32
    %c0_i32_1 = arith.constant 0 : i32
    return %arg0, %c0_i32, %c0_i32_0 : i32, i32, i32
  }
  func.func @transform_6(%arg0: i32) -> (i32, i32) {
    %c0_i32 = arith.constant 0 : i32
    %c0_i32_0 = arith.constant 0 : i32
    %c0_i32_1 = arith.constant 0 : i32
    return %c0_i32, %c0_i32_0 : i32, i32
  }
  func.func @transform_7(%arg0: i32) -> (i32, i32) {
    %c0_i32 = arith.constant 0 : i32
    %c0_i32_0 = arith.constant 0 : i32
    %c0_i32_1 = arith.constant 0 : i32
    return %c0_i32, %c0_i32_0 : i32, i32
  }
  func.func @transform_8(%arg0: i32) -> (i32, i32) {
    %c0_i32 = arith.constant 0 : i32
    %c0_i32_0 = arith.constant 0 : i32
    %c0_i32_1 = arith.constant 0 : i32
    return %c0_i32, %c0_i32_0 : i32, i32
  }
  func.func @transform_9(%arg0: i32) -> (i32, i32, i32) {
    %c0_i32 = arith.constant 0 : i32
    %c0_i32_0 = arith.constant 0 : i32
    %c0_i32_1 = arith.constant 0 : i32
    %c0_i32_2 = arith.constant 0 : i32
    return %c0_i32, %c0_i32_0, %c0_i32_1 : i32, i32, i32
  }
  func.func @transform_10(%arg0: i32) -> (i32, i32, i32) {
    %c0_i32 = arith.constant 0 : i32
    %c0_i32_0 = arith.constant 0 : i32
    %c0_i32_1 = arith.constant 0 : i32
    %c0_i32_2 = arith.constant 0 : i32
    return %c0_i32, %c0_i32_0, %c0_i32_1 : i32, i32, i32
  }
  func.func @transform_11(%arg0: i32) -> (i32, i32) {
    %c0_i32 = arith.constant 0 : i32
    %c0_i32_0 = arith.constant 0 : i32
    %c0_i32_1 = arith.constant 0 : i32
    return %c0_i32, %c0_i32_0 : i32, i32
  }
  func.func @transform_12(%arg0: i32) -> (i32, i32, i32) {
    %c0_i32 = arith.constant 0 : i32
    %c0_i32_0 = arith.constant 0 : i32
    %c0_i32_1 = arith.constant 0 : i32
    return %arg0, %c0_i32, %c0_i32_0 : i32, i32, i32
  }
}

</mosaic_0001>

<llo_original>
// kernel: hsmm_forward.1
$region0: #{hsmm_forward.1}
  #allocation0 [shape = 'u32[]', space=smem, size = 0x4, offset = 0x4, fixed_abs, tag = 'smem constant byte address 0x4 - core index']
  #allocation1 [shape = 'u32[144,128]{1,0:T(1,128)}', space=vmem, size = 0x12000, scoped, tag = 'internal scratch']
  #allocation2 [shape = 'f32[90,32]{1,0:T(8,128)}', space=vmem, size = 0xc000, scoped, tag = 'scratch operand']
  %s0 = inlined_call_operand.vmem [shape: f32[2,30,64], index: 0, kind: input, shape index: {}]
  %s1 = inlined_call_operand.vmem [shape: f32[2,2,6,96], index: 1, kind: input, shape index: {}]
  %s2 = inlined_call_operand.vmem [shape: f32[2,5,32], index: 2, kind: input, shape index: {}]
  %s3 = inlined_call_operand.vmem [shape: f32[2,32,5], index: 3, kind: input, shape index: {}]
  %s4 = inlined_call_operand.vmem [shape: f32[2,1,5], index: 4, kind: input, shape index: {}]
  %s5 = inlined_call_operand.vmem [shape: s32[2,72,2], index: 5, kind: input, shape index: {}]
  %s6 = inlined_call_operand.vmem [shape: f32[64,384], index: 6, kind: input, shape index: {}]
  %s7 = inlined_call_operand.vmem [shape: f32[96,384], index: 7, kind: input, shape index: {}]
  %s8 = inlined_call_operand.vmem [shape: f32[1,384], index: 8, kind: input, shape index: {}]
  %s9 = inlined_call_operand.vmem [shape: f32[6,90,32], index: 9, kind: input, shape index: {}]
  %s10 = inlined_call_operand.vmem [shape: f32[2,32,21], index: 10, kind: input, shape index: {}]
  %s11 = inlined_call_operand.vmem [shape: f32[1,21], index: 11, kind: input, shape index: {}]
  %s12 = inlined_call_operand.vmem [shape: f32[2,18,4], index: 12, kind: output, shape index: {}]
  %s13 = sld [smem:[#allocation0]]
  $region81: #{hsmm_forward.1} parent=0
    _
  %s15 = ssub.s32 1, %s13
  %s16 = scalar_select 0, %s15, %s13
  loop: start=0, step=1, limit=4
  $region2: #{hsmm_forward.1} parent=0 // loop_pre_header
    _
  $region3: #{hsmm_forward.1} parent=0 // loop_header
    %s18 = sphi 0, %s22
    %p19 = scmp.ge.s32.totalorder %s18, 4
    %s28 = sphi 0, %s30
    %s31 = sphi 0, %s28
    %s32 = sphi 0, %s31
    %s48 = sphi 0, %s32
    %s54 = sphi 0, %s56
    %s57 = sphi 0, %s54
    %s58 = sphi 0, %s57
    %s74 = sphi 0, %s58
    %s80 = sphi 0, %s82
    %s83 = sphi 0, %s80
    %s84 = sphi 0, %s83
    %s100 = sphi 0, %s84
    %s106 = sphi 0, %s108
    %s109 = sphi 0, %s106
    %s110 = sphi 0, %s109
    %s126 = sphi 0, %s110
    %s132 = sphi 0, %s134
    %s135 = sphi 0, %s132
    %s136 = sphi 0, %s135
    %s152 = sphi 0, %s136
    %s158 = sphi 0, %s160
    %s161 = sphi 0, %s158
    %s162 = sphi 0, %s161
    %s178 = sphi 0, %s162
    %s182 = sphi 0, %s182
    %s184 = sphi 0, %s182
    %s185 = sphi 0, %s184
    %s199 = sphi 0, %s185
    %s203 = sphi 0, %s203
    %s205 = sphi 0, %s203
    %s206 = sphi 0, %s205
    %s220 = sphi 0, %s206
    %s224 = sphi 0, %s224
    %s226 = sphi 0, %s224
    %s227 = sphi 0, %s226
    %s241 = sphi 0, %s227
    %s245 = sphi 0, %s245
    %s247 = sphi 0, %s245
    %s248 = sphi 0, %s247
    %s262 = sphi 0, %s248
    %s266 = sphi 0, %s266
    %s268 = sphi 0, %s266
    %s269 = sphi 0, %s268
    %s283 = sphi 0, %s269
    %s287 = sphi 0, %s287
    %s289 = sphi 0, %s287
    %s290 = sphi 0, %s289
    %s304 = sphi 0, %s290
    %s310 = sphi 0, %s312
    %s313 = sphi 0, %s310
    %s314 = sphi 0, %s313
    %s330 = sphi 0, %s314
  $region4: #{hsmm_forward.1} parent=0 // loop_header_branch
    %21 = sbr.rel (%p19) target = $region8
  $region5: #{hsmm_forward.1} parent=0 // loop_body
    %s23 = ssub.s32 %s18, 1
    %s24 = ssub.s32 %s18, 2
    %s25 = sadd.s32 %s18, 1
    %s26 = ssub.s32 %s18, %s25
    %p27 = scmp.eq.s32.totalorder %s26, 0
    %s29 = sadd.s32 %s28, 1
    %s30 = scalar_select %p27, %s28, %s29
    %p33 = pneg %p27
    %p34 = scmp.eq.s32.totalorder %s18, 1
    %p35 = por %p33, %p34
    %p36 = scmp.ne.s32.totalorder %s28, %s31
    %p37 = scmp.eq.s32.totalorder %s18, 0
    %p38 = por %p36, %p37
    %p39 = scmp.ne.s32.totalorder %s28, %s31
    %p40 = scmp.eq.s32.totalorder %s23, 1
    %p41 = por %p39, %p40
    %p42 = scmp.ne.s32.totalorder %s31, %s32
    %p43 = scmp.eq.s32.totalorder %s23, 0
    %p44 = por %p42, %p43
    %p45 = scmp.ne.s32.totalorder %s31, %s32
    %p46 = scmp.eq.s32.totalorder %s24, 1
    %p47 = por %p45, %p46
    %p49 = scmp.ne.s32.totalorder %s32, %s48
    %p50 = scmp.eq.s32.totalorder %s24, 0
    %p51 = por %p49, %p50
    %s52 = ssub.s32 %s18, %s25
    %p53 = scmp.eq.s32.totalorder %s52, 0
    %s55 = sadd.s32 %s54, 1
    %s56 = scalar_select %p53, %s54, %s55
    %p59 = pneg %p53
    %p60 = scmp.eq.s32.totalorder %s18, 1
    %p61 = por %p59, %p60
    %p62 = scmp.ne.s32.totalorder %s54, %s57
    %p63 = scmp.eq.s32.totalorder %s18, 0
    %p64 = por %p62, %p63
    %p65 = scmp.ne.s32.totalorder %s54, %s57
    %p66 = scmp.eq.s32.totalorder %s23, 1
    %p67 = por %p65, %p66
    %p68 = scmp.ne.s32.totalorder %s57, %s58
    %p69 = scmp.eq.s32.totalorder %s23, 0
    %p70 = por %p68, %p69
    %p71 = scmp.ne.s32.totalorder %s57, %s58
    %p72 = scmp.eq.s32.totalorder %s24, 1
    %p73 = por %p71, %p72
    %p75 = scmp.ne.s32.totalorder %s58, %s74
    %p76 = scmp.eq.s32.totalorder %s24, 0
    %p77 = por %p75, %p76
    %s78 = ssub.s32 %s18, %s25
    %p79 = scmp.eq.s32.totalorder %s78, 0
    %s81 = sadd.s32 %s80, 1
    %s82 = scalar_select %p79, %s80, %s81
    %p85 = pneg %p79
    %p86 = scmp.eq.s32.totalorder %s18, 1
    %p87 = por %p85, %p86
    %p88 = scmp.ne.s32.totalorder %s80, %s83
    %p89 = scmp.eq.s32.totalorder %s18, 0
    %p90 = por %p88, %p89
    %p91 = scmp.ne.s32.totalorder %s80, %s83
    %p92 = scmp.eq.s32.totalorder %s23, 1
    %p93 = por %p91, %p92
    %p94 = scmp.ne.s32.totalorder %s83, %s84
    %p95 = scmp.eq.s32.totalorder %s23, 0
    %p96 = por %p94, %p95
    %p97 = scmp.ne.s32.totalorder %s83, %s84
    %p98 = scmp.eq.s32.totalorder %s24, 1
    %p99 = por %p97, %p98
    %p101 = scmp.ne.s32.totalorder %s84, %s100
    %p102 = scmp.eq.s32.totalorder %s24, 0
    %p103 = por %p101, %p102
    %s104 = ssub.s32 %s18, %s25
    %p105 = scmp.eq.s32.totalorder %s104, 0
    %s107 = sadd.s32 %s106, 1
    %s108 = scalar_select %p105, %s106, %s107
    %p111 = pneg %p105
    %p112 = scmp.eq.s32.totalorder %s18, 1
    %p113 = por %p111, %p112
    %p114 = scmp.ne.s32.totalorder %s106, %s109
    %p115 = scmp.eq.s32.totalorder %s18, 0
    %p116 = por %p114, %p115
    %p117 = scmp.ne.s32.totalorder %s106, %s109
    %p118 = scmp.eq.s32.totalorder %s23, 1
    %p119 = por %p117, %p118
    %p120 = scmp.ne.s32.totalorder %s109, %s110
    %p121 = scmp.eq.s32.totalorder %s23, 0
    %p122 = por %p120, %p121
    %p123 = scmp.ne.s32.totalorder %s109, %s110
    %p124 = scmp.eq.s32.totalorder %s24, 1
    %p125 = por %p123, %p124
    %p127 = scmp.ne.s32.totalorder %s110, %s126
    %p128 = scmp.eq.s32.totalorder %s24, 0
    %p129 = por %p127, %p128
    %s130 = ssub.s32 %s18, %s25
    %p131 = scmp.eq.s32.totalorder %s130, 0
    %s133 = sadd.s32 %s132, 1
    %s134 = scalar_select %p131, %s132, %s133
    %p137 = pneg %p131
    %p138 = scmp.eq.s32.totalorder %s18, 1
    %p139 = por %p137, %p138
    %p140 = scmp.ne.s32.totalorder %s132, %s135
    %p141 = scmp.eq.s32.totalorder %s18, 0
    %p142 = por %p140, %p141
    %p143 = scmp.ne.s32.totalorder %s132, %s135
    %p144 = scmp.eq.s32.totalorder %s23, 1
    %p145 = por %p143, %p144
    %p146 = scmp.ne.s32.totalorder %s135, %s136
    %p147 = scmp.eq.s32.totalorder %s23, 0
    %p148 = por %p146, %p147
    %p149 = scmp.ne.s32.totalorder %s135, %s136
    %p150 = scmp.eq.s32.totalorder %s24, 1
    %p151 = por %p149, %p150
    %p153 = scmp.ne.s32.totalorder %s136, %s152
    %p154 = scmp.eq.s32.totalorder %s24, 0
    %p155 = por %p153, %p154
    %s156 = ssub.s32 %s18, %s25
    %p157 = scmp.eq.s32.totalorder %s156, 0
    %s159 = sadd.s32 %s158, 1
    %s160 = scalar_select %p157, %s158, %s159
    %p163 = pneg %p157
    %p164 = scmp.eq.s32.totalorder %s18, 1
    %p165 = por %p163, %p164
    %p166 = scmp.ne.s32.totalorder %s158, %s161
    %p167 = scmp.eq.s32.totalorder %s18, 0
    %p168 = por %p166, %p167
    %p169 = scmp.ne.s32.totalorder %s158, %s161
    %p170 = scmp.eq.s32.totalorder %s23, 1
    %p171 = por %p169, %p170
    %p172 = scmp.ne.s32.totalorder %s161, %s162
    %p173 = scmp.eq.s32.totalorder %s23, 0
    %p174 = por %p172, %p173
    %p175 = scmp.ne.s32.totalorder %s161, %s162
    %p176 = scmp.eq.s32.totalorder %s24, 1
    %p177 = por %p175, %p176
    %p179 = scmp.ne.s32.totalorder %s162, %s178
    %p180 = scmp.eq.s32.totalorder %s24, 0
    %p181 = por %p179, %p180
    %s183 = sadd.s32 %s182, 1
    %p186 = scmp.eq.s32.totalorder %s18, 1
    %p187 = scmp.ne.s32.totalorder %s182, %s184
    %p188 = scmp.eq.s32.totalorder %s18, 0
    %p189 = por %p187, %p188
    %p190 = scmp.ne.s32.totalorder %s182, %s184
    %p191 = scmp.eq.s32.totalorder %s23, 1
    %p192 = por %p190, %p191
    %p193 = scmp.ne.s32.totalorder %s184, %s185
    %p194 = scmp.eq.s32.totalorder %s23, 0
    %p195 = por %p193, %p194
    %p196 = scmp.ne.s32.totalorder %s184, %s185
    %p197 = scmp.eq.s32.totalorder %s24, 1
    %p198 = por %p196, %p197
    %p200 = scmp.ne.s32.totalorder %s185, %s199
    %p201 = scmp.eq.s32.totalorder %s24, 0
    %p202 = por %p200, %p201
    %s204 = sadd.s32 %s203, 1
    %p207 = scmp.eq.s32.totalorder %s18, 1
    %p208 = scmp.ne.s32.totalorder %s203, %s205
    %p209 = scmp.eq.s32.totalorder %s18, 0
    %p210 = por %p208, %p209
    %p211 = scmp.ne.s32.totalorder %s203, %s205
    %p212 = scmp.eq.s32.totalorder %s23, 1
    %p213 = por %p211, %p212
    %p214 = scmp.ne.s32.totalorder %s205, %s206
    %p215 = scmp.eq.s32.totalorder %s23, 0
    %p216 = por %p214, %p215
    %p217 = scmp.ne.s32.totalorder %s205, %s206
    %p218 = scmp.eq.s32.totalorder %s24, 1
    %p219 = por %p217, %p218
    %p221 = scmp.ne.s32.totalorder %s206, %s220
    %p222 = scmp.eq.s32.totalorder %s24, 0
    %p223 = por %p221, %p222
    %s225 = sadd.s32 %s224, 1
    %p228 = scmp.eq.s32.totalorder %s18, 1
    %p229 = scmp.ne.s32.totalorder %s224, %s226
    %p230 = scmp.eq.s32.totalorder %s18, 0
    %p231 = por %p229, %p230
    %p232 = scmp.ne.s32.totalorder %s224, %s226
    %p233 = scmp.eq.s32.totalorder %s23, 1
    %p234 = por %p232, %p233
    %p235 = scmp.ne.s32.totalorder %s226, %s227
    %p236 = scmp.eq.s32.totalorder %s23, 0
    %p237 = por %p235, %p236
    %p238 = scmp.ne.s32.totalorder %s226, %s227
    %p239 = scmp.eq.s32.totalorder %s24, 1
    %p240 = por %p238, %p239
    %p242 = scmp.ne.s32.totalorder %s227, %s241
    %p243 = scmp.eq.s32.totalorder %s24, 0
    %p244 = por %p242, %p243
    %s246 = sadd.s32 %s245, 1
    %p249 = scmp.eq.s32.totalorder %s18, 1
    %p250 = scmp.ne.s32.totalorder %s245, %s247
    %p251 = scmp.eq.s32.totalorder %s18, 0
    %p252 = por %p250, %p251
    %p253 = scmp.ne.s32.totalorder %s245, %s247
    %p254 = scmp.eq.s32.totalorder %s23, 1
    %p255 = por %p253, %p254
    %p256 = scmp.ne.s32.totalorder %s247, %s248
    %p257 = scmp.eq.s32.totalorder %s23, 0
    %p258 = por %p256, %p257
    %p259 = scmp.ne.s32.totalorder %s247, %s248
    %p260 = scmp.eq.s32.totalorder %s24, 1
    %p261 = por %p259, %p260
    %p263 = scmp.ne.s32.totalorder %s248, %s262
    %p264 = scmp.eq.s32.totalorder %s24, 0
    %p265 = por %p263, %p264
    %s267 = sadd.s32 %s266, 1
    %p270 = scmp.eq.s32.totalorder %s18, 1
    %p271 = scmp.ne.s32.totalorder %s266, %s268
    %p272 = scmp.eq.s32.totalorder %s18, 0
    %p273 = por %p271, %p272
    %p274 = scmp.ne.s32.totalorder %s266, %s268
    %p275 = scmp.eq.s32.totalorder %s23, 1
    %p276 = por %p274, %p275
    %p277 = scmp.ne.s32.totalorder %s268, %s269
    %p278 = scmp.eq.s32.totalorder %s23, 0
    %p279 = por %p277, %p278
    %p280 = scmp.ne.s32.totalorder %s268, %s269
    %p281 = scmp.eq.s32.totalorder %s24, 1
    %p282 = por %p280, %p281
    %p284 = scmp.ne.s32.totalorder %s269, %s283
    %p285 = scmp.eq.s32.totalorder %s24, 0
    %p286 = por %p284, %p285
    %s288 = sadd.s32 %s287, 1
    %p291 = scmp.eq.s32.totalorder %s18, 1
    %p292 = scmp.ne.s32.totalorder %s287, %s289
    %p293 = scmp.eq.s32.totalorder %s18, 0
    %p294 = por %p292, %p293
    %p295 = scmp.ne.s32.totalorder %s287, %s289
    %p296 = scmp.eq.s32.totalorder %s23, 1
    %p297 = por %p295, %p296
    %p298 = scmp.ne.s32.totalorder %s289, %s290
    %p299 = scmp.eq.s32.totalorder %s23, 0
    %p300 = por %p298, %p299
    %p301 = scmp.ne.s32.totalorder %s289, %s290
    %p302 = scmp.eq.s32.totalorder %s24, 1
    %p303 = por %p301, %p302
    %p305 = scmp.ne.s32.totalorder %s290, %s304
    %p306 = scmp.eq.s32.totalorder %s24, 0
    %p307 = por %p305, %p306
    %s308 = ssub.s32 %s18, %s25
    %p309 = scmp.eq.s32.totalorder %s308, 0
    %s311 = sadd.s32 %s310, 1
    %s312 = scalar_select %p309, %s310, %s311
    %p315 = pneg %p309
    %p316 = scmp.eq.s32.totalorder %s18, 1
    %p317 = por %p315, %p316
    %p318 = scmp.ne.s32.totalorder %s310, %s313
    %p319 = scmp.eq.s32.totalorder %s18, 0
    %p320 = por %p318, %p319
    %p321 = scmp.ne.s32.totalorder %s310, %s313
    %p322 = scmp.eq.s32.totalorder %s23, 1
    %p323 = por %p321, %p322
    %p324 = scmp.ne.s32.totalorder %s313, %s314
    %p325 = scmp.eq.s32.totalorder %s23, 0
    %p326 = por %p324, %p325
    %p327 = scmp.ne.s32.totalorder %s313, %s314
    %p328 = scmp.eq.s32.totalorder %s24, 1
    %p329 = por %p327, %p328
    %p331 = scmp.ne.s32.totalorder %s314, %s330
    %p332 = scmp.eq.s32.totalorder %s24, 0
    %p333 = por %p331, %p332
    %p334 = scmp.le.s32.totalorder 1, %s18
    %p335 = scmp.lt.s32.totalorder %s18, 3
    %p336 = pnand %p334, %p335
    %p337 = pneg %p336
    // Predicated region
    $region9: #{hsmm_forward.1} parent=5 // pred_check
      _
    $region10: #{hsmm_forward.1} parent=5 // pred_check_branch
      %339 = sbr.rel (%p336) target = $region12
    $region11: #{hsmm_forward.1} parent=5 // pred_region
      %s340 = ssub.s32 %s18, 1
      // Predicated region
      $region13: #{hsmm_forward.1} parent=11 // pred_check
        %p341 = pneg %p195
      $region14: #{hsmm_forward.1} parent=11 // pred_check_branch
        %343 = sbr.rel (%p341) target = $region16
      $region15: #{hsmm_forward.1} parent=11 // pred_region
        _
      $region16: #{hsmm_forward.1} parent=11 // pred_fallthru
        _
      // Predicated region
      $region17: #{hsmm_forward.1} parent=11 // pred_check
        %p344 = pneg %p216
      $region18: #{hsmm_forward.1} parent=11 // pred_check_branch
        %346 = sbr.rel (%p344) target = $region20
      $region19: #{hsmm_forward.1} parent=11 // pred_region
        _
      $region20: #{hsmm_forward.1} parent=11 // pred_fallthru
        _
      // Predicated region
      $region21: #{hsmm_forward.1} parent=11 // pred_check
        %p347 = pneg %p237
      $region22: #{hsmm_forward.1} parent=11 // pred_check_branch
        %349 = sbr.rel (%p347) target = $region24
      $region23: #{hsmm_forward.1} parent=11 // pred_region
        _
      $region24: #{hsmm_forward.1} parent=11 // pred_fallthru
        _
      // Predicated region
      $region25: #{hsmm_forward.1} parent=11 // pred_check
        %p350 = pneg %p258
      $region26: #{hsmm_forward.1} parent=11 // pred_check_branch
        %352 = sbr.rel (%p350) target = $region28
      $region27: #{hsmm_forward.1} parent=11 // pred_region
        _
      $region28: #{hsmm_forward.1} parent=11 // pred_fallthru
        _
      // Predicated region
      $region29: #{hsmm_forward.1} parent=11 // pred_check
        %p353 = pneg %p279
      $region30: #{hsmm_forward.1} parent=11 // pred_check_branch
        %355 = sbr.rel (%p353) target = $region32
      $region31: #{hsmm_forward.1} parent=11 // pred_region
        _
      $region32: #{hsmm_forward.1} parent=11 // pred_fallthru
        _
      // Predicated region
      $region33: #{hsmm_forward.1} parent=11 // pred_check
        %p356 = pneg %p300
      $region34: #{hsmm_forward.1} parent=11 // pred_check_branch
        %358 = sbr.rel (%p356) target = $region36
      $region35: #{hsmm_forward.1} parent=11 // pred_region
        _
      $region36: #{hsmm_forward.1} parent=11 // pred_fallthru
        _
    $region12: #{hsmm_forward.1} parent=5 // pred_fallthru
      _
    %p359 = scmp.lt.s32.totalorder %s18, 2
    // Predicated region
    $region37: #{hsmm_forward.1} parent=5 // pred_check
      %p360 = pneg %p359
    $region38: #{hsmm_forward.1} parent=5 // pred_check_branch
      %362 = sbr.rel (%p360) target = $region40
    $region39: #{hsmm_forward.1} parent=5 // pred_region
      // Predicated region
      $region41: #{hsmm_forward.1} parent=39 // pred_check
        %p363 = pneg %p38
      $region42: #{hsmm_forward.1} parent=39 // pred_check_branch
        %365 = sbr.rel (%p363) target = $region44
      $region43: #{hsmm_forward.1} parent=39 // pred_region
        %p366 = scmp.lt.s32.totalorder %s18, 1
        %s367 = scalar_select %p366, %s18, 1
        %s368 = smul.addr %s367, 4
        %s369 = smul.addr %s368, 8
        %s370 = scalar_lea.vmem %s0, %s369
      $region44: #{hsmm_forward.1} parent=39 // pred_fallthru
        _
      // Predicated region
      $region45: #{hsmm_forward.1} parent=39 // pred_check
        %p371 = pneg %p64
      $region46: #{hsmm_forward.1} parent=39 // pred_check_branch
        %373 = sbr.rel (%p371) target = $region48
      $region47: #{hsmm_forward.1} parent=39 // pred_region
        %p374 = scmp.lt.s32.totalorder %s18, 1
        %s375 = scalar_select %p374, %s18, 1
        %s376 = smul.addr %s375, 2
        %s377 = smul.addr %s376, 8
        %s378 = scalar_lea.vmem %s1, %s377
      $region48: #{hsmm_forward.1} parent=39 // pred_fallthru
        _
      // Predicated region
      $region49: #{hsmm_forward.1} parent=39 // pred_check
        %p379 = pneg %p90
      $region50: #{hsmm_forward.1} parent=39 // pred_check_branch
        %381 = sbr.rel (%p379) target = $region52
      $region51: #{hsmm_forward.1} parent=39 // pred_region
        %p382 = scmp.lt.s32.totalorder %s18, 1
        %s383 = scalar_select %p382, %s18, 1
        %s384 = smul.addr %s383, 8
        %s385 = scalar_lea.vmem %s2, %s384
      $region52: #{hsmm_forward.1} parent=39 // pred_fallthru
        _
      // Predicated region
      $region53: #{hsmm_forward.1} parent=39 // pred_check
        %p386 = pneg %p116
      $region54: #{hsmm_forward.1} parent=39 // pred_check_branch
        %388 = sbr.rel (%p386) target = $region56
      $region55: #{hsmm_forward.1} parent=39 // pred_region
        %p389 = scmp.lt.s32.totalorder %s18, 1
        %s390 = scalar_select %p389, %s18, 1
        %s391 = smul.addr %s390, 4
        %s392 = smul.addr %s391, 8
        %s393 = scalar_lea.vmem %s3, %s392
      $region56: #{hsmm_forward.1} parent=39 // pred_fallthru
        _
      // Predicated region
      $region57: #{hsmm_forward.1} parent=39 // pred_check
        %p394 = pneg %p142
      $region58: #{hsmm_forward.1} parent=39 // pred_check_branch
        %396 = sbr.rel (%p394) target = $region60
      $region59: #{hsmm_forward.1} parent=39 // pred_region
        %p397 = scmp.lt.s32.totalorder %s18, 1
        %s398 = scalar_select %p397, %s18, 1
        %s399 = scalar_lea.vmem %s4, %s398
      $region60: #{hsmm_forward.1} parent=39 // pred_fallthru
        _
      // Predicated region
      $region61: #{hsmm_forward.1} parent=39 // pred_check
        %p400 = pneg %p168
      $region62: #{hsmm_forward.1} parent=39 // pred_check_branch
        %402 = sbr.rel (%p400) target = $region64
      $region63: #{hsmm_forward.1} parent=39 // pred_region
        %p403 = scmp.lt.s32.totalorder %s18, 1
        %s404 = scalar_select %p403, %s18, 1
        %s405 = smul.addr %s404, 9
        %s406 = smul.addr %s405, 8
        %s407 = scalar_lea.vmem %s5, %s406
      $region64: #{hsmm_forward.1} parent=39 // pred_fallthru
        _
    $region40: #{hsmm_forward.1} parent=5 // pred_fallthru
      _
    %p408 = scmp.le.s32.totalorder 1, %s18
    %p409 = scmp.lt.s32.totalorder %s18, 3
    %p410 = pnand %p408, %p409
    %p411 = pneg %p410
    // Predicated region
    $region65: #{hsmm_forward.1} parent=5 // pred_check
      _
    $region66: #{hsmm_forward.1} parent=5 // pred_check_branch
      %413 = sbr.rel (%p410) target = $region68
    $region67: #{hsmm_forward.1} parent=5 // pred_region
      %s414 = ssub.s32 %s18, 1
      %p415 = scmp.lt.s32.totalorder %s23, 1
      %s416 = scalar_select %p415, %s23, 1
      %s417 = smul.addr %s416, 4
      %s418 = smul.addr %s417, 8
      %s419 = scalar_lea.vmem %s0, %s418
      %p420 = pneg %p44
      %p421 = pneg %p41
      %p422 = scmp.lt.s32.totalorder %s23, 1
      %s423 = scalar_select %p422, %s23, 1
      %s424 = smul.addr %s423, 2
      %s425 = smul.addr %s424, 8
      %s426 = scalar_lea.vmem %s1, %s425
      %p427 = pneg %p70
      %p428 = pneg %p67
      %p429 = scmp.lt.s32.totalorder %s23, 1
      %s430 = scalar_select %p429, %s23, 1
      %s431 = smul.addr %s430, 8
      %s432 = scalar_lea.vmem %s2, %s431
      %p433 = pneg %p96
      %p434 = pneg %p93
      %p435 = scmp.lt.s32.totalorder %s23, 1
      %s436 = scalar_select %p435, %s23, 1
      %s437 = smul.addr %s436, 4
      %s438 = smul.addr %s437, 8
      %s439 = scalar_lea.vmem %s3, %s438
      %p440 = pneg %p122
      %p441 = pneg %p119
      %p442 = scmp.lt.s32.totalorder %s23, 1
      %s443 = scalar_select %p442, %s23, 1
      %s444 = scalar_lea.vmem %s4, %s443
      %p445 = pneg %p148
      %p446 = pneg %p145
      %p447 = scmp.lt.s32.totalorder %s23, 1
      %s448 = scalar_select %p447, %s23, 1
      %s449 = smul.addr %s448, 9
      %s450 = smul.addr %s449, 8
      %s451 = scalar_lea.vmem %s5, %s450
      %p452 = pneg %p174
      %p453 = pneg %p171
      %p454 = pneg %p195
      %p455 = pneg %p192
      %p456 = pneg %p216
      %p457 = pneg %p213
      %p458 = pneg %p237
      %p459 = pneg %p234
      %p460 = pneg %p258
      %p461 = pneg %p255
      %p462 = pneg %p279
      %p463 = pneg %p276
      %p464 = pneg %p300
      %p465 = pneg %p297
      %p466 = pneg %p326
      %p467 = pneg %p323
      %p468 = scmp.lt.s32.totalorder %s23, 1
      %s469 = scalar_select %p468, %s23, 1
      %s470 = smul.addr %s469, 3
      %s471 = smul.addr %s470, 8
      %s472 = scalar_lea.vmem %s12, %s471
      %p473 = scmp.lt.s32.totalorder %s23, 1
      %s474 = scalar_select %p473, %s23, 1
      %s475 = smul.addr %s474, 4
      %s476 = smul.addr %s475, 8
      %s477 = scalar_lea.vmem %s0, %s476
      %p478 = scmp.lt.s32.totalorder %s23, 1
      %s479 = scalar_select %p478, %s23, 1
      %s480 = smul.addr %s479, 2
      %s481 = smul.addr %s480, 8
      %s482 = scalar_lea.vmem %s1, %s481
      %p483 = scmp.lt.s32.totalorder %s23, 1
      %s484 = scalar_select %p483, %s23, 1
      %s485 = smul.addr %s484, 8
      %s486 = scalar_lea.vmem %s2, %s485
      %p487 = scmp.lt.s32.totalorder %s23, 1
      %s488 = scalar_select %p487, %s23, 1
      %s489 = smul.addr %s488, 4
      %s490 = smul.addr %s489, 8
      %s491 = scalar_lea.vmem %s3, %s490
      %p492 = scmp.lt.s32.totalorder %s23, 1
      %s493 = scalar_select %p492, %s23, 1
      %s494 = scalar_lea.vmem %s4, %s493
      %p495 = scmp.lt.s32.totalorder %s23, 1
      %s496 = scalar_select %p495, %s23, 1
      %s497 = smul.addr %s496, 9
      %s498 = smul.addr %s497, 8
      %s499 = scalar_lea.vmem %s5, %s498
      %p500 = scmp.lt.s32.totalorder %s23, 1
      %s501 = scalar_select %p500, %s23, 1
      %s502 = smul.addr %s501, 3
      %s503 = smul.addr %s502, 8
      %s504 = scalar_lea.vmem %s12, %s503
      %v505 = vld [vmem:[%s477] sm:$0xff]
      %v506 = vld [vmem:[%s477 + $0x8] sm:$0xff]
      %v507 = vld [vmem:[%s477 + $0x10] sm:$0xff]
      %v508 = vld [vmem:[%s477 + $0x18] sm:$0x3f]
      %v509 = vld [vmem:[%s6] sm:$0xff]
      %v510 = vld [vmem:[%s6 + $0x8] sm:$0xff]
      %v511 = vld [vmem:[%s6 + $0x10] sm:$0xff]
      %v512 = vld [vmem:[%s6 + $0x18] sm:$0xff]
      %v513 = vld [vmem:[%s6 + $0x20] sm:$0xff]
      %v514 = vld [vmem:[%s6 + $0x28] sm:$0xff]
      %v515 = vld [vmem:[%s6 + $0x30] sm:$0xff]
      %v516 = vld [vmem:[%s6 + $0x38] sm:$0xff]
      %v517 = vld [vmem:[%s6 + $0x40] sm:$0xff]
      %v518 = vld [vmem:[%s6 + $0x48] sm:$0xff]
      %v519 = vld [vmem:[%s6 + $0x50] sm:$0xff]
      %v520 = vld [vmem:[%s6 + $0x58] sm:$0xff]
      %v521 = vld [vmem:[%s6 + $0x60] sm:$0xff]
      %v522 = vld [vmem:[%s6 + $0x68] sm:$0xff]
      %v523 = vld [vmem:[%s6 + $0x70] sm:$0xff]
      %v524 = vld [vmem:[%s6 + $0x78] sm:$0xff]
      %v525 = vld [vmem:[%s6 + $0x80] sm:$0xff]
      %v526 = vld [vmem:[%s6 + $0x88] sm:$0xff]
      %v527 = vld [vmem:[%s6 + $0x90] sm:$0xff]
      %v528 = vld [vmem:[%s6 + $0x98] sm:$0xff]
      %v529 = vld [vmem:[%s6 + $0xa0] sm:$0xff]
      %v530 = vld [vmem:[%s6 + $0xa8] sm:$0xff]
      %v531 = vld [vmem:[%s6 + $0xb0] sm:$0xff]
      %v532 = vld [vmem:[%s6 + $0xb8] sm:$0xff]
      %vm533 = vcmask 523264
      %v535 = vsel %vm533, %v505, 0
      %v538 = vsel %vm533, %v506, 0
      %v541 = vsel %vm533, %v507, 0
      %v544 = vsel %vm533, %v508, 0
      %546 = vmatprep.subr.mxu0 %v510
      %547 = vmatpush1.msra.mxu0 %v509
      %548 = vmatprep.subr.mxu0 %v513
      %549 = vmatpush1.msra.mxu0 %v512
      %550 = vmatprep.subr.mxu0 %v516
      %551 = vmatpush1.msra.mxu0 %v515
      %552 = vmatprep.subr.mxu0 %v519
      %553 = vmatpush1.msra.mxu0 %v518
      %554 = vmatprep.subr.mxu0 %v522
      %555 = vmatpush1.msra.mxu0 %v521
      %556 = vmatprep.subr.mxu0 %v525
      %557 = vmatpush1.msra.mxu0 %v524
      %558 = vmatprep.subr.mxu0 %v528
      %559 = vmatpush1.msra.mxu0 %v527
      %560 = vmatprep.subr.mxu0 %v531
      %561 = vmatpush1.msra.mxu0 %v530
      %562 = vmatprep.subr.mxu0 0.0
      %563 = vmatpush1.msra.mxu0 0.0
      %564 = vmatprep.subr.mxu0 0.0
      %565 = vmatpush1.msra.mxu0 0.0
      %566 = vmatprep.subr.mxu0 0.0
      %567 = vmatpush1.msra.mxu0 0.0
      %568 = vmatprep.subr.mxu0 0.0
      %569 = vmatpush1.msra.mxu0 0.0
      %570 = vmatprep.subr.mxu0 0.0
      %571 = vmatpush1.msra.mxu0 0.0
      %572 = vmatprep.subr.mxu0 0.0
      %573 = vmatpush1.msra.mxu0 0.0
      %574 = vmatprep.subr.mxu0 0.0
      %575 = vmatpush1.msra.mxu0 0.0
      %576 = vmatprep.subr.mxu0 0.0
      %577 = vmatpush1.msra.mxu0 0.0
      %578 = vmatprep.subr.mxu0 0.0
      %579 = vmatpush1.msra.mxu0 0.0
      %580 = vmatprep.subr.mxu0 0.0
      %581 = vmatpush1.msra.mxu0 0.0
      %582 = vmatprep.subr.mxu0 0.0
      %583 = vmatpush1.msra.mxu0 0.0
      %584 = vmatprep.subr.mxu0 0.0
      %585 = vmatpush1.msra.mxu0 0.0
      %586 = vmatprep.subr.mxu0 0.0
      %587 = vmatpush1.msra.mxu0 0.0
      %588 = vmatprep.subr.mxu0 0.0
      %589 = vmatpush1.msra.mxu0 0.0
      %590 = vmatprep.subr.mxu0 0.0
      %591 = vmatpush1.msra.mxu0 0.0
      %592 = vmatprep.subr.mxu0 0.0
      %593 = vmatpush1.msra.mxu0 0.0
      %594 = vmatprep.subr.mxu0 0.0
      %595 = vmatpush1.msra.mxu0 0.0
      %596 = vmatprep.subr.mxu0 0.0
      %597 = vmatpush1.msra.mxu0 0.0
      %598 = vmatprep.subr.mxu0 0.0
      %599 = vmatpush1.msra.mxu0 0.0
      %600 = vmatprep.subr.mxu0 0.0
      %601 = vmatpush1.msra.mxu0 0.0
      %602 = vmatprep.subr.mxu0 0.0
      %603 = vmatpush1.msra.mxu0 0.0
      %604 = vmatprep.subr.mxu0 0.0
      %605 = vmatpush1.msra.mxu0 0.0
      %606 = vmatprep.subr.mxu0 0.0
      %607 = vmatpush1.msra.mxu0 0.0
      %608 = vmatprep.subr.mxu0 0.0
      %609 = vmatpush1.msra.mxu0 0.0
      %610 = vmatprep.mubr.f32.mxu0 0.0
      %611 = vmatmul.mubr.f32.gmra.mrb[0].mxu0 %v535
      %v612 = vpop.f32.mrb[0].mxu0
      %v613 = vadd.f32 0.0, %v612
      %v614 = vpop.f32.mrb[0].mxu0
      %v615 = vadd.f32 0.0, %v614
      %616 = vmatprep.mubr.f32.mxu0 0.0
      %617 = vmatmul.mubr.f32.gmra.mrb[0].mxu0 %v538
      %v618 = vpop.f32.mrb[0].mxu0
      %v619 = vadd.f32 0.0, %v618
      %v620 = vpop.f32.mrb[0].mxu0
      %v621 = vadd.f32 0.0, %v620
      %622 = vmatprep.mubr.f32.mxu0 0.0
      %623 = vmatmul.mubr.f32.gmra.mrb[0].mxu0 %v541
      %v624 = vpop.f32.mrb[0].mxu0
      %v625 = vadd.f32 0.0, %v624
      %v626 = vpop.f32.mrb[0].mxu0
      %v627 = vadd.f32 0.0, %v626
      %628 = vmatprep.mubr.f32.mxu0 0.0
      %629 = vmatmul.mubr.f32.gmra.mrb[0].mxu0 %v544
      %v630 = vpop.f32.mrb[0].mxu0
      %v631 = vadd.f32 0.0, %v630
      %v632 = vpop.f32.mrb[0].mxu0
      %v633 = vadd.f32 0.0, %v632
      %634 = vdwg.mxu0
      %635 = vmatprep.subr.mxu0 0.0
      %636 = vmatpush1.msra.mxu0 %v511
      %637 = vmatprep.subr.mxu0 0.0
      %638 = vmatpush1.msra.mxu0 %v514
      %639 = vmatprep.subr.mxu0 0.0
      %640 = vmatpush1.msra.mxu0 %v517
      %641 = vmatprep.subr.mxu0 0.0
      %642 = vmatpush1.msra.mxu0 %v520
      %643 = vmatprep.subr.mxu0 0.0
      %644 = vmatpush1.msra.mxu0 %v523
      %645 = vmatprep.subr.mxu0 0.0
      %646 = vmatpush1.msra.mxu0 %v526
      %647 = vmatprep.subr.mxu0 0.0
      %648 = vmatpush1.msra.mxu0 %v529
      %649 = vmatprep.subr.mxu0 0.0
      %650 = vmatpush1.msra.mxu0 %v532
      %651 = vmatprep.subr.mxu0 0.0
      %652 = vmatpush1.msra.mxu0 0.0
      %653 = vmatprep.subr.mxu0 0.0
      %654 = vmatpush1.msra.mxu0 0.0
      %655 = vmatprep.subr.mxu0 0.0
      %656 = vmatpush1.msra.mxu0 0.0
      %657 = vmatprep.subr.mxu0 0.0
      %658 = vmatpush1.msra.mxu0 0.0
      %659 = vmatprep.subr.mxu0 0.0
      %660 = vmatpush1.msra.mxu0 0.0
      %661 = vmatprep.subr.mxu0 0.0
      %662 = vmatpush1.msra.mxu0 0.0
      %663 = vmatprep.subr.mxu0 0.0
      %664 = vmatpush1.msra.mxu0 0.0
      %665 = vmatprep.subr.mxu0 0.0
      %666 = vmatpush1.msra.mxu0 0.0
      %667 = vmatprep.subr.mxu0 0.0
      %668 = vmatpush1.msra.mxu0 0.0
      %669 = vmatprep.subr.mxu0 0.0
      %670 = vmatpush1.msra.mxu0 0.0
      %671 = vmatprep.subr.mxu0 0.0
      %672 = vmatpush1.msra.mxu0 0.0
      %673 = vmatprep.subr.mxu0 0.0
      %674 = vmatpush1.msra.mxu0 0.0
      %675 = vmatprep.subr.mxu0 0.0
      %676 = vmatpush1.msra.mxu0 0.0
      %677 = vmatprep.subr.mxu0 0.0
      %678 = vmatpush1.msra.mxu0 0.0
      %679 = vmatprep.subr.mxu0 0.0
      %680 = vmatpush1.msra.mxu0 0.0
      %681 = vmatprep.subr.mxu0 0.0
      %682 = vmatpush1.msra.mxu0 0.0
      %683 = vmatprep.subr.mxu0 0.0
      %684 = vmatpush1.msra.mxu0 0.0
      %685 = vmatprep.subr.mxu0 0.0
      %686 = vmatpush1.msra.mxu0 0.0
      %687 = vmatprep.subr.mxu0 0.0
      %688 = vmatpush1.msra.mxu0 0.0
      %689 = vmatprep.subr.mxu0 0.0
      %690 = vmatpush1.msra.mxu0 0.0
      %691 = vmatprep.subr.mxu0 0.0
      %692 = vmatpush1.msra.mxu0 0.0
      %693 = vmatprep.subr.mxu0 0.0
      %694 = vmatpush1.msra.mxu0 0.0
      %695 = vmatprep.subr.mxu0 0.0
      %696 = vmatpush1.msra.mxu0 0.0
      %697 = vmatprep.subr.mxu0 0.0
      %698 = vmatpush1.msra.mxu0 0.0
      %699 = vmatprep.mubr.f32.mxu0 0.0
      %700 = vmatmul.mubr.f32.gmra.mrb[0].mxu0 %v535
      %v701 = vpop.f32.mrb[0].mxu0
      %v702 = vadd.f32 0.0, %v701
      %v703 = vpop.f32.mrb[0].mxu0
      %704 = vmatprep.mubr.f32.mxu0 0.0
      %705 = vmatmul.mubr.f32.gmra.mrb[0].mxu0 %v538
      %v706 = vpop.f32.mrb[0].mxu0
      %v707 = vadd.f32 0.0, %v706
      %v708 = vpop.f32.mrb[0].mxu0
      %709 = vmatprep.mubr.f32.mxu0 0.0
      %710 = vmatmul.mubr.f32.gmra.mrb[0].mxu0 %v541
      %v711 = vpop.f32.mrb[0].mxu0
      %v712 = vadd.f32 0.0, %v711
      %v713 = vpop.f32.mrb[0].mxu0
      %714 = vmatprep.mubr.f32.mxu0 0.0
      %715 = vmatmul.mubr.f32.gmra.mrb[0].mxu0 %v544
      %v716 = vpop.f32.mrb[0].mxu0
      %v717 = vadd.f32 0.0, %v716
      %v718 = vpop.f32.mrb[0].mxu0
      %719 = vdwg.mxu0
      %v720 = vld [vmem:[%s482] sm:$0x3f]
      %s721 = scalar_lea.vmem %s482, 8
      %v722 = vld [vmem:[%s721] sm:$0x3f]
      %v723 = vld [vmem:[%s7] sm:$0xff]
      %v724 = vld [vmem:[%s7 + $0x8] sm:$0xff]
      %v725 = vld [vmem:[%s7 + $0x10] sm:$0xff]
      %v726 = vld [vmem:[%s7 + $0x18] sm:$0xff]
      %v727 = vld [vmem:[%s7 + $0x20] sm:$0xff]
      %v728 = vld [vmem:[%s7 + $0x28] sm:$0xff]
      %v729 = vld [vmem:[%s7 + $0x30] sm:$0xff]
      %v730 = vld [vmem:[%s7 + $0x38] sm:$0xff]
      %v731 = vld [vmem:[%s7 + $0x40] sm:$0xff]
      %v732 = vld [vmem:[%s7 + $0x48] sm:$0xff]
      %v733 = vld [vmem:[%s7 + $0x50] sm:$0xff]
      %v734 = vld [vmem:[%s7 + $0x58] sm:$0xff]
      %v735 = vld [vmem:[%s7 + $0x60] sm:$0xff]
      %v736 = vld [vmem:[%s7 + $0x68] sm:$0xff]
      %v737 = vld [vmem:[%s7 + $0x70] sm:$0xff]
      %v738 = vld [vmem:[%s7 + $0x78] sm:$0xff]
      %v739 = vld [vmem:[%s7 + $0x80] sm:$0xff]
      %v740 = vld [vmem:[%s7 + $0x88] sm:$0xff]
      %v741 = vld [vmem:[%s7 + $0x90] sm:$0xff]
      %v742 = vld [vmem:[%s7 + $0x98] sm:$0xff]
      %v743 = vld [vmem:[%s7 + $0xa0] sm:$0xff]
      %v744 = vld [vmem:[%s7 + $0xa8] sm:$0xff]
      %v745 = vld [vmem:[%s7 + $0xb0] sm:$0xff]
      %v746 = vld [vmem:[%s7 + $0xb8] sm:$0xff]
      %v747 = vld [vmem:[%s7 + $0xc0] sm:$0xff]
      %v748 = vld [vmem:[%s7 + $0xc8] sm:$0xff]
      %v749 = vld [vmem:[%s7 + $0xd0] sm:$0xff]
      %v750 = vld [vmem:[%s7 + $0xd8] sm:$0xff]
      %v751 = vld [vmem:[%s7 + $0xe0] sm:$0xff]
      %v752 = vld [vmem:[%s7 + $0xe8] sm:$0xff]
      %v753 = vld [vmem:[%s7 + $0xf0] sm:$0xff]
      %v754 = vld [vmem:[%s7 + $0xf8] sm:$0xff]
      %v755 = vld [vmem:[%s7 + $0x100] sm:$0xff]
      %v756 = vld [vmem:[%s7 + $0x108] sm:$0xff]
      %v757 = vld [vmem:[%s7 + $0x110] sm:$0xff]
      %v758 = vld [vmem:[%s7 + $0x118] sm:$0xff]
      %vm759 = vcmask 785408
      %v761 = vsel %vm759, %v720, 0
      %763 = vmatprep.subr.mxu0 %v724
      %764 = vmatpush1.msra.mxu0 %v723
      %765 = vmatprep.subr.mxu0 %v727
      %766 = vmatpush1.msra.mxu0 %v726
      %767 = vmatprep.subr.mxu0 %v730
      %768 = vmatpush1.msra.mxu0 %v729
      %769 = vmatprep.subr.mxu0 %v733
      %770 = vmatpush1.msra.mxu0 %v732
      %771 = vmatprep.subr.mxu0 %v736
      %772 = vmatpush1.msra.mxu0 %v735
      %773 = vmatprep.subr.mxu0 %v739
      %774 = vmatpush1.msra.mxu0 %v738
      %775 = vmatprep.subr.mxu0 %v742
      %776 = vmatpush1.msra.mxu0 %v741
      %777 = vmatprep.subr.mxu0 %v745
      %778 = vmatpush1.msra.mxu0 %v744
      %779 = vmatprep.subr.mxu0 %v748
      %780 = vmatpush1.msra.mxu0 %v747
      %781 = vmatprep.subr.mxu0 %v751
      %782 = vmatpush1.msra.mxu0 %v750
      %783 = vmatprep.subr.mxu0 %v754
      %784 = vmatpush1.msra.mxu0 %v753
      %785 = vmatprep.subr.mxu0 %v757
      %786 = vmatpush1.msra.mxu0 %v756
      %787 = vmatprep.subr.mxu0 0.0
      %788 = vmatpush1.msra.mxu0 0.0
      %789 = vmatprep.subr.mxu0 0.0
      %790 = vmatpush1.msra.mxu0 0.0
      %791 = vmatprep.subr.mxu0 0.0
      %792 = vmatpush1.msra.mxu0 0.0
      %793 = vmatprep.subr.mxu0 0.0
      %794 = vmatpush1.msra.mxu0 0.0
      %795 = vmatprep.subr.mxu0 0.0
      %796 = vmatpush1.msra.mxu0 0.0
      %797 = vmatprep.subr.mxu0 0.0
      %798 = vmatpush1.msra.mxu0 0.0
      %799 = vmatprep.subr.mxu0 0.0
      %800 = vmatpush1.msra.mxu0 0.0
      %801 = vmatprep.subr.mxu0 0.0
      %802 = vmatpush1.msra.mxu0 0.0
      %803 = vmatprep.subr.mxu0 0.0
      %804 = vmatpush1.msra.mxu0 0.0
      %805 = vmatprep.subr.mxu0 0.0
      %806 = vmatpush1.msra.mxu0 0.0
      %807 = vmatprep.subr.mxu0 0.0
      %808 = vmatpush1.msra.mxu0 0.0
      %809 = vmatprep.subr.mxu0 0.0
      %810 = vmatpush1.msra.mxu0 0.0
      %811 = vmatprep.subr.mxu0 0.0
      %812 = vmatpush1.msra.mxu0 0.0
      %813 = vmatprep.subr.mxu0 0.0
      %814 = vmatpush1.msra.mxu0 0.0
      %815 = vmatprep.subr.mxu0 0.0
      %816 = vmatpush1.msra.mxu0 0.0
      %817 = vmatprep.subr.mxu0 0.0
      %818 = vmatpush1.msra.mxu0 0.0
      %819 = vmatprep.subr.mxu0 0.0
      %820 = vmatpush1.msra.mxu0 0.0
      %821 = vmatprep.subr.mxu0 0.0
      %822 = vmatpush1.msra.mxu0 0.0
      %823 = vmatprep.subr.mxu0 0.0
      %824 = vmatpush1.msra.mxu0 0.0
      %825 = vmatprep.subr.mxu0 0.0
      %826 = vmatpush1.msra.mxu0 0.0
      %827 = vmatprep.mubr.f32.mxu0 0.0
      %828 = vmatmul.mubr.f32.gmra.mrb[0].mxu0 %v761
      %v829 = vpop.f32.mrb[0].mxu0
      %v830 = vadd.f32 0.0, %v829
      %v831 = vpop.f32.mrb[0].mxu0
      %v832 = vadd.f32 0.0, %v831
      %833 = vdwg.mxu0
      %834 = vmatprep.subr.mxu0 0.0
      %835 = vmatpush1.msra.mxu0 %v725
      %836 = vmatprep.subr.mxu0 0.0
      %837 = vmatpush1.msra.mxu0 %v728
      %838 = vmatprep.subr.mxu0 0.0
      %839 = vmatpush1.msra.mxu0 %v731
      %840 = vmatprep.subr.mxu0 0.0
      %841 = vmatpush1.msra.mxu0 %v734
      %842 = vmatprep.subr.mxu0 0.0
      %843 = vmatpush1.msra.mxu0 %v737
      %844 = vmatprep.subr.mxu0 0.0
      %845 = vmatpush1.msra.mxu0 %v740
      %846 = vmatprep.subr.mxu0 0.0
      %847 = vmatpush1.msra.mxu0 %v743
      %848 = vmatprep.subr.mxu0 0.0
      %849 = vmatpush1.msra.mxu0 %v746
      %850 = vmatprep.subr.mxu0 0.0
      %851 = vmatpush1.msra.mxu0 %v749
      %852 = vmatprep.subr.mxu0 0.0
      %853 = vmatpush1.msra.mxu0 %v752
      %854 = vmatprep.subr.mxu0 0.0
      %855 = vmatpush1.msra.mxu0 %v755
      %856 = vmatprep.subr.mxu0 0.0
      %857 = vmatpush1.msra.mxu0 %v758
      %858 = vmatprep.subr.mxu0 0.0
      %859 = vmatpush1.msra.mxu0 0.0
      %860 = vmatprep.subr.mxu0 0.0
      %861 = vmatpush1.msra.mxu0 0.0
      %862 = vmatprep.subr.mxu0 0.0
      %863 = vmatpush1.msra.mxu0 0.0
      %864 = vmatprep.subr.mxu0 0.0
      %865 = vmatpush1.msra.mxu0 0.0
      %866 = vmatprep.subr.mxu0 0.0
      %867 = vmatpush1.msra.mxu0 0.0
      %868 = vmatprep.subr.mxu0 0.0
      %869 = vmatpush1.msra.mxu0 0.0
      %870 = vmatprep.subr.mxu0 0.0
      %871 = vmatpush1.msra.mxu0 0.0
      %872 = vmatprep.subr.mxu0 0.0
      %873 = vmatpush1.msra.mxu0 0.0
      %874 = vmatprep.subr.mxu0 0.0
      %875 = vmatpush1.msra.mxu0 0.0
      %876 = vmatprep.subr.mxu0 0.0
      %877 = vmatpush1.msra.mxu0 0.0
      %878 = vmatprep.subr.mxu0 0.0
      %879 = vmatpush1.msra.mxu0 0.0
      %880 = vmatprep.subr.mxu0 0.0
      %881 = vmatpush1.msra.mxu0 0.0
      %882 = vmatprep.subr.mxu0 0.0
      %883 = vmatpush1.msra.mxu0 0.0
      %884 = vmatprep.subr.mxu0 0.0
      %885 = vmatpush1.msra.mxu0 0.0
      %886 = vmatprep.subr.mxu0 0.0
      %887 = vmatpush1.msra.mxu0 0.0
      %888 = vmatprep.subr.mxu0 0.0
      %889 = vmatpush1.msra.mxu0 0.0
      %890 = vmatprep.subr.mxu0 0.0
      %891 = vmatpush1.msra.mxu0 0.0
      %892 = vmatprep.subr.mxu0 0.0
      %893 = vmatpush1.msra.mxu0 0.0
      %894 = vmatprep.subr.mxu0 0.0
      %895 = vmatpush1.msra.mxu0 0.0
      %896 = vmatprep.subr.mxu0 0.0
      %897 = vmatpush1.msra.mxu0 0.0
      %898 = vmatprep.mubr.f32.mxu0 0.0
      %899 = vmatmul.mubr.f32.gmra.mrb[0].mxu0 %v761
      %v900 = vpop.f32.mrb[0].mxu0
      %v901 = vadd.f32 0.0, %v900
      %v902 = vpop.f32.mrb[0].mxu0
      %903 = vdwg.mxu0
      %v904 = vadd.f32 %v613, %v830
      %v905 = vadd.f32 %v615, %v832
      %v906 = vadd.f32 %v702, %v901
      %v907 = vld [vmem:[%s8] sm:$0x7]
      %v909 = vlaneseq
      %v910 = vshrl.u32 %v909, 7
      %v911 = vsub.s32 0, %v910
      %v912 = vrot.slane %v907, %v911
      %v913 = vlaneseq
      %v914 = vshrl.u32 %v913, 7
      %v915 = vsub.s32 1, %v914
      %v916 = vrot.slane %v907, %v915
      %v917 = vlaneseq
      %v918 = vshrl.u32 %v917, 7
      %v919 = vsub.s32 2, %v918
      %v920 = vrot.slane %v907, %v919
      %v924 = vadd.f32 %v904, %v912
      %v925 = vadd.f32 %v905, %v916
      %v926 = vadd.f32 %v906, %v920
      %v927 = vxor.u32 %v924, 2147483648
      %v928 = vmul.f32 %v927, 1.442695
      %v929 = vpow.pop %v928
      %v930 = vadd.f32 %v929, 1.0
      %v931 = vrcp.pop %v930
      %v932 = vmul.f32 1.0, %v931
      %v933 = vxor.u32 %v925, 2147483648
      %v934 = vmul.f32 %v933, 1.442695
      %v935 = vpow.pop %v934
      %v936 = vadd.f32 %v935, 1.0
      %v937 = vrcp.pop %v936
      %v938 = vmul.f32 1.0, %v937
      %v939 = vtanh.pop %v925
      %v940 = vtanh.pop %v926
      %v941 = vxor.u32 %v926, 2147483648
      %v942 = vmul.f32 %v941, 1.442695
      %v943 = vpow.pop %v942
      %v944 = vadd.f32 %v943, 1.0
      %v945 = vrcp.pop %v944
      %v946 = vmul.f32 1.0, %v945
      %948 = vrot.lane.b32.xlu0 %v722, 96
      %v949 = vpop.permute.xlu0 %948
      %v951 = vmul.f32 %v932, %v949
      %v952 = vmul.f32 %v938, %v949
      %955 = vrot.lane.b32.xlu0 %v939, 64
      %v956 = vpop.permute.xlu0 %955
      %957 = vrot.lane.b32.xlu0 %v940, 64
      %v958 = vpop.permute.xlu0 %957
      %v959 = vsel %vm533, %v956, %v958
      %v961 = vmul.f32 %v932, %v959
      %963 = vrot.lane.b32.xlu0 %v961, 96
      %v964 = vpop.permute.xlu0 %963
      %v966 = vadd.f32 %v951, %v964
      %v967 = vadd.f32 %v952, %v964
      %v968 = vtanh.pop %v966
      %v969 = vtanh.pop %v967
      %972 = vrot.lane.b32.xlu0 %v968, 64
      %v973 = vpop.permute.xlu0 %972
      %974 = vrot.lane.b32.xlu0 %v969, 64
      %v975 = vpop.permute.xlu0 %974
      %v976 = vsel %vm533, %v973, %v975
      %v978 = vmul.f32 %v946, %v976
      %980 = vrot.lane.b32.xlu0 %v978, 96
      %v981 = vpop.permute.xlu0 %980
      %vm983 = vcmask 259072
      %984 = vst.msk [vmem:[#allocation2] sm:$0x3f] %vm983, %v981
      %985 = vrot.lane.b32.xlu0 %v978, 64
      %v986 = vpop.permute.xlu0 %985
      %988 = vst.msk [vmem:[#allocation2 + $0x6] sm:$0x3f] %vm983, %v986
      %989 = vrot.lane.b32.xlu0 %v978, 32
      %v990 = vpop.permute.xlu0 %989
      %992 = vst.msk [vmem:[#allocation2 + $0xc] sm:$0x3f] %vm983, %v990
      %v993 = vld [vmem:[%s7] sm:$0xff]
      %v994 = vld [vmem:[%s7 + $0x8] sm:$0xff]
      %v995 = vld [vmem:[%s7 + $0x10] sm:$0xff]
      %v996 = vld [vmem:[%s7 + $0x18] sm:$0xff]
      %v997 = vld [vmem:[%s7 + $0x20] sm:$0xff]
      %v998 = vld [vmem:[%s7 + $0x28] sm:$0xff]
      %v999 = vld [vmem:[%s7 + $0x30] sm:$0xff]
      %v1000 = vld [vmem:[%s7 + $0x38] sm:$0xff]
      %v1001 = vld [vmem:[%s7 + $0x40] sm:$0xff]
      %v1002 = vld [vmem:[%s7 + $0x48] sm:$0xff]
      %v1003 = vld [vmem:[%s7 + $0x50] sm:$0xff]
      %v1004 = vld [vmem:[%s7 + $0x58] sm:$0xff]
      %v1005 = vld [vmem:[%s7 + $0x60] sm:$0xff]
      %v1006 = vld [vmem:[%s7 + $0x68] sm:$0xff]
      %v1007 = vld [vmem:[%s7 + $0x70] sm:$0xff]
      %v1008 = vld [vmem:[%s7 + $0x78] sm:$0xff]
      %v1009 = vld [vmem:[%s7 + $0x80] sm:$0xff]
      %v1010 = vld [vmem:[%s7 + $0x88] sm:$0xff]
      %v1011 = vld [vmem:[%s7 + $0x90] sm:$0xff]
      %v1012 = vld [vmem:[%s7 + $0x98] sm:$0xff]
      %v1013 = vld [vmem:[%s7 + $0xa0] sm:$0xff]
      %v1014 = vld [vmem:[%s7 + $0xa8] sm:$0xff]
      %v1015 = vld [vmem:[%s7 + $0xb0] sm:$0xff]
      %v1016 = vld [vmem:[%s7 + $0xb8] sm:$0xff]
      %v1017 = vld [vmem:[%s7 + $0xc0] sm:$0xff]
      %v1018 = vld [vmem:[%s7 + $0xc8] sm:$0xff]
      %v1019 = vld [vmem:[%s7 + $0xd0] sm:$0xff]
      %v1020 = vld [vmem:[%s7 + $0xd8] sm:$0xff]
      %v1021 = vld [vmem:[%s7 + $0xe0] sm:$0xff]
      %v1022 = vld [vmem:[%s7 + $0xe8] sm:$0xff]
      %v1023 = vld [vmem:[%s7 + $0xf0] sm:$0xff]
      %v1024 = vld [vmem:[%s7 + $0xf8] sm:$0xff]
      %v1025 = vld [vmem:[%s7 + $0x100] sm:$0xff]
      %v1026 = vld [vmem:[%s7 + $0x108] sm:$0xff]
      %v1027 = vld [vmem:[%s7 + $0x110] sm:$0xff]
      %v1028 = vld [vmem:[%s7 + $0x118] sm:$0xff]
      %v1029 = vsel %vm759, %v981, 0
      %1031 = vmatprep.subr.mxu0 %v994
      %1032 = vmatpush1.msra.mxu0 %v993
      %1033 = vmatprep.subr.mxu0 %v997
      %1034 = vmatpush1.msra.mxu0 %v996
      %1035 = vmatprep.subr.mxu0 %v1000
      %1036 = vmatpush1.msra.mxu0 %v999
      %1037 = vmatprep.subr.mxu0 %v1003
      %1038 = vmatpush1.msra.mxu0 %v1002
      %1039 = vmatprep.subr.mxu0 %v1006
      %1040 = vmatpush1.msra.mxu0 %v1005
      %1041 = vmatprep.subr.mxu0 %v1009
      %1042 = vmatpush1.msra.mxu0 %v1008
      %1043 = vmatprep.subr.mxu0 %v1012
      %1044 = vmatpush1.msra.mxu0 %v1011
      %1045 = vmatprep.subr.mxu0 %v1015
      %1046 = vmatpush1.msra.mxu0 %v1014
      %1047 = vmatprep.subr.mxu0 %v1018
      %1048 = vmatpush1.msra.mxu0 %v1017
      %1049 = vmatprep.subr.mxu0 %v1021
      %1050 = vmatpush1.msra.mxu0 %v1020
      %1051 = vmatprep.subr.mxu0 %v1024
      %1052 = vmatpush1.msra.mxu0 %v1023
      %1053 = vmatprep.subr.mxu0 %v1027
      %1054 = vmatpush1.msra.mxu0 %v1026
      %1055 = vmatprep.subr.mxu0 0.0
      %1056 = vmatpush1.msra.mxu0 0.0
      %1057 = vmatprep.subr.mxu0 0.0
      %1058 = vmatpush1.msra.mxu0 0.0
      %1059 = vmatprep.subr.mxu0 0.0
      %1060 = vmatpush1.msra.mxu0 0.0
      %1061 = vmatprep.subr.mxu0 0.0
      %1062 = vmatpush1.msra.mxu0 0.0
      %1063 = vmatprep.subr.mxu0 0.0
      %1064 = vmatpush1.msra.mxu0 0.0
      %1065 = vmatprep.subr.mxu0 0.0
      %1066 = vmatpush1.msra.mxu0 0.0
      %1067 = vmatprep.subr.mxu0 0.0
      %1068 = vmatpush1.msra.mxu0 0.0
      %1069 = vmatprep.subr.mxu0 0.0
      %1070 = vmatpush1.msra.mxu0 0.0
      %1071 = vmatprep.subr.mxu0 0.0
      %1072 = vmatpush1.msra.mxu0 0.0
      %1073 = vmatprep.subr.mxu0 0.0
      %1074 = vmatpush1.msra.mxu0 0.0
      %1075 = vmatprep.subr.mxu0 0.0
      %1076 = vmatpush1.msra.mxu0 0.0
      %1077 = vmatprep.subr.mxu0 0.0
      %1078 = vmatpush1.msra.mxu0 0.0
      %1079 = vmatprep.subr.mxu0 0.0
      %1080 = vmatpush1.msra.mxu0 0.0
      %1081 = vmatprep.subr.mxu0 0.0
      %1082 = vmatpush1.msra.mxu0 0.0
      %1083 = vmatprep.subr.mxu0 0.0
      %1084 = vmatpush1.msra.mxu0 0.0
      %1085 = vmatprep.subr.mxu0 0.0
      %1086 = vmatpush1.msra.mxu0 0.0
      %1087 = vmatprep.subr.mxu0 0.0
      %1088 = vmatpush1.msra.mxu0 0.0
      %1089 = vmatprep.subr.mxu0 0.0
      %1090 = vmatpush1.msra.mxu0 0.0
      %1091 = vmatprep.subr.mxu0 0.0
      %1092 = vmatpush1.msra.mxu0 0.0
      %1093 = vmatprep.subr.mxu0 0.0
      %1094 = vmatpush1.msra.mxu0 0.0
      %1095 = vmatprep.mubr.f32.mxu0 0.0
      %1096 = vmatmul.mubr.f32.gmra.mrb[0].mxu0 %v1029
      %v1097 = vpop.f32.mrb[0].mxu0
      %v1098 = vadd.f32 0.0, %v1097
      %v1099 = vpop.f32.mrb[0].mxu0
      %v1100 = vadd.f32 0.0, %v1099
      %1101 = vdwg.mxu0
      %1102 = vmatprep.subr.mxu0 0.0
      %1103 = vmatpush1.msra.mxu0 %v995
      %1104 = vmatprep.subr.mxu0 0.0
      %1105 = vmatpush1.msra.mxu0 %v998
      %1106 = vmatprep.subr.mxu0 0.0
      %1107 = vmatpush1.msra.mxu0 %v1001
      %1108 = vmatprep.subr.mxu0 0.0
      %1109 = vmatpush1.msra.mxu0 %v1004
      %1110 = vmatprep.subr.mxu0 0.0
      %1111 = vmatpush1.msra.mxu0 %v1007
      %1112 = vmatprep.subr.mxu0 0.0
      %1113 = vmatpush1.msra.mxu0 %v1010
      %1114 = vmatprep.subr.mxu0 0.0
      %1115 = vmatpush1.msra.mxu0 %v1013
      %1116 = vmatprep.subr.mxu0 0.0
      %1117 = vmatpush1.msra.mxu0 %v1016
      %1118 = vmatprep.subr.mxu0 0.0
      %1119 = vmatpush1.msra.mxu0 %v1019
      %1120 = vmatprep.subr.mxu0 0.0
      %1121 = vmatpush1.msra.mxu0 %v1022
      %1122 = vmatprep.subr.mxu0 0.0
      %1123 = vmatpush1.msra.mxu0 %v1025
      %1124 = vmatprep.subr.mxu0 0.0
      %1125 = vmatpush1.msra.mxu0 %v1028
      %1126 = vmatprep.subr.mxu0 0.0
      %1127 = vmatpush1.msra.mxu0 0.0
      %1128 = vmatprep.subr.mxu0 0.0
      %1129 = vmatpush1.msra.mxu0 0.0
      %1130 = vmatprep.subr.mxu0 0.0
      %1131 = vmatpush1.msra.mxu0 0.0
      %1132 = vmatprep.subr.mxu0 0.0
      %1133 = vmatpush1.msra.mxu0 0.0
      %1134 = vmatprep.subr.mxu0 0.0
      %1135 = vmatpush1.msra.mxu0 0.0
      %1136 = vmatprep.subr.mxu0 0.0
      %1137 = vmatpush1.msra.mxu0 0.0
      %1138 = vmatprep.subr.mxu0 0.0
      %1139 = vmatpush1.msra.mxu0 0.0
      %1140 = vmatprep.subr.mxu0 0.0
      %1141 = vmatpush1.msra.mxu0 0.0
      %1142 = vmatprep.subr.mxu0 0.0
      %1143 = vmatpush1.msra.mxu0 0.0
      %1144 = vmatprep.subr.mxu0 0.0
      %1145 = vmatpush1.msra.mxu0 0.0
      %1146 = vmatprep.subr.mxu0 0.0
      %1147 = vmatpush1.msra.mxu0 0.0
      %1148 = vmatprep.subr.mxu0 0.0
      %1149 = vmatpush1.msra.mxu0 0.0
      %1150 = vmatprep.subr.mxu0 0.0
      %1151 = vmatpush1.msra.mxu0 0.0
      %1152 = vmatprep.subr.mxu0 0.0
      %1153 = vmatpush1.msra.mxu0 0.0
      %1154 = vmatprep.subr.mxu0 0.0
      %1155 = vmatpush1.msra.mxu0 0.0
      %1156 = vmatprep.subr.mxu0 0.0
      %1157 = vmatpush1.msra.mxu0 0.0
      %1158 = vmatprep.subr.mxu0 0.0
      %1159 = vmatpush1.msra.mxu0 0.0
      %1160 = vmatprep.subr.mxu0 0.0
      %1161 = vmatpush1.msra.mxu0 0.0
      %1162 = vmatprep.subr.mxu0 0.0
      %1163 = vmatpush1.msra.mxu0 0.0
      %1164 = vmatprep.subr.mxu0 0.0
      %1165 = vmatpush1.msra.mxu0 0.0
      %1166 = vmatprep.mubr.f32.mxu0 0.0
      %1167 = vmatmul.mubr.f32.gmra.mrb[0].mxu0 %v1029
      %v1168 = vpop.f32.mrb[0].mxu0
      %v1169 = vadd.f32 0.0, %v1168
      %v1170 = vpop.f32.mrb[0].mxu0
      %1171 = vdwg.mxu0
      %v1175 = vrot.slane %v1098, 2
      %v1176 = vrot.slane %v1100, 2
      %v1177 = vrot.slane %v1169, 2
      %v1181 = vadd.f32 %v613, %v1175
      %v1182 = vadd.f32 %v615, %v1176
      %v1183 = vadd.f32 %v702, %v1177
      %v1184 = vadd.f32 %v619, %v1175
      %v1185 = vadd.f32 %v621, %v1176
      %v1186 = vadd.f32 %v707, %v1177
      %v1187 = vld [vmem:[%s8] sm:$0x7]
      %v1189 = vlaneseq
      %v1190 = vshrl.u32 %v1189, 7
      %v1191 = vsub.s32 0, %v1190
      %v1192 = vrot.slane %v1187, %v1191
      %v1193 = vlaneseq
      %v1194 = vshrl.u32 %v1193, 7
      %v1195 = vsub.s32 1, %v1194
      %v1196 = vrot.slane %v1187, %v1195
      %v1197 = vlaneseq
      %v1198 = vshrl.u32 %v1197, 7
      %v1199 = vsub.s32 2, %v1198
      %v1200 = vrot.slane %v1187, %v1199
      %v1204 = vadd.f32 %v1181, %v1192
      %v1205 = vadd.f32 %v1182, %v1196
      %v1206 = vadd.f32 %v1183, %v1200
      %v1207 = vadd.f32 %v1184, %v1192
      %v1208 = vadd.f32 %v1185, %v1196
      %v1209 = vadd.f32 %v1186, %v1200
      %v1210 = vxor.u32 %v1204, 2147483648
      %v1211 = vxor.u32 %v1207, 2147483648
      %v1212 = vmul.f32 %v1210, 1.442695
      %v1213 = vpow.pop %v1212
      %v1214 = vmul.f32 %v1211, 1.442695
      %v1215 = vpow.pop %v1214
      %v1216 = vadd.f32 %v1213, 1.0
      %v1217 = vadd.f32 %v1215, 1.0
      %v1218 = vrcp.pop %v1216
      %v1219 = vmul.f32 1.0, %v1218
      %v1220 = vrcp.pop %v1217
      %v1221 = vmul.f32 1.0, %v1220
      %v1222 = vxor.u32 %v1205, 2147483648
      %v1223 = vxor.u32 %v1208, 2147483648
      %v1224 = vmul.f32 %v1222, 1.442695
      %v1225 = vpow.pop %v1224
      %v1226 = vmul.f32 %v1223, 1.442695
      %v1227 = vpow.pop %v1226
      %v1228 = vadd.f32 %v1225, 1.0
      %v1229 = vadd.f32 %v1227, 1.0
      %v1230 = vrcp.pop %v1228
      %v1231 = vmul.f32 1.0, %v1230
      %v1232 = vrcp.pop %v1229
      %v1233 = vmul.f32 1.0, %v1232
      %v1234 = vtanh.pop %v1205
      %v1235 = vtanh.pop %v1206
      %v1236 = vtanh.pop %v1208
      %v1237 = vtanh.pop %v1209
      %v1238 = vxor.u32 %v1206, 2147483648
      %v1239 = vxor.u32 %v1209, 2147483648
      %v1240 = vmul.f32 %v1238, 1.442695
      %v1241 = vpow.pop %v1240
      %v1242 = vmul.f32 %v1239, 1.442695
      %v1243 = vpow.pop %v1242
      %v1244 = vadd.f32 %v1241, 1.0
      %v1245 = vadd.f32 %v1243, 1.0
      %v1246 = vrcp.pop %v1244
      %v1247 = vmul.f32 1.0, %v1246
      %v1248 = vrcp.pop %v1245
      %v1249 = vmul.f32 1.0, %v1248
      %v1252 = vrot.slane %v966, 2
      %v1253 = vrot.slane %v967, 2
      %v1256 = vmul.f32 %v1219, %v1252
      %v1257 = vmul.f32 %v1231, %v1253
      %v1258 = vmul.f32 %v1221, %v1252
      %v1259 = vmul.f32 %v1233, %v1253
      %1264 = vrot.lane.b32.xlu0 %v1234, 64
      %v1265 = vpop.permute.xlu0 %1264
      %1266 = vrot.lane.b32.xlu0 %v1235, 64
      %v1267 = vpop.permute.xlu0 %1266
      %1268 = vrot.lane.b32.xlu0 %v1236, 64
      %v1269 = vpop.permute.xlu0 %1268
      %1270 = vrot.lane.b32.xlu0 %v1237, 64
      %v1271 = vpop.permute.xlu0 %1270
      %v1272 = vsel %vm533, %v1265, %v1267
      %v1273 = vsel %vm533, %v1269, %v1271
      %v1276 = vmul.f32 %v1219, %v1272
      %v1277 = vmul.f32 %v1221, %v1273
      %1280 = vrot.lane.b32.xlu0 %v1276, 96
      %v1281 = vpop.permute.xlu0 %1280
      %1282 = vrot.lane.b32.xlu0 %v1277, 96
      %v1283 = vpop.permute.xlu0 %1282
      %v1286 = vadd.f32 %v1256, %v1281
      %v1287 = vadd.f32 %v1257, %v1281
      %v1288 = vadd.f32 %v1258, %v1283
      %v1289 = vadd.f32 %v1259, %v1283
      %v1290 = vtanh.pop %v1286
      %v1291 = vtanh.pop %v1287
      %v1292 = vtanh.pop %v1288
      %v1293 = vtanh.pop %v1289
      %1298 = vrot.lane.b32.xlu0 %v1290, 64
      %v1299 = vpop.permute.xlu0 %1298
      %1300 = vrot.lane.b32.xlu0 %v1291, 64
      %v1301 = vpop.permute.xlu0 %1300
      %1302 = vrot.lane.b32.xlu0 %v1292, 64
      %v1303 = vpop.permute.xlu0 %1302
      %1304 = vrot.lane.b32.xlu0 %v1293, 64
      %v1305 = vpop.permute.xlu0 %1304
      %v1306 = vsel %vm533, %v1299, %v1301
      %v1307 = vsel %vm533, %v1303, %v1305
      %v1310 = vmul.f32 %v1247, %v1306
      %v1311 = vmul.f32 %v1249, %v1307
      %1314 = vrot.lane.b32.xlu0 %v1310, 96
      %v1315 = vpop.permute.xlu0 %1314
      %1316 = vrot.lane.b32.xlu0 %v1311, 96
      %v1317 = vpop.permute.xlu0 %1316
      %vm1320 = vcmask 261126
      %1321 = vst.msk [vmem:[#allocation2 + $0xc] sm:$0xc0] %vm1320, %v1315
      %vm1322 = vcmask 257024
      %1323 = vst.msk [vmem:[#allocation2 + $0x14] sm:$0xf] %vm1322, %v1317
      %1324 = vrot.lane.b32.xlu0 %v1310, 64
      %v1325 = vpop.permute.xlu0 %1324
      %1326 = vrot.lane.b32.xlu0 %v1311, 64
      %v1327 = vpop.permute.xlu0 %1326
      %1330 = vst.msk [vmem:[#allocation2 + $0x12] sm:$0xc0] %vm1320, %v1325
      %1331 = vst.msk [vmem:[#allocation2 + $0x1a] sm:$0xf] %vm1322, %v1327
      %1332 = vrot.lane.b32.xlu0 %v1310, 32
      %v1333 = vpop.permute.xlu0 %1332
      %1334 = vrot.lane.b32.xlu0 %v1311, 32
      %v1335 = vpop.permute.xlu0 %1334
      %1338 = vst.msk [vmem:[#allocation2 + $0x18] sm:$0xc0] %vm1320, %v1333
      %1339 = vst.msk [vmem:[#allocation2 + $0x20] sm:$0xf] %vm1322, %v1335
      %v1340 = vld [vmem:[%s7] sm:$0xff]
      %v1341 = vld [vmem:[%s7 + $0x8] sm:$0xff]
      %v1342 = vld [vmem:[%s7 + $0x10] sm:$0xff]
      %v1343 = vld [vmem:[%s7 + $0x18] sm:$0xff]
      %v1344 = vld [vmem:[%s7 + $0x20] sm:$0xff]
      %v1345 = vld [vmem:[%s7 + $0x28] sm:$0xff]
      %v1346 = vld [vmem:[%s7 + $0x30] sm:$0xff]
      %v1347 = vld [vmem:[%s7 + $0x38] sm:$0xff]
      %v1348 = vld [vmem:[%s7 + $0x40] sm:$0xff]
      %v1349 = vld [vmem:[%s7 + $0x48] sm:$0xff]
      %v1350 = vld [vmem:[%s7 + $0x50] sm:$0xff]
      %v1351 = vld [vmem:[%s7 + $0x58] sm:$0xff]
      %v1352 = vld [vmem:[%s7 + $0x60] sm:$0xff]
      %v1353 = vld [vmem:[%s7 + $0x68] sm:$0xff]
      %v1354 = vld [vmem:[%s7 + $0x70] sm:$0xff]
      %v1355 = vld [vmem:[%s7 + $0x78] sm:$0xff]
      %v1356 = vld [vmem:[%s7 + $0x80] sm:$0xff]
      %v1357 = vld [vmem:[%s7 + $0x88] sm:$0xff]
      %v1358 = vld [vmem:[%s7 + $0x90] sm:$0xff]
      %v1359 = vld [vmem:[%s7 + $0x98] sm:$0xff]
      %v1360 = vld [vmem:[%s7 + $0xa0] sm:$0xff]
      %v1361 = vld [vmem:[%s7 + $0xa8] sm:$0xff]
      %v1362 = vld [vmem:[%s7 + $0xb0] sm:$0xff]
      %v1363 = vld [vmem:[%s7 + $0xb8] sm:$0xff]
      %v1364 = vld [vmem:[%s7 + $0xc0] sm:$0xff]
      %v1365 = vld [vmem:[%s7 + $0xc8] sm:$0xff]
      %v1366 = vld [vmem:[%s7 + $0xd0] sm:$0xff]
      %v1367 = vld [vmem:[%s7 + $0xd8] sm:$0xff]
      %v1368 = vld [vmem:[%s7 + $0xe0] sm:$0xff]
      %v1369 = vld [vmem:[%s7 + $0xe8] sm:$0xff]
      %v1370 = vld [vmem:[%s7 + $0xf0] sm:$0xff]
      %v1371 = vld [vmem:[%s7 + $0xf8] sm:$0xff]
      %v1372 = vld [vmem:[%s7 + $0x100] sm:$0xff]
      %v1373 = vld [vmem:[%s7 + $0x108] sm:$0xff]
      %v1374 = vld [vmem:[%s7 + $0x110] sm:$0xff]
      %v1375 = vld [vmem:[%s7 + $0x118] sm:$0xff]
      %vm1376 = vcmask 1041408
      %v1377 = vrot.slane %v1310, 6
      %v1378 = vrot.slane %v1311, 6
      %v1379 = vsel %vm1376, %v1377, %v1378
      %1380 = vrot.lane.b32.xlu0 %v1379, 96
      %v1381 = vpop.permute.xlu0 %1380
      %v1382 = vsel %vm759, %v1381, 0
      %1384 = vmatprep.subr.mxu0 %v1341
      %1385 = vmatpush1.msra.mxu0 %v1340
      %1386 = vmatprep.subr.mxu0 %v1344
      %1387 = vmatpush1.msra.mxu0 %v1343
      %1388 = vmatprep.subr.mxu0 %v1347
      %1389 = vmatpush1.msra.mxu0 %v1346
      %1390 = vmatprep.subr.mxu0 %v1350
      %1391 = vmatpush1.msra.mxu0 %v1349
      %1392 = vmatprep.subr.mxu0 %v1353
      %1393 = vmatpush1.msra.mxu0 %v1352
      %1394 = vmatprep.subr.mxu0 %v1356
      %1395 = vmatpush1.msra.mxu0 %v1355
      %1396 = vmatprep.subr.mxu0 %v1359
      %1397 = vmatpush1.msra.mxu0 %v1358
      %1398 = vmatprep.subr.mxu0 %v1362
      %1399 = vmatpush1.msra.mxu0 %v1361
      %1400 = vmatprep.subr.mxu0 %v1365
      %1401 = vmatpush1.msra.mxu0 %v1364
      %1402 = vmatprep.subr.mxu0 %v1368
      %1403 = vmatpush1.msra.mxu0 %v1367
      %1404 = vmatprep.subr.mxu0 %v1371
      %1405 = vmatpush1.msra.mxu0 %v1370
      %1406 = vmatprep.subr.mxu0 %v1374
      %1407 = vmatpush1.msra.mxu0 %v1373
      %1408 = vmatprep.subr.mxu0 0.0
      %1409 = vmatpush1.msra.mxu0 0.0
      %1410 = vmatprep.subr.mxu0 0.0
      %1411 = vmatpush1.msra.mxu0 0.0
      %1412 = vmatprep.subr.mxu0 0.0
      %1413 = vmatpush1.msra.mxu0 0.0
      %1414 = vmatprep.subr.mxu0 0.0
      %1415 = vmatpush1.msra.mxu0 0.0
      %1416 = vmatprep.subr.mxu0 0.0
      %1417 = vmatpush1.msra.mxu0 0.0
      %1418 = vmatprep.subr.mxu0 0.0
      %1419 = vmatpush1.msra.mxu0 0.0
      %1420 = vmatprep.subr.mxu0 0.0
      %1421 = vmatpush1.msra.mxu0 0.0
      %1422 = vmatprep.subr.mxu0 0.0
      %1423 = vmatpush1.msra.mxu0 0.0
      %1424 = vmatprep.subr.mxu0 0.0
      %1425 = vmatpush1.msra.mxu0 0.0
      %1426 = vmatprep.subr.mxu0 0.0
      %1427 = vmatpush1.msra.mxu0 0.0
      %1428 = vmatprep.subr.mxu0 0.0
      %1429 = vmatpush1.msra.mxu0 0.0
      %1430 = vmatprep.subr.mxu0 0.0
      %1431 = vmatpush1.msra.mxu0 0.0
      %1432 = vmatprep.subr.mxu0 0.0
      %1433 = vmatpush1.msra.mxu0 0.0
      %1434 = vmatprep.subr.mxu0 0.0
      %1435 = vmatpush1.msra.mxu0 0.0
      %1436 = vmatprep.subr.mxu0 0.0
      %1437 = vmatpush1.msra.mxu0 0.0
      %1438 = vmatprep.subr.mxu0 0.0
      %1439 = vmatpush1.msra.mxu0 0.0
      %1440 = vmatprep.subr.mxu0 0.0
      %1441 = vmatpush1.msra.mxu0 0.0
      %1442 = vmatprep.subr.mxu0 0.0
      %1443 = vmatpush1.msra.mxu0 0.0
      %1444 = vmatprep.subr.mxu0 0.0
      %1445 = vmatpush1.msra.mxu0 0.0
      %1446 = vmatprep.subr.mxu0 0.0
      %1447 = vmatpush1.msra.mxu0 0.0
      %1448 = vmatprep.mubr.f32.mxu0 0.0
      %1449 = vmatmul.mubr.f32.gmra.mrb[0].mxu0 %v1382
      %v1450 = vpop.f32.mrb[0].mxu0
      %v1451 = vadd.f32 0.0, %v1450
      %v1452 = vpop.f32.mrb[0].mxu0
      %v1453 = vadd.f32 0.0, %v1452
      %1454 = vdwg.mxu0
      %1455 = vmatprep.subr.mxu0 0.0
      %1456 = vmatpush1.msra.mxu0 %v1342
      %1457 = vmatprep.subr.mxu0 0.0
      %1458 = vmatpush1.msra.mxu0 %v1345
      %1459 = vmatprep.subr.mxu0 0.0
      %1460 = vmatpush1.msra.mxu0 %v1348
      %1461 = vmatprep.subr.mxu0 0.0
      %1462 = vmatpush1.msra.mxu0 %v1351
      %1463 = vmatprep.subr.mxu0 0.0
      %1464 = vmatpush1.msra.mxu0 %v1354
      %1465 = vmatprep.subr.mxu0 0.0
      %1466 = vmatpush1.msra.mxu0 %v1357
      %1467 = vmatprep.subr.mxu0 0.0
      %1468 = vmatpush1.msra.mxu0 %v1360
      %1469 = vmatprep.subr.mxu0 0.0
      %1470 = vmatpush1.msra.mxu0 %v1363
      %1471 = vmatprep.subr.mxu0 0.0
      %1472 = vmatpush1.msra.mxu0 %v1366
      %1473 = vmatprep.subr.mxu0 0.0
      %1474 = vmatpush1.msra.mxu0 %v1369
      %1475 = vmatprep.subr.mxu0 0.0
      %1476 = vmatpush1.msra.mxu0 %v1372
      %1477 = vmatprep.subr.mxu0 0.0
      %1478 = vmatpush1.msra.mxu0 %v1375
      %1479 = vmatprep.subr.mxu0 0.0
      %1480 = vmatpush1.msra.mxu0 0.0
      %1481 = vmatprep.subr.mxu0 0.0
      %1482 = vmatpush1.msra.mxu0 0.0
      %1483 = vmatprep.subr.mxu0 0.0
      %1484 = vmatpush1.msra.mxu0 0.0
      %1485 = vmatprep.subr.mxu0 0.0
      %1486 = vmatpush1.msra.mxu0 0.0
      %1487 = vmatprep.subr.mxu0 0.0
      %1488 = vmatpush1.msra.mxu0 0.0
      %1489 = vmatprep.subr.mxu0 0.0
      %1490 = vmatpush1.msra.mxu0 0.0
      %1491 = vmatprep.subr.mxu0 0.0
      %1492 = vmatpush1.msra.mxu0 0.0
      %1493 = vmatprep.subr.mxu0 0.0
      %1494 = vmatpush1.msra.mxu0 0.0
      %1495 = vmatprep.subr.mxu0 0.0
      %1496 = vmatpush1.msra.mxu0 0.0
      %1497 = vmatprep.subr.mxu0 0.0
      %1498 = vmatpush1.msra.mxu0 0.0
      %1499 = vmatprep.subr.mxu0 0.0
      %1500 = vmatpush1.msra.mxu0 0.0
      %1501 = vmatprep.subr.mxu0 0.0
      %1502 = vmatpush1.msra.mxu0 0.0
      %1503 = vmatprep.subr.mxu0 0.0
      %1504 = vmatpush1.msra.mxu0 0.0
      %1505 = vmatprep.subr.mxu0 0.0
      %1506 = vmatpush1.msra.mxu0 0.0
      %1507 = vmatprep.subr.mxu0 0.0
      %1508 = vmatpush1.msra.mxu0 0.0
      %1509 = vmatprep.subr.mxu0 0.0
      %1510 = vmatpush1.msra.mxu0 0.0
      %1511 = vmatprep.subr.mxu0 0.0
      %1512 = vmatpush1.msra.mxu0 0.0
      %1513 = vmatprep.subr.mxu0 0.0
      %1514 = vmatpush1.msra.mxu0 0.0
      %1515 = vmatprep.subr.mxu0 0.0
      %1516 = vmatpush1.msra.mxu0 0.0
      %1517 = vmatprep.subr.mxu0 0.0
      %1518 = vmatpush1.msra.mxu0 0.0
      %1519 = vmatprep.mubr.f32.mxu0 0.0
      %1520 = vmatmul.mubr.f32.gmra.mrb[0].mxu0 %v1382
      %v1521 = vpop.f32.mrb[0].mxu0
      %v1522 = vadd.f32 0.0, %v1521
      %v1523 = vpop.f32.mrb[0].mxu0
      %1524 = vdwg.mxu0
      %v1528 = vrot.slane %v1451, 4
      %v1529 = vrot.slane %v1453, 4
      %v1530 = vrot.slane %v1522, 4
      %v1534 = vadd.f32 %v619, %v1528
      %v1535 = vadd.f32 %v621, %v1529
      %v1536 = vadd.f32 %v707, %v1530
      %v1537 = vadd.f32 %v625, %v1528
      %v1538 = vadd.f32 %v627, %v1529
      %v1539 = vadd.f32 %v712, %v1530
      %v1540 = vld [vmem:[%s8] sm:$0x7]
      %v1542 = vlaneseq
      %v1543 = vshrl.u32 %v1542, 7
      %v1544 = vsub.s32 0, %v1543
      %v1545 = vrot.slane %v1540, %v1544
      %v1546 = vlaneseq
      %v1547 = vshrl.u32 %v1546, 7
      %v1548 = vsub.s32 1, %v1547
      %v1549 = vrot.slane %v1540, %v1548
      %v1550 = vlaneseq
      %v1551 = vshrl.u32 %v1550, 7
      %v1552 = vsub.s32 2, %v1551
      %v1553 = vrot.slane %v1540, %v1552
      %v1557 = vadd.f32 %v1534, %v1545
      %v1558 = vadd.f32 %v1535, %v1549
      %v1559 = vadd.f32 %v1536, %v1553
      %v1560 = vadd.f32 %v1537, %v1545
      %v1561 = vadd.f32 %v1538, %v1549
      %v1562 = vadd.f32 %v1539, %v1553
      %v1563 = vxor.u32 %v1557, 2147483648
      %v1564 = vxor.u32 %v1560, 2147483648
      %v1565 = vmul.f32 %v1563, 1.442695
      %v1566 = vpow.pop %v1565
      %v1567 = vmul.f32 %v1564, 1.442695
      %v1568 = vpow.pop %v1567
      %v1569 = vadd.f32 %v1566, 1.0
      %v1570 = vadd.f32 %v1568, 1.0
      %v1571 = vrcp.pop %v1569
      %v1572 = vmul.f32 1.0, %v1571
      %v1573 = vrcp.pop %v1570
      %v1574 = vmul.f32 1.0, %v1573
      %v1575 = vxor.u32 %v1558, 2147483648
      %v1576 = vxor.u32 %v1561, 2147483648
      %v1577 = vmul.f32 %v1575, 1.442695
      %v1578 = vpow.pop %v1577
      %v1579 = vmul.f32 %v1576, 1.442695
      %v1580 = vpow.pop %v1579
      %v1581 = vadd.f32 %v1578, 1.0
      %v1582 = vadd.f32 %v1580, 1.0
      %v1583 = vrcp.pop %v1581
      %v1584 = vmul.f32 1.0, %v1583
      %v1585 = vrcp.pop %v1582
      %v1586 = vmul.f32 1.0, %v1585
      %v1587 = vtanh.pop %v1558
      %v1588 = vtanh.pop %v1559
      %v1589 = vtanh.pop %v1561
      %v1590 = vtanh.pop %v1562
      %v1591 = vxor.u32 %v1559, 2147483648
      %v1592 = vxor.u32 %v1562, 2147483648
      %v1593 = vmul.f32 %v1591, 1.442695
      %v1594 = vpow.pop %v1593
      %v1595 = vmul.f32 %v1592, 1.442695
      %v1596 = vpow.pop %v1595
      %v1597 = vadd.f32 %v1594, 1.0
      %v1598 = vadd.f32 %v1596, 1.0
      %v1599 = vrcp.pop %v1597
      %v1600 = vmul.f32 1.0, %v1599
      %v1601 = vrcp.pop %v1598
      %v1602 = vmul.f32 1.0, %v1601
      %vm1607 = vcmask 1045504
      %v1608 = vrot.slane %v1286, 2
      %v1609 = vrot.slane %v1288, 2
      %v1610 = vsel %vm1607, %v1608, %v1609
      %v1611 = vrot.slane %v1287, 2
      %v1612 = vrot.slane %v1289, 2
      %v1613 = vsel %vm1607, %v1611, %v1612
      %v1618 = vmul.f32 %v1572, %v1610
      %v1619 = vmul.f32 %v1584, %v1613
      %v1620 = vmul.f32 %v1574, %v1609
      %v1621 = vmul.f32 %v1586, %v1612
      %1626 = vrot.lane.b32.xlu0 %v1587, 64
      %v1627 = vpop.permute.xlu0 %1626
      %1628 = vrot.lane.b32.xlu0 %v1588, 64
      %v1629 = vpop.permute.xlu0 %1628
      %1630 = vrot.lane.b32.xlu0 %v1589, 64
      %v1631 = vpop.permute.xlu0 %1630
      %1632 = vrot.lane.b32.xlu0 %v1590, 64
      %v1633 = vpop.permute.xlu0 %1632
      %v1634 = vsel %vm533, %v1627, %v1629
      %v1635 = vsel %vm533, %v1631, %v1633
      %v1638 = vmul.f32 %v1572, %v1634
      %v1639 = vmul.f32 %v1574, %v1635
      %1642 = vrot.lane.b32.xlu0 %v1638, 96
      %v1643 = vpop.permute.xlu0 %1642
      %1644 = vrot.lane.b32.xlu0 %v1639, 96
      %v1645 = vpop.permute.xlu0 %1644
      %v1648 = vadd.f32 %v1618, %v1643
      %v1649 = vadd.f32 %v1619, %v1643
      %v1650 = vadd.f32 %v1620, %v1645
      %v1651 = vadd.f32 %v1621, %v1645
      %v1652 = vtanh.pop %v1648
      %v1653 = vtanh.pop %v1649
      %v1654 = vtanh.pop %v1650
      %v1655 = vtanh.pop %v1651
      %1660 = vrot.lane.b32.xlu0 %v1652, 64
      %v1661 = vpop.permute.xlu0 %1660
      %1662 = vrot.lane.b32.xlu0 %v1653, 64
      %v1663 = vpop.permute.xlu0 %1662
      %1664 = vrot.lane.b32.xlu0 %v1654, 64
      %v1665 = vpop.permute.xlu0 %1664
      %1666 = vrot.lane.b32.xlu0 %v1655, 64
      %v1667 = vpop.permute.xlu0 %1666
      %v1668 = vsel %vm533, %v1661, %v1663
      %v1669 = vsel %vm533, %v1665, %v1667
      %v1672 = vmul.f32 %v1600, %v1668
      %v1673 = vmul.f32 %v1602, %v1669
      %1676 = vrot.lane.b32.xlu0 %v1672, 96
      %v1677 = vpop.permute.xlu0 %1676
      %1678 = vrot.lane.b32.xlu0 %v1673, 96
      %v1679 = vpop.permute.xlu0 %1678
      %vm1682 = vcmask 261124
      %1683 = vst.msk [vmem:[#allocation2 + $0x20] sm:$0xf0] %vm1682, %v1677
      %vm1684 = vcmask 254976
      %1685 = vst.msk [vmem:[#allocation2 + $0x28] sm:$0x3] %vm1684, %v1679
      %1686 = vrot.lane.b32.xlu0 %v1672, 64
      %v1687 = vpop.permute.xlu0 %1686
      %1688 = vrot.lane.b32.xlu0 %v1673, 64
      %v1689 = vpop.permute.xlu0 %1688
      %1692 = vst.msk [vmem:[#allocation2 + $0x26] sm:$0xf0] %vm1682, %v1687
      %1693 = vst.msk [vmem:[#allocation2 + $0x2e] sm:$0x3] %vm1684, %v1689
      %1694 = vrot.lane.b32.xlu0 %v1672, 32
      %v1695 = vpop.permute.xlu0 %1694
      %1696 = vrot.lane.b32.xlu0 %v1673, 32
      %v1697 = vpop.permute.xlu0 %1696
      %1700 = vst.msk [vmem:[#allocation2 + $0x2c] sm:$0xf0] %vm1682, %v1695
      %1701 = vst.msk [vmem:[#allocation2 + $0x34] sm:$0x3] %vm1684, %v1697
      %v1702 = vld [vmem:[%s7] sm:$0xff]
      %v1703 = vld [vmem:[%s7 + $0x8] sm:$0xff]
      %v1704 = vld [vmem:[%s7 + $0x10] sm:$0xff]
      %v1705 = vld [vmem:[%s7 + $0x18] sm:$0xff]
      %v1706 = vld [vmem:[%s7 + $0x20] sm:$0xff]
      %v1707 = vld [vmem:[%s7 + $0x28] sm:$0xff]
      %v1708 = vld [vmem:[%s7 + $0x30] sm:$0xff]
      %v1709 = vld [vmem:[%s7 + $0x38] sm:$0xff]
      %v1710 = vld [vmem:[%s7 + $0x40] sm:$0xff]
      %v1711 = vld [vmem:[%s7 + $0x48] sm:$0xff]
      %v1712 = vld [vmem:[%s7 + $0x50] sm:$0xff]
      %v1713 = vld [vmem:[%s7 + $0x58] sm:$0xff]
      %v1714 = vld [vmem:[%s7 + $0x60] sm:$0xff]
      %v1715 = vld [vmem:[%s7 + $0x68] sm:$0xff]
      %v1716 = vld [vmem:[%s7 + $0x70] sm:$0xff]
      %v1717 = vld [vmem:[%s7 + $0x78] sm:$0xff]
      %v1718 = vld [vmem:[%s7 + $0x80] sm:$0xff]
      %v1719 = vld [vmem:[%s7 + $0x88] sm:$0xff]
      %v1720 = vld [vmem:[%s7 + $0x90] sm:$0xff]
      %v1721 = vld [vmem:[%s7 + $0x98] sm:$0xff]
      %v1722 = vld [vmem:[%s7 + $0xa0] sm:$0xff]
      %v1723 = vld [vmem:[%s7 + $0xa8] sm:$0xff]
      %v1724 = vld [vmem:[%s7 + $0xb0] sm:$0xff]
      %v1725 = vld [vmem:[%s7 + $0xb8] sm:$0xff]
      %v1726 = vld [vmem:[%s7 + $0xc0] sm:$0xff]
      %v1727 = vld [vmem:[%s7 + $0xc8] sm:$0xff]
      %v1728 = vld [vmem:[%s7 + $0xd0] sm:$0xff]
      %v1729 = vld [vmem:[%s7 + $0xd8] sm:$0xff]
      %v1730 = vld [vmem:[%s7 + $0xe0] sm:$0xff]
      %v1731 = vld [vmem:[%s7 + $0xe8] sm:$0xff]
      %v1732 = vld [vmem:[%s7 + $0xf0] sm:$0xff]
      %v1733 = vld [vmem:[%s7 + $0xf8] sm:$0xff]
      %v1734 = vld [vmem:[%s7 + $0x100] sm:$0xff]
      %v1735 = vld [vmem:[%s7 + $0x108] sm:$0xff]
      %v1736 = vld [vmem:[%s7 + $0x110] sm:$0xff]
      %v1737 = vld [vmem:[%s7 + $0x118] sm:$0xff]
      %vm1738 = vcmask 1043456
      %v1739 = vrot.slane %v1672, 4
      %v1740 = vrot.slane %v1673, 4
      %v1741 = vsel %vm1738, %v1739, %v1740
      %1742 = vrot.lane.b32.xlu0 %v1741, 96
      %v1743 = vpop.permute.xlu0 %1742
      %v1744 = vsel %vm759, %v1743, 0
      %1746 = vmatprep.subr.mxu0 %v1703
      %1747 = vmatpush1.msra.mxu0 %v1702
      %1748 = vmatprep.subr.mxu0 %v1706
      %1749 = vmatpush1.msra.mxu0 %v1705
      %1750 = vmatprep.subr.mxu0 %v1709
      %1751 = vmatpush1.msra.mxu0 %v1708
      %1752 = vmatprep.subr.mxu0 %v1712
      %1753 = vmatpush1.msra.mxu0 %v1711
      %1754 = vmatprep.subr.mxu0 %v1715
      %1755 = vmatpush1.msra.mxu0 %v1714
      %1756 = vmatprep.subr.mxu0 %v1718
      %1757 = vmatpush1.msra.mxu0 %v1717
      %1758 = vmatprep.subr.mxu0 %v1721
      %1759 = vmatpush1.msra.mxu0 %v1720
      %1760 = vmatprep.subr.mxu0 %v1724
      %1761 = vmatpush1.msra.mxu0 %v1723
      %1762 = vmatprep.subr.mxu0 %v1727
      %1763 = vmatpush1.msra.mxu0 %v1726
      %1764 = vmatprep.subr.mxu0 %v1730
      %1765 = vmatpush1.msra.mxu0 %v1729
      %1766 = vmatprep.subr.mxu0 %v1733
      %1767 = vmatpush1.msra.mxu0 %v1732
      %1768 = vmatprep.subr.mxu0 %v1736
      %1769 = vmatpush1.msra.mxu0 %v1735
      %1770 = vmatprep.subr.mxu0 0.0
      %1771 = vmatpush1.msra.mxu0 0.0
      %1772 = vmatprep.subr.mxu0 0.0
      %1773 = vmatpush1.msra.mxu0 0.0
      %1774 = vmatprep.subr.mxu0 0.0
      %1775 = vmatpush1.msra.mxu0 0.0
      %1776 = vmatprep.subr.mxu0 0.0
      %1777 = vmatpush1.msra.mxu0 0.0
      %1778 = vmatprep.subr.mxu0 0.0
      %1779 = vmatpush1.msra.mxu0 0.0
      %1780 = vmatprep.subr.mxu0 0.0
      %1781 = vmatpush1.msra.mxu0 0.0
      %1782 = vmatprep.subr.mxu0 0.0
      %1783 = vmatpush1.msra.mxu0 0.0
      %1784 = vmatprep.subr.mxu0 0.0
      %1785 = vmatpush1.msra.mxu0 0.0
      %1786 = vmatprep.subr.mxu0 0.0
      %1787 = vmatpush1.msra.mxu0 0.0
      %1788 = vmatprep.subr.mxu0 0.0
      %1789 = vmatpush1.msra.mxu0 0.0
      %1790 = vmatprep.subr.mxu0 0.0
      %1791 = vmatpush1.msra.mxu0 0.0
      %1792 = vmatprep.subr.mxu0 0.0
      %1793 = vmatpush1.msra.mxu0 0.0
      %1794 = vmatprep.subr.mxu0 0.0
      %1795 = vmatpush1.msra.mxu0 0.0
      %1796 = vmatprep.subr.mxu0 0.0
      %1797 = vmatpush1.msra.mxu0 0.0
      %1798 = vmatprep.subr.mxu0 0.0
      %1799 = vmatpush1.msra.mxu0 0.0
      %1800 = vmatprep.subr.mxu0 0.0
      %1801 = vmatpush1.msra.mxu0 0.0
      %1802 = vmatprep.subr.mxu0 0.0
      %1803 = vmatpush1.msra.mxu0 0.0
      %1804 = vmatprep.subr.mxu0 0.0
      %1805 = vmatpush1.msra.mxu0 0.0
      %1806 = vmatprep.subr.mxu0 0.0
      %1807 = vmatpush1.msra.mxu0 0.0
      %1808 = vmatprep.subr.mxu0 0.0
      %1809 = vmatpush1.msra.mxu0 0.0
      %1810 = vmatprep.mubr.f32.mxu0 0.0
      %1811 = vmatmul.mubr.f32.gmra.mrb[0].mxu0 %v1744
      %v1812 = vpop.f32.mrb[0].mxu0
      %v1813 = vadd.f32 0.0, %v1812
      %v1814 = vpop.f32.mrb[0].mxu0
      %v1815 = vadd.f32 0.0, %v1814
      %1816 = vdwg.mxu0
      %1817 = vmatprep.subr.mxu0 0.0
      %1818 = vmatpush1.msra.mxu0 %v1704
      %1819 = vmatprep.subr.mxu0 0.0
      %1820 = vmatpush1.msra.mxu0 %v1707
      %1821 = vmatprep.subr.mxu0 0.0
      %1822 = vmatpush1.msra.mxu0 %v1710
      %1823 = vmatprep.subr.mxu0 0.0
      %1824 = vmatpush1.msra.mxu0 %v1713
      %1825 = vmatprep.subr.mxu0 0.0
      %1826 = vmatpush1.msra.mxu0 %v1716
      %1827 = vmatprep.subr.mxu0 0.0
      %1828 = vmatpush1.msra.mxu0 %v1719
      %1829 = vmatprep.subr.mxu0 0.0
      %1830 = vmatpush1.msra.mxu0 %v1722
      %1831 = vmatprep.subr.mxu0 0.0
      %1832 = vmatpush1.msra.mxu0 %v1725
      %1833 = vmatprep.subr.mxu0 0.0
      %1834 = vmatpush1.msra.mxu0 %v1728
      %1835 = vmatprep.subr.mxu0 0.0
      %1836 = vmatpush1.msra.mxu0 %v1731
      %1837 = vmatprep.subr.mxu0 0.0
      %1838 = vmatpush1.msra.mxu0 %v1734
      %1839 = vmatprep.subr.mxu0 0.0
      %1840 = vmatpush1.msra.mxu0 %v1737
      %1841 = vmatprep.subr.mxu0 0.0
      %1842 = vmatpush1.msra.mxu0 0.0
      %1843 = vmatprep.subr.mxu0 0.0
      %1844 = vmatpush1.msra.mxu0 0.0
      %1845 = vmatprep.subr.mxu0 0.0
      %1846 = vmatpush1.msra.mxu0 0.0
      %1847 = vmatprep.subr.mxu0 0.0
      %1848 = vmatpush1.msra.mxu0 0.0
      %1849 = vmatprep.subr.mxu0 0.0
      %1850 = vmatpush1.msra.mxu0 0.0
      %1851 = vmatprep.subr.mxu0 0.0
      %1852 = vmatpush1.msra.mxu0 0.0
      %1853 = vmatprep.subr.mxu0 0.0
      %1854 = vmatpush1.msra.mxu0 0.0
      %1855 = vmatprep.subr.mxu0 0.0
      %1856 = vmatpush1.msra.mxu0 0.0
      %1857 = vmatprep.subr.mxu0 0.0
      %1858 = vmatpush1.msra.mxu0 0.0
      %1859 = vmatprep.subr.mxu0 0.0
      %1860 = vmatpush1.msra.mxu0 0.0
      %1861 = vmatprep.subr.mxu0 0.0
      %1862 = vmatpush1.msra.mxu0 0.0
      %1863 = vmatprep.subr.mxu0 0.0
      %1864 = vmatpush1.msra.mxu0 0.0
      %1865 = vmatprep.subr.mxu0 0.0
      %1866 = vmatpush1.msra.mxu0 0.0
      %1867 = vmatprep.subr.mxu0 0.0
      %1868 = vmatpush1.msra.mxu0 0.0
      %1869 = vmatprep.subr.mxu0 0.0
      %1870 = vmatpush1.msra.mxu0 0.0
      %1871 = vmatprep.subr.mxu0 0.0
      %1872 = vmatpush1.msra.mxu0 0.0
      %1873 = vmatprep.subr.mxu0 0.0
      %1874 = vmatpush1.msra.mxu0 0.0
      %1875 = vmatprep.subr.mxu0 0.0
      %1876 = vmatpush1.msra.mxu0 0.0
      %1877 = vmatprep.subr.mxu0 0.0
      %1878 = vmatpush1.msra.mxu0 0.0
      %1879 = vmatprep.subr.mxu0 0.0
      %1880 = vmatpush1.msra.mxu0 0.0
      %1881 = vmatprep.mubr.f32.mxu0 0.0
      %1882 = vmatmul.mubr.f32.gmra.mrb[0].mxu0 %v1744
      %v1883 = vpop.f32.mrb[0].mxu0
      %v1884 = vadd.f32 0.0, %v1883
      %v1885 = vpop.f32.mrb[0].mxu0
      %1886 = vdwg.mxu0
      %v1890 = vrot.slane %v1813, 6
      %v1891 = vrot.slane %v1815, 6
      %v1892 = vrot.slane %v1884, 6
      %v1896 = vadd.f32 %v625, %v1890
      %v1897 = vadd.f32 %v627, %v1891
      %v1898 = vadd.f32 %v712, %v1892
      %v1899 = vld [vmem:[%s8] sm:$0x7]
      %v1901 = vlaneseq
      %v1902 = vshrl.u32 %v1901, 7
      %v1903 = vsub.s32 0, %v1902
      %v1904 = vrot.slane %v1899, %v1903
      %v1905 = vlaneseq
      %v1906 = vshrl.u32 %v1905, 7
      %v1907 = vsub.s32 1, %v1906
      %v1908 = vrot.slane %v1899, %v1907
      %v1909 = vlaneseq
      %v1910 = vshrl.u32 %v1909, 7
      %v1911 = vsub.s32 2, %v1910
      %v1912 = vrot.slane %v1899, %v1911
      %v1916 = vadd.f32 %v1896, %v1904
      %v1917 = vadd.f32 %v1897, %v1908
      %v1918 = vadd.f32 %v1898, %v1912
      %v1919 = vxor.u32 %v1916, 2147483648
      %v1920 = vmul.f32 %v1919, 1.442695
      %v1921 = vpow.pop %v1920
      %v1922 = vadd.f32 %v1921, 1.0
      %v1923 = vrcp.pop %v1922
      %v1924 = vmul.f32 1.0, %v1923
      %v1925 = vxor.u32 %v1917, 2147483648
      %v1926 = vmul.f32 %v1925, 1.442695
      %v1927 = vpow.pop %v1926
      %v1928 = vadd.f32 %v1927, 1.0
      %v1929 = vrcp.pop %v1928
      %v1930 = vmul.f32 1.0, %v1929
      %v1931 = vtanh.pop %v1917
      %v1932 = vtanh.pop %v1918
      %v1933 = vxor.u32 %v1918, 2147483648
      %v1934 = vmul.f32 %v1933, 1.442695
      %v1935 = vpow.pop %v1934
      %v1936 = vadd.f32 %v1935, 1.0
      %v1937 = vrcp.pop %v1936
      %v1938 = vmul.f32 1.0, %v1937
      %v1943 = vrot.slane %v1648, 2
      %v1944 = vrot.slane %v1650, 2
      %v1945 = vsel %vm1607, %v1943, %v1944
      %v1946 = vrot.slane %v1649, 2
      %v1947 = vrot.slane %v1651, 2
      %v1948 = vsel %vm1607, %v1946, %v1947
      %v1951 = vmul.f32 %v1924, %v1945
      %v1952 = vmul.f32 %v1930, %v1948
      %1955 = vrot.lane.b32.xlu0 %v1931, 64
      %v1956 = vpop.permute.xlu0 %1955
      %1957 = vrot.lane.b32.xlu0 %v1932, 64
      %v1958 = vpop.permute.xlu0 %1957
      %v1959 = vsel %vm533, %v1956, %v1958
      %v1961 = vmul.f32 %v1924, %v1959
      %1963 = vrot.lane.b32.xlu0 %v1961, 96
      %v1964 = vpop.permute.xlu0 %1963
      %v1966 = vadd.f32 %v1951, %v1964
      %v1967 = vadd.f32 %v1952, %v1964
      %v1968 = vtanh.pop %v1966
      %v1969 = vtanh.pop %v1967
      %1972 = vrot.lane.b32.xlu0 %v1968, 64
      %v1973 = vpop.permute.xlu0 %1972
      %1974 = vrot.lane.b32.xlu0 %v1969, 64
      %v1975 = vpop.permute.xlu0 %1974
      %v1976 = vsel %vm533, %v1973, %v1975
      %v1978 = vmul.f32 %v1938, %v1976
      %1980 = vrot.lane.b32.xlu0 %v1978, 96
      %v1981 = vpop.permute.xlu0 %1980
      %vm1983 = vcmask 261122
      %1984 = vst.msk [vmem:[#allocation2 + $0x34] sm:$0xfc] %vm1983, %v1981
      %1985 = vrot.lane.b32.xlu0 %v1978, 64
      %v1986 = vpop.permute.xlu0 %1985
      %1988 = vst.msk [vmem:[#allocation2 + $0x3a] sm:$0xfc] %vm1983, %v1986
      %1989 = vrot.lane.b32.xlu0 %v1978, 32
      %v1990 = vpop.permute.xlu0 %1989
      %1992 = vst.msk [vmem:[#allocation2 + $0x40] sm:$0xfc] %vm1983, %v1990
      %v1993 = vld [vmem:[%s7] sm:$0xff]
      %v1994 = vld [vmem:[%s7 + $0x8] sm:$0xff]
      %v1995 = vld [vmem:[%s7 + $0x10] sm:$0xff]
      %v1996 = vld [vmem:[%s7 + $0x18] sm:$0xff]
      %v1997 = vld [vmem:[%s7 + $0x20] sm:$0xff]
      %v1998 = vld [vmem:[%s7 + $0x28] sm:$0xff]
      %v1999 = vld [vmem:[%s7 + $0x30] sm:$0xff]
      %v2000 = vld [vmem:[%s7 + $0x38] sm:$0xff]
      %v2001 = vld [vmem:[%s7 + $0x40] sm:$0xff]
      %v2002 = vld [vmem:[%s7 + $0x48] sm:$0xff]
      %v2003 = vld [vmem:[%s7 + $0x50] sm:$0xff]
      %v2004 = vld [vmem:[%s7 + $0x58] sm:$0xff]
      %v2005 = vld [vmem:[%s7 + $0x60] sm:$0xff]
      %v2006 = vld [vmem:[%s7 + $0x68] sm:$0xff]
      %v2007 = vld [vmem:[%s7 + $0x70] sm:$0xff]
      %v2008 = vld [vmem:[%s7 + $0x78] sm:$0xff]
      %v2009 = vld [vmem:[%s7 + $0x80] sm:$0xff]
      %v2010 = vld [vmem:[%s7 + $0x88] sm:$0xff]
      %v2011 = vld [vmem:[%s7 + $0x90] sm:$0xff]
      %v2012 = vld [vmem:[%s7 + $0x98] sm:$0xff]
      %v2013 = vld [vmem:[%s7 + $0xa0] sm:$0xff]
      %v2014 = vld [vmem:[%s7 + $0xa8] sm:$0xff]
      %v2015 = vld [vmem:[%s7 + $0xb0] sm:$0xff]
      %v2016 = vld [vmem:[%s7 + $0xb8] sm:$0xff]
      %v2017 = vld [vmem:[%s7 + $0xc0] sm:$0xff]
      %v2018 = vld [vmem:[%s7 + $0xc8] sm:$0xff]
      %v2019 = vld [vmem:[%s7 + $0xd0] sm:$0xff]
      %v2020 = vld [vmem:[%s7 + $0xd8] sm:$0xff]
      %v2021 = vld [vmem:[%s7 + $0xe0] sm:$0xff]
      %v2022 = vld [vmem:[%s7 + $0xe8] sm:$0xff]
      %v2023 = vld [vmem:[%s7 + $0xf0] sm:$0xff]
      %v2024 = vld [vmem:[%s7 + $0xf8] sm:$0xff]
      %v2025 = vld [vmem:[%s7 + $0x100] sm:$0xff]
      %v2026 = vld [vmem:[%s7 + $0x108] sm:$0xff]
      %v2027 = vld [vmem:[%s7 + $0x110] sm:$0xff]
      %v2028 = vld [vmem:[%s7 + $0x118] sm:$0xff]
      %v2029 = vrot.slane %v1978, 2
      %2030 = vrot.lane.b32.xlu0 %v2029, 96
      %v2031 = vpop.permute.xlu0 %2030
      %v2032 = vsel %vm759, %v2031, 0
      %2034 = vmatprep.subr.mxu0 %v1994
      %2035 = vmatpush1.msra.mxu0 %v1993
      %2036 = vmatprep.subr.mxu0 %v1997
      %2037 = vmatpush1.msra.mxu0 %v1996
      %2038 = vmatprep.subr.mxu0 %v2000
      %2039 = vmatpush1.msra.mxu0 %v1999
      %2040 = vmatprep.subr.mxu0 %v2003
      %2041 = vmatpush1.msra.mxu0 %v2002
      %2042 = vmatprep.subr.mxu0 %v2006
      %2043 = vmatpush1.msra.mxu0 %v2005
      %2044 = vmatprep.subr.mxu0 %v2009
      %2045 = vmatpush1.msra.mxu0 %v2008
      %2046 = vmatprep.subr.mxu0 %v2012
      %2047 = vmatpush1.msra.mxu0 %v2011
      %2048 = vmatprep.subr.mxu0 %v2015
      %2049 = vmatpush1.msra.mxu0 %v2014
      %2050 = vmatprep.subr.mxu0 %v2018
      %2051 = vmatpush1.msra.mxu0 %v2017
      %2052 = vmatprep.subr.mxu0 %v2021
      %2053 = vmatpush1.msra.mxu0 %v2020
      %2054 = vmatprep.subr.mxu0 %v2024
      %2055 = vmatpush1.msra.mxu0 %v2023
      %2056 = vmatprep.subr.mxu0 %v2027
      %2057 = vmatpush1.msra.mxu0 %v2026
      %2058 = vmatprep.subr.mxu0 0.0
      %2059 = vmatpush1.msra.mxu0 0.0
      %2060 = vmatprep.subr.mxu0 0.0
      %2061 = vmatpush1.msra.mxu0 0.0
      %2062 = vmatprep.subr.mxu0 0.0
      %2063 = vmatpush1.msra.mxu0 0.0
      %2064 = vmatprep.subr.mxu0 0.0
      %2065 = vmatpush1.msra.mxu0 0.0
      %2066 = vmatprep.subr.mxu0 0.0
      %2067 = vmatpush1.msra.mxu0 0.0
      %2068 = vmatprep.subr.mxu0 0.0
      %2069 = vmatpush1.msra.mxu0 0.0
      %2070 = vmatprep.subr.mxu0 0.0
      %2071 = vmatpush1.msra.mxu0 0.0
      %2072 = vmatprep.subr.mxu0 0.0
      %2073 = vmatpush1.msra.mxu0 0.0
      %2074 = vmatprep.subr.mxu0 0.0
      %2075 = vmatpush1.msra.mxu0 0.0
      %2076 = vmatprep.subr.mxu0 0.0
      %2077 = vmatpush1.msra.mxu0 0.0
      %2078 = vmatprep.subr.mxu0 0.0
      %2079 = vmatpush1.msra.mxu0 0.0
      %2080 = vmatprep.subr.mxu0 0.0
      %2081 = vmatpush1.msra.mxu0 0.0
      %2082 = vmatprep.subr.mxu0 0.0
      %2083 = vmatpush1.msra.mxu0 0.0
      %2084 = vmatprep.subr.mxu0 0.0
      %2085 = vmatpush1.msra.mxu0 0.0
      %2086 = vmatprep.subr.mxu0 0.0
      %2087 = vmatpush1.msra.mxu0 0.0
      %2088 = vmatprep.subr.mxu0 0.0
      %2089 = vmatpush1.msra.mxu0 0.0
      %2090 = vmatprep.subr.mxu0 0.0
      %2091 = vmatpush1.msra.mxu0 0.0
      %2092 = vmatprep.subr.mxu0 0.0
      %2093 = vmatpush1.msra.mxu0 0.0
      %2094 = vmatprep.subr.mxu0 0.0
      %2095 = vmatpush1.msra.mxu0 0.0
      %2096 = vmatprep.subr.mxu0 0.0
      %2097 = vmatpush1.msra.mxu0 0.0
      %2098 = vmatprep.mubr.f32.mxu0 0.0
      %2099 = vmatmul.mubr.f32.gmra.mrb[0].mxu0 %v2032
      %v2100 = vpop.f32.mrb[0].mxu0
      %v2101 = vadd.f32 0.0, %v2100
      %v2102 = vpop.f32.mrb[0].mxu0
      %v2103 = vadd.f32 0.0, %v2102
      %2104 = vdwg.mxu0
      %2105 = vmatprep.subr.mxu0 0.0
      %2106 = vmatpush1.msra.mxu0 %v1995
      %2107 = vmatprep.subr.mxu0 0.0
      %2108 = vmatpush1.msra.mxu0 %v1998
      %2109 = vmatprep.subr.mxu0 0.0
      %2110 = vmatpush1.msra.mxu0 %v2001
      %2111 = vmatprep.subr.mxu0 0.0
      %2112 = vmatpush1.msra.mxu0 %v2004
      %2113 = vmatprep.subr.mxu0 0.0
      %2114 = vmatpush1.msra.mxu0 %v2007
      %2115 = vmatprep.subr.mxu0 0.0
      %2116 = vmatpush1.msra.mxu0 %v2010
      %2117 = vmatprep.subr.mxu0 0.0
      %2118 = vmatpush1.msra.mxu0 %v2013
      %2119 = vmatprep.subr.mxu0 0.0
      %2120 = vmatpush1.msra.mxu0 %v2016
      %2121 = vmatprep.subr.mxu0 0.0
      %2122 = vmatpush1.msra.mxu0 %v2019
      %2123 = vmatprep.subr.mxu0 0.0
      %2124 = vmatpush1.msra.mxu0 %v2022
      %2125 = vmatprep.subr.mxu0 0.0
      %2126 = vmatpush1.msra.mxu0 %v2025
      %2127 = vmatprep.subr.mxu0 0.0
      %2128 = vmatpush1.msra.mxu0 %v2028
      %2129 = vmatprep.subr.mxu0 0.0
      %2130 = vmatpush1.msra.mxu0 0.0
      %2131 = vmatprep.subr.mxu0 0.0
      %2132 = vmatpush1.msra.mxu0 0.0
      %2133 = vmatprep.subr.mxu0 0.0
      %2134 = vmatpush1.msra.mxu0 0.0
      %2135 = vmatprep.subr.mxu0 0.0
      %2136 = vmatpush1.msra.mxu0 0.0
      %2137 = vmatprep.subr.mxu0 0.0
      %2138 = vmatpush1.msra.mxu0 0.0
      %2139 = vmatprep.subr.mxu0 0.0
      %2140 = vmatpush1.msra.mxu0 0.0
      %2141 = vmatprep.subr.mxu0 0.0
      %2142 = vmatpush1.msra.mxu0 0.0
      %2143 = vmatprep.subr.mxu0 0.0
      %2144 = vmatpush1.msra.mxu0 0.0
      %2145 = vmatprep.subr.mxu0 0.0
      %2146 = vmatpush1.msra.mxu0 0.0
      %2147 = vmatprep.subr.mxu0 0.0
      %2148 = vmatpush1.msra.mxu0 0.0
      %2149 = vmatprep.subr.mxu0 0.0
      %2150 = vmatpush1.msra.mxu0 0.0
      %2151 = vmatprep.subr.mxu0 0.0
      %2152 = vmatpush1.msra.mxu0 0.0
      %2153 = vmatprep.subr.mxu0 0.0
      %2154 = vmatpush1.msra.mxu0 0.0
      %2155 = vmatprep.subr.mxu0 0.0
      %2156 = vmatpush1.msra.mxu0 0.0
      %2157 = vmatprep.subr.mxu0 0.0
      %2158 = vmatpush1.msra.mxu0 0.0
      %2159 = vmatprep.subr.mxu0 0.0
      %2160 = vmatpush1.msra.mxu0 0.0
      %2161 = vmatprep.subr.mxu0 0.0
      %2162 = vmatpush1.msra.mxu0 0.0
      %2163 = vmatprep.subr.mxu0 0.0
      %2164 = vmatpush1.msra.mxu0 0.0
      %2165 = vmatprep.subr.mxu0 0.0
      %2166 = vmatpush1.msra.mxu0 0.0
      %2167 = vmatprep.subr.mxu0 0.0
      %2168 = vmatpush1.msra.mxu0 0.0
      %2169 = vmatprep.mubr.f32.mxu0 0.0
      %2170 = vmatmul.mubr.f32.gmra.mrb[0].mxu0 %v2032
      %v2171 = vpop.f32.mrb[0].mxu0
      %v2172 = vadd.f32 0.0, %v2171
      %v2173 = vpop.f32.mrb[0].mxu0
      %2174 = vdwg.mxu0
      %v2175 = vadd.f32 %v631, %v2101
      %v2176 = vadd.f32 %v633, %v2103
      %v2177 = vadd.f32 %v717, %v2172
      %v2178 = vld [vmem:[%s8] sm:$0x7]
      %v2180 = vlaneseq
      %v2181 = vshrl.u32 %v2180, 7
      %v2182 = vsub.s32 0, %v2181
      %v2183 = vrot.slane %v2178, %v2182
      %v2184 = vlaneseq
      %v2185 = vshrl.u32 %v2184, 7
      %v2186 = vsub.s32 1, %v2185
      %v2187 = vrot.slane %v2178, %v2186
      %v2188 = vlaneseq
      %v2189 = vshrl.u32 %v2188, 7
      %v2190 = vsub.s32 2, %v2189
      %v2191 = vrot.slane %v2178, %v2190
      %v2195 = vadd.f32 %v2175, %v2183
      %v2196 = vadd.f32 %v2176, %v2187
      %v2197 = vadd.f32 %v2177, %v2191
      %v2198 = vxor.u32 %v2195, 2147483648
      %v2199 = vmul.f32 %v2198, 1.442695
      %v2200 = vpow.pop %v2199
      %v2201 = vadd.f32 %v2200, 1.0
      %v2202 = vrcp.pop %v2201
      %v2203 = vmul.f32 1.0, %v2202
      %v2204 = vxor.u32 %v2196, 2147483648
      %v2205 = vmul.f32 %v2204, 1.442695
      %v2206 = vpow.pop %v2205
      %v2207 = vadd.f32 %v2206, 1.0
      %v2208 = vrcp.pop %v2207
      %v2209 = vmul.f32 1.0, %v2208
      %v2210 = vtanh.pop %v2196
      %v2211 = vtanh.pop %v2197
      %v2212 = vxor.u32 %v2197, 2147483648
      %v2213 = vmul.f32 %v2212, 1.442695
      %v2214 = vpow.pop %v2213
      %v2215 = vadd.f32 %v2214, 1.0
      %v2216 = vrcp.pop %v2215
      %v2217 = vmul.f32 1.0, %v2216
      %v2220 = vrot.slane %v1966, 2
      %v2221 = vrot.slane %v1967, 2
      %v2224 = vmul.f32 %v2203, %v2220
      %v2225 = vmul.f32 %v2209, %v2221
      %2228 = vrot.lane.b32.xlu0 %v2210, 64
      %v2229 = vpop.permute.xlu0 %2228
      %2230 = vrot.lane.b32.xlu0 %v2211, 64
      %v2231 = vpop.permute.xlu0 %2230
      %v2232 = vsel %vm533, %v2229, %v2231
      %v2234 = vmul.f32 %v2203, %v2232
      %2236 = vrot.lane.b32.xlu0 %v2234, 96
      %v2237 = vpop.permute.xlu0 %2236
      %v2239 = vadd.f32 %v2224, %v2237
      %v2240 = vadd.f32 %v2225, %v2237
      %v2241 = vtanh.pop %v2239
      %v2242 = vtanh.pop %v2240
      %2245 = vrot.lane.b32.xlu0 %v2241, 64
      %v2246 = vpop.permute.xlu0 %2245
      %2247 = vrot.lane.b32.xlu0 %v2242, 64
      %v2248 = vpop.permute.xlu0 %2247
      %v2249 = vsel %vm533, %v2246, %v2248
      %v2251 = vmul.f32 %v2217, %v2249
      %2253 = vrot.lane.b32.xlu0 %v2251, 96
      %v2254 = vpop.permute.xlu0 %2253
      %2256 = vst.msk [vmem:[#allocation2 + $0x48] sm:$0x3f] %vm983, %v2254
      %2257 = vrot.lane.b32.xlu0 %v2251, 64
      %v2258 = vpop.permute.xlu0 %2257
      %2260 = vst.msk [vmem:[#allocation2 + $0x4e] sm:$0x3f] %vm983, %v2258
      %2261 = vrot.lane.b32.xlu0 %v2251, 32
      %v2262 = vpop.permute.xlu0 %2261
      %2264 = vst.msk [vmem:[#allocation2 + $0x54] sm:$0x3f] %vm983, %v2262
      %v2265 = vld [vmem:[#allocation2] sm:$0xff]
      %v2266 = vld [vmem:[#allocation2 + $0x8] sm:$0xff]
      %v2267 = vld [vmem:[#allocation2 + $0x10] sm:$0xff]
      %v2268 = vld [vmem:[#allocation2 + $0x18] sm:$0xff]
      %v2269 = vld [vmem:[#allocation2 + $0x20] sm:$0xff]
      %v2270 = vld [vmem:[#allocation2 + $0x28] sm:$0xff]
      %v2271 = vld [vmem:[#allocation2 + $0x30] sm:$0xff]
      %v2272 = vld [vmem:[#allocation2 + $0x38] sm:$0xff]
      %v2273 = vld [vmem:[#allocation2 + $0x40] sm:$0xff]
      %v2274 = vld [vmem:[#allocation2 + $0x48] sm:$0xff]
      %v2275 = vld [vmem:[#allocation2 + $0x50] sm:$0xff]
      %v2276 = vld [vmem:[#allocation2 + $0x58] sm:$0x3]
      %v2277 = vld [vmem:[%s9] sm:$0xff]
      %v2278 = vld [vmem:[%s9 + $0x8] sm:$0xff]
      %v2279 = vld [vmem:[%s9 + $0x10] sm:$0xff]
      %v2280 = vld [vmem:[%s9 + $0x18] sm:$0xff]
      %v2281 = vld [vmem:[%s9 + $0x20] sm:$0xff]
      %v2282 = vld [vmem:[%s9 + $0x28] sm:$0xff]
      %v2283 = vld [vmem:[%s9 + $0x30] sm:$0xff]
      %v2284 = vld [vmem:[%s9 + $0x38] sm:$0xff]
      %v2285 = vld [vmem:[%s9 + $0x40] sm:$0xff]
      %v2286 = vld [vmem:[%s9 + $0x48] sm:$0xff]
      %v2287 = vld [vmem:[%s9 + $0x50] sm:$0xff]
      %v2288 = vld [vmem:[%s9 + $0x58] sm:$0x3]
      %v2289 = vmul.f32 %v2265, %v2277
      %v2290 = vmul.f32 %v2266, %v2278
      %v2291 = vmul.f32 %v2267, %v2279
      %v2292 = vmul.f32 %v2268, %v2280
      %v2293 = vmul.f32 %v2269, %v2281
      %v2294 = vmul.f32 %v2270, %v2282
      %v2295 = vmul.f32 %v2271, %v2283
      %v2296 = vmul.f32 %v2272, %v2284
      %v2297 = vmul.f32 %v2273, %v2285
      %v2298 = vmul.f32 %v2274, %v2286
      %v2299 = vmul.f32 %v2275, %v2287
      %v2300 = vmul.f32 %v2276, %v2288
      %s2301 = scalar_lea.vmem %s9, 96
      %v2302 = vld [vmem:[%s2301] sm:$0xff]
      %v2303 = vld [vmem:[%s2301 + $0x8] sm:$0xff]
      %v2304 = vld [vmem:[%s2301 + $0x10] sm:$0xff]
      %v2305 = vld [vmem:[%s2301 + $0x18] sm:$0xff]
      %v2306 = vld [vmem:[%s2301 + $0x20] sm:$0xff]
      %v2307 = vld [vmem:[%s2301 + $0x28] sm:$0xff]
      %v2308 = vld [vmem:[%s2301 + $0x30] sm:$0xff]
      %v2309 = vld [vmem:[%s2301 + $0x38] sm:$0xff]
      %v2310 = vld [vmem:[%s2301 + $0x40] sm:$0xff]
      %v2311 = vld [vmem:[%s2301 + $0x48] sm:$0xff]
      %v2312 = vld [vmem:[%s2301 + $0x50] sm:$0xff]
      %v2313 = vld [vmem:[%s2301 + $0x58] sm:$0x3]
      %v2314 = vadd.f32 %v2289, %v2302
      %v2315 = vadd.f32 %v2290, %v2303
      %v2316 = vadd.f32 %v2291, %v2304
      %v2317 = vadd.f32 %v2292, %v2305
      %v2318 = vadd.f32 %v2293, %v2306
      %v2319 = vadd.f32 %v2294, %v2307
      %v2320 = vadd.f32 %v2295, %v2308
      %v2321 = vadd.f32 %v2296, %v2309
      %v2322 = vadd.f32 %v2297, %v2310
      %v2323 = vadd.f32 %v2298, %v2311
      %v2324 = vadd.f32 %v2299, %v2312
      %v2325 = vadd.f32 %v2300, %v2313
      %v2326 = vtanh.pop %v2314
      %v2327 = vtanh.pop %v2315
      %v2328 = vtanh.pop %v2316
      %v2329 = vtanh.pop %v2317
      %v2330 = vtanh.pop %v2318
      %v2331 = vtanh.pop %v2319
      %v2332 = vtanh.pop %v2320
      %v2333 = vtanh.pop %v2321
      %v2334 = vtanh.pop %v2322
      %v2335 = vtanh.pop %v2323
      %v2336 = vtanh.pop %v2324
      %v2337 = vtanh.pop %v2325
      %v2338 = vld [vmem:[%s491] sm:$0xff]
      %v2339 = vld [vmem:[%s491 + $0x8] sm:$0xff]
      %v2340 = vld [vmem:[%s491 + $0x10] sm:$0xff]
      %v2341 = vld [vmem:[%s491 + $0x18] sm:$0xff]
      %v2342 = vld [vmem:[%s494] sm:$0x1]
      %v2344 = vlaneseq
      %v2345 = vshrl.u32 %v2344, 7
      %v2346 = vsub.s32 0, %v2345
      %v2347 = vrot.slane %v2342, %v2346
      %vm2349 = vcmask 261120
      %v2351 = vsel %vm2349, %v2326, 0
      %v2354 = vsel %vm2349, %v2327, 0
      %v2357 = vsel %vm2349, %v2328, 0
      %v2360 = vsel %vm2349, %v2329, 0
      %v2363 = vsel %vm2349, %v2330, 0
      %v2366 = vsel %vm2349, %v2331, 0
      %v2369 = vsel %vm2349, %v2332, 0
      %v2372 = vsel %vm2349, %v2333, 0
      %v2375 = vsel %vm2349, %v2334, 0
      %v2378 = vsel %vm2349, %v2335, 0
      %v2381 = vsel %vm2349, %v2336, 0
      %v2384 = vsel %vm2349, %v2337, 0
      %2386 = vmatprep.subr.mxu0 0.0
      %2387 = vmatpush1.msra.mxu0 %v2338
      %2388 = vmatprep.subr.mxu0 0.0
      %2389 = vmatpush1.msra.mxu0 %v2339
      %2390 = vmatprep.subr.mxu0 0.0
      %2391 = vmatpush1.msra.mxu0 %v2340
      %2392 = vmatprep.subr.mxu0 0.0
      %2393 = vmatpush1.msra.mxu0 %v2341
      %2394 = vmatprep.subr.mxu0 0.0
      %2395 = vmatpush1.msra.mxu0 0.0
      %2396 = vmatprep.subr.mxu0 0.0
      %2397 = vmatpush1.msra.mxu0 0.0
      %2398 = vmatprep.subr.mxu0 0.0
      %2399 = vmatpush1.msra.mxu0 0.0
      %2400 = vmatprep.subr.mxu0 0.0
      %2401 = vmatpush1.msra.mxu0 0.0
      %2402 = vmatprep.subr.mxu0 0.0
      %2403 = vmatpush1.msra.mxu0 0.0
      %2404 = vmatprep.subr.mxu0 0.0
      %2405 = vmatpush1.msra.mxu0 0.0
      %2406 = vmatprep.subr.mxu0 0.0
      %2407 = vmatpush1.msra.mxu0 0.0
      %2408 = vmatprep.subr.mxu0 0.0
      %2409 = vmatpush1.msra.mxu0 0.0
      %2410 = vmatprep.subr.mxu0 0.0
      %2411 = vmatpush1.msra.mxu0 0.0
      %2412 = vmatprep.subr.mxu0 0.0
      %2413 = vmatpush1.msra.mxu0 0.0
      %2414 = vmatprep.subr.mxu0 0.0
      %2415 = vmatpush1.msra.mxu0 0.0
      %2416 = vmatprep.subr.mxu0 0.0
      %2417 = vmatpush1.msra.mxu0 0.0
      %2418 = vmatprep.subr.mxu0 0.0
      %2419 = vmatpush1.msra.mxu0 0.0
      %2420 = vmatprep.subr.mxu0 0.0
      %2421 = vmatpush1.msra.mxu0 0.0
      %2422 = vmatprep.subr.mxu0 0.0
      %2423 = vmatpush1.msra.mxu0 0.0
      %2424 = vmatprep.subr.mxu0 0.0
      %2425 = vmatpush1.msra.mxu0 0.0
      %2426 = vmatprep.subr.mxu0 0.0
      %2427 = vmatpush1.msra.mxu0 0.0
      %2428 = vmatprep.subr.mxu0 0.0
      %2429 = vmatpush1.msra.mxu0 0.0
      %2430 = vmatprep.subr.mxu0 0.0
      %2431 = vmatpush1.msra.mxu0 0.0
      %2432 = vmatprep.subr.mxu0 0.0
      %2433 = vmatpush1.msra.mxu0 0.0
      %2434 = vmatprep.subr.mxu0 0.0
      %2435 = vmatpush1.msra.mxu0 0.0
      %2436 = vmatprep.subr.mxu0 0.0
      %2437 = vmatpush1.msra.mxu0 0.0
      %2438 = vmatprep.subr.mxu0 0.0
      %2439 = vmatpush1.msra.mxu0 0.0
      %2440 = vmatprep.subr.mxu0 0.0
      %2441 = vmatpush1.msra.mxu0 0.0
      %2442 = vmatprep.subr.mxu0 0.0
      %2443 = vmatpush1.msra.mxu0 0.0
      %2444 = vmatprep.subr.mxu0 0.0
      %2445 = vmatpush1.msra.mxu0 0.0
      %2446 = vmatprep.subr.mxu0 0.0
      %2447 = vmatpush1.msra.mxu0 0.0
      %2448 = vmatprep.subr.mxu0 0.0
      %2449 = vmatpush1.msra.mxu0 0.0
      %2450 = vmatprep.mubr.f32.mxu0 0.0
      %2451 = vmatmul.mubr.f32.gmra.mrb[0].mxu0 %v2351
      %v2452 = vpop.f32.mrb[0].mxu0
      %v2453 = vadd.f32 %v2347, %v2452
      %v2454 = vpop.f32.mrb[0].mxu0
      %2455 = vmatprep.mubr.f32.mxu0 0.0
      %2456 = vmatmul.mubr.f32.gmra.mrb[0].mxu0 %v2354
      %v2457 = vpop.f32.mrb[0].mxu0
      %v2458 = vadd.f32 %v2347, %v2457
      %v2459 = vpop.f32.mrb[0].mxu0
      %2460 = vmatprep.mubr.f32.mxu0 0.0
      %2461 = vmatmul.mubr.f32.gmra.mrb[0].mxu0 %v2357
      %v2462 = vpop.f32.mrb[0].mxu0
      %v2463 = vadd.f32 %v2347, %v2462
      %v2464 = vpop.f32.mrb[0].mxu0
      %2465 = vmatprep.mubr.f32.mxu0 0.0
      %2466 = vmatmul.mubr.f32.gmra.mrb[0].mxu0 %v2360
      %v2467 = vpop.f32.mrb[0].mxu0
      %v2468 = vadd.f32 %v2347, %v2467
      %v2469 = vpop.f32.mrb[0].mxu0
      %2470 = vmatprep.mubr.f32.mxu0 0.0
      %2471 = vmatmul.mubr.f32.gmra.mrb[0].mxu0 %v2363
      %v2472 = vpop.f32.mrb[0].mxu0
      %v2473 = vadd.f32 %v2347, %v2472
      %v2474 = vpop.f32.mrb[0].mxu0
      %2475 = vmatprep.mubr.f32.mxu0 0.0
      %2476 = vmatmul.mubr.f32.gmra.mrb[0].mxu0 %v2366
      %v2477 = vpop.f32.mrb[0].mxu0
      %v2478 = vadd.f32 %v2347, %v2477
      %v2479 = vpop.f32.mrb[0].mxu0
      %2480 = vmatprep.mubr.f32.mxu0 0.0
      %2481 = vmatmul.mubr.f32.gmra.mrb[0].mxu0 %v2369
      %v2482 = vpop.f32.mrb[0].mxu0
      %v2483 = vadd.f32 %v2347, %v2482
      %v2484 = vpop.f32.mrb[0].mxu0
      %2485 = vmatprep.mubr.f32.mxu0 0.0
      %2486 = vmatmul.mubr.f32.gmra.mrb[0].mxu0 %v2372
      %v2487 = vpop.f32.mrb[0].mxu0
      %v2488 = vadd.f32 %v2347, %v2487
      %v2489 = vpop.f32.mrb[0].mxu0
      %2490 = vmatprep.mubr.f32.mxu0 0.0
      %2491 = vmatmul.mubr.f32.gmra.mrb[0].mxu0 %v2375
      %v2492 = vpop.f32.mrb[0].mxu0
      %v2493 = vadd.f32 %v2347, %v2492
      %v2494 = vpop.f32.mrb[0].mxu0
      %2495 = vmatprep.mubr.f32.mxu0 0.0
      %2496 = vmatmul.mubr.f32.gmra.mrb[0].mxu0 %v2378
      %v2497 = vpop.f32.mrb[0].mxu0
      %v2498 = vadd.f32 %v2347, %v2497
      %v2499 = vpop.f32.mrb[0].mxu0
      %2500 = vmatprep.mubr.f32.mxu0 0.0
      %2501 = vmatmul.mubr.f32.gmra.mrb[0].mxu0 %v2381
      %v2502 = vpop.f32.mrb[0].mxu0
      %v2503 = vadd.f32 %v2347, %v2502
      %v2504 = vpop.f32.mrb[0].mxu0
      %2505 = vmatprep.mubr.f32.mxu0 0.0
      %2506 = vmatmul.mubr.f32.gmra.mrb[0].mxu0 %v2384
      %v2507 = vpop.f32.mrb[0].mxu0
      %v2508 = vadd.f32 %v2347, %v2507
      %v2509 = vpop.f32.mrb[0].mxu0
      %2510 = vdwg.mxu0
      %vm2511 = vcmask 39936
      %v2512 = vsel %vm2511, %v2453, -inf
      %2513 = vmax.xlane.f32.xlu0 %v2512
      %v2514 = vpop.xlane.xlu0 %2513
      %v2515 = vsel %vm2511, %v2458, -inf
      %2516 = vmax.xlane.f32.xlu0 %v2515
      %v2517 = vpop.xlane.xlu0 %2516
      %v2518 = vsel %vm2511, %v2463, -inf
      %2519 = vmax.xlane.f32.xlu0 %v2518
      %v2520 = vpop.xlane.xlu0 %2519
      %v2521 = vsel %vm2511, %v2468, -inf
      %2522 = vmax.xlane.f32.xlu0 %v2521
      %v2523 = vpop.xlane.xlu0 %2522
      %v2524 = vsel %vm2511, %v2473, -inf
      %2525 = vmax.xlane.f32.xlu0 %v2524
      %v2526 = vpop.xlane.xlu0 %2525
      %v2527 = vsel %vm2511, %v2478, -inf
      %2528 = vmax.xlane.f32.xlu0 %v2527
      %v2529 = vpop.xlane.xlu0 %2528
      %v2530 = vsel %vm2511, %v2483, -inf
      %2531 = vmax.xlane.f32.xlu0 %v2530
      %v2532 = vpop.xlane.xlu0 %2531
      %v2533 = vsel %vm2511, %v2488, -inf
      %2534 = vmax.xlane.f32.xlu0 %v2533
      %v2535 = vpop.xlane.xlu0 %2534
      %v2536 = vsel %vm2511, %v2493, -inf
      %2537 = vmax.xlane.f32.xlu0 %v2536
      %v2538 = vpop.xlane.xlu0 %2537
      %v2539 = vsel %vm2511, %v2498, -inf
      %2540 = vmax.xlane.f32.xlu0 %v2539
      %v2541 = vpop.xlane.xlu0 %2540
      %v2542 = vsel %vm2511, %v2503, -inf
      %2543 = vmax.xlane.f32.xlu0 %v2542
      %v2544 = vpop.xlane.xlu0 %2543
      %vm2545 = vcmask 33792
      %v2546 = vsel %vm2545, %v2508, -inf
      %2547 = vmax.xlane.f32.xlu0 %v2546
      %v2548 = vpop.xlane.xlu0 %2547
      %v2549 = vsub.f32 %v2453, %v2514
      %v2550 = vsub.f32 %v2458, %v2517
      %v2551 = vsub.f32 %v2463, %v2520
      %v2552 = vsub.f32 %v2468, %v2523
      %v2553 = vsub.f32 %v2473, %v2526
      %v2554 = vsub.f32 %v2478, %v2529
      %v2555 = vsub.f32 %v2483, %v2532
      %v2556 = vsub.f32 %v2488, %v2535
      %v2557 = vsub.f32 %v2493, %v2538
      %v2558 = vsub.f32 %v2498, %v2541
      %v2559 = vsub.f32 %v2503, %v2544
      %v2560 = vsub.f32 %v2508, %v2548
      %v2561 = vmul.f32 %v2549, 1.442695
      %v2562 = vpow.pop %v2561
      %v2563 = vmul.f32 %v2550, 1.442695
      %v2564 = vpow.pop %v2563
      %v2565 = vmul.f32 %v2551, 1.442695
      %v2566 = vpow.pop %v2565
      %v2567 = vmul.f32 %v2552, 1.442695
      %v2568 = vpow.pop %v2567
      %v2569 = vmul.f32 %v2553, 1.442695
      %v2570 = vpow.pop %v2569
      %v2571 = vmul.f32 %v2554, 1.442695
      %v2572 = vpow.pop %v2571
      %v2573 = vmul.f32 %v2555, 1.442695
      %v2574 = vpow.pop %v2573
      %v2575 = vmul.f32 %v2556, 1.442695
      %v2576 = vpow.pop %v2575
      %v2577 = vmul.f32 %v2557, 1.442695
      %v2578 = vpow.pop %v2577
      %v2579 = vmul.f32 %v2558, 1.442695
      %v2580 = vpow.pop %v2579
      %v2581 = vmul.f32 %v2559, 1.442695
      %v2582 = vpow.pop %v2581
      %v2583 = vmul.f32 %v2560, 1.442695
      %v2584 = vpow.pop %v2583
      %v2585 = vsel %vm2511, %v2562, 0.0
      %2586 = vadd.xlane.f32.xlu0 %v2585
      %v2587 = vpop.xlane.xlu0 %2586
      %v2588 = vsel %vm2511, %v2564, 0.0
      %2589 = vadd.xlane.f32.xlu0 %v2588
      %v2590 = vpop.xlane.xlu0 %2589
      %v2591 = vsel %vm2511, %v2566, 0.0
      %2592 = vadd.xlane.f32.xlu0 %v2591
      %v2593 = vpop.xlane.xlu0 %2592
      %v2594 = vsel %vm2511, %v2568, 0.0
      %2595 = vadd.xlane.f32.xlu0 %v2594
      %v2596 = vpop.xlane.xlu0 %2595
      %v2597 = vsel %vm2511, %v2570, 0.0
      %2598 = vadd.xlane.f32.xlu0 %v2597
      %v2599 = vpop.xlane.xlu0 %2598
      %v2600 = vsel %vm2511, %v2572, 0.0
      %2601 = vadd.xlane.f32.xlu0 %v2600
      %v2602 = vpop.xlane.xlu0 %2601
      %v2603 = vsel %vm2511, %v2574, 0.0
      %2604 = vadd.xlane.f32.xlu0 %v2603
      %v2605 = vpop.xlane.xlu0 %2604
      %v2606 = vsel %vm2511, %v2576, 0.0
      %2607 = vadd.xlane.f32.xlu0 %v2606
      %v2608 = vpop.xlane.xlu0 %2607
      %v2609 = vsel %vm2511, %v2578, 0.0
      %2610 = vadd.xlane.f32.xlu0 %v2609
      %v2611 = vpop.xlane.xlu0 %2610
      %v2612 = vsel %vm2511, %v2580, 0.0
      %2613 = vadd.xlane.f32.xlu0 %v2612
      %v2614 = vpop.xlane.xlu0 %2613
      %v2615 = vsel %vm2511, %v2582, 0.0
      %2616 = vadd.xlane.f32.xlu0 %v2615
      %v2617 = vpop.xlane.xlu0 %2616
      %v2618 = vsel %vm2545, %v2584, 0.0
      %2619 = vadd.xlane.f32.xlu0 %v2618
      %v2620 = vpop.xlane.xlu0 %2619
      %v2621 = vrcp.pop %v2587
      %v2622 = vrcp.pop %v2590
      %v2623 = vrcp.pop %v2593
      %v2624 = vrcp.pop %v2596
      %v2625 = vrcp.pop %v2599
      %v2626 = vrcp.pop %v2602
      %v2627 = vrcp.pop %v2605
      %v2628 = vrcp.pop %v2608
      %v2629 = vrcp.pop %v2611
      %v2630 = vrcp.pop %v2614
      %v2631 = vrcp.pop %v2617
      %v2632 = vrcp.pop %v2620
      %v2633 = vmul.f32 %v2562, %v2621
      %v2634 = vmul.f32 %v2564, %v2622
      %v2635 = vmul.f32 %v2566, %v2623
      %v2636 = vmul.f32 %v2568, %v2624
      %v2637 = vmul.f32 %v2570, %v2625
      %v2638 = vmul.f32 %v2572, %v2626
      %v2639 = vmul.f32 %v2574, %v2627
      %v2640 = vmul.f32 %v2576, %v2628
      %v2641 = vmul.f32 %v2578, %v2629
      %v2642 = vmul.f32 %v2580, %v2630
      %v2643 = vmul.f32 %v2582, %v2631
      %v2644 = vmul.f32 %v2584, %v2632
      %v2645 = vld [vmem:[%s486] sm:$0x1f]
      %v2647 = vsel %vm2511, %v2633, 0
      %v2650 = vsel %vm2511, %v2634, 0
      %v2653 = vsel %vm2511, %v2635, 0
      %v2656 = vsel %vm2511, %v2636, 0
      %v2659 = vsel %vm2511, %v2637, 0
      %v2662 = vsel %vm2511, %v2638, 0
      %v2665 = vsel %vm2511, %v2639, 0
      %v2668 = vsel %vm2511, %v2640, 0
      %v2671 = vsel %vm2511, %v2641, 0
      %v2674 = vsel %vm2511, %v2642, 0
      %v2677 = vsel %vm2511, %v2643, 0
      %v2680 = vsel %vm2511, %v2644, 0
      %vm2682 = vcmask 1044480
      %v2684 = vsel %vm2682, %v2645, 0
      %2686 = vmatprep.subr.mxu0 0.0
      %2687 = vmatpush1.msra.mxu0 %v2684
      %2688 = vmatprep.subr.mxu0 0.0
      %2689 = vmatpush1.msra.mxu0 0.0
      %2690 = vmatprep.subr.mxu0 0.0
      %2691 = vmatpush1.msra.mxu0 0.0
      %2692 = vmatprep.subr.mxu0 0.0
      %2693 = vmatpush1.msra.mxu0 0.0
      %2694 = vmatprep.subr.mxu0 0.0
      %2695 = vmatpush1.msra.mxu0 0.0
      %2696 = vmatprep.subr.mxu0 0.0
      %2697 = vmatpush1.msra.mxu0 0.0
      %2698 = vmatprep.subr.mxu0 0.0
      %2699 = vmatpush1.msra.mxu0 0.0
      %2700 = vmatprep.subr.mxu0 0.0
      %2701 = vmatpush1.msra.mxu0 0.0
      %2702 = vmatprep.subr.mxu0 0.0
      %2703 = vmatpush1.msra.mxu0 0.0
      %2704 = vmatprep.subr.mxu0 0.0
      %2705 = vmatpush1.msra.mxu0 0.0
      %2706 = vmatprep.subr.mxu0 0.0
      %2707 = vmatpush1.msra.mxu0 0.0
      %2708 = vmatprep.subr.mxu0 0.0
      %2709 = vmatpush1.msra.mxu0 0.0
      %2710 = vmatprep.subr.mxu0 0.0
      %2711 = vmatpush1.msra.mxu0 0.0
      %2712 = vmatprep.subr.mxu0 0.0
      %2713 = vmatpush1.msra.mxu0 0.0
      %2714 = vmatprep.subr.mxu0 0.0
      %2715 = vmatpush1.msra.mxu0 0.0
      %2716 = vmatprep.subr.mxu0 0.0
      %2717 = vmatpush1.msra.mxu0 0.0
      %2718 = vmatprep.subr.mxu0 0.0
      %2719 = vmatpush1.msra.mxu0 0.0
      %2720 = vmatprep.subr.mxu0 0.0
      %2721 = vmatpush1.msra.mxu0 0.0
      %2722 = vmatprep.subr.mxu0 0.0
      %2723 = vmatpush1.msra.mxu0 0.0
      %2724 = vmatprep.subr.mxu0 0.0
      %2725 = vmatpush1.msra.mxu0 0.0
      %2726 = vmatprep.subr.mxu0 0.0
      %2727 = vmatpush1.msra.mxu0 0.0
      %2728 = vmatprep.subr.mxu0 0.0
      %2729 = vmatpush1.msra.mxu0 0.0
      %2730 = vmatprep.subr.mxu0 0.0
      %2731 = vmatpush1.msra.mxu0 0.0
      %2732 = vmatprep.subr.mxu0 0.0
      %2733 = vmatpush1.msra.mxu0 0.0
      %2734 = vmatprep.subr.mxu0 0.0
      %2735 = vmatpush1.msra.mxu0 0.0
      %2736 = vmatprep.subr.mxu0 0.0
      %2737 = vmatpush1.msra.mxu0 0.0
      %2738 = vmatprep.subr.mxu0 0.0
      %2739 = vmatpush1.msra.mxu0 0.0
      %2740 = vmatprep.subr.mxu0 0.0
      %2741 = vmatpush1.msra.mxu0 0.0
      %2742 = vmatprep.subr.mxu0 0.0
      %2743 = vmatpush1.msra.mxu0 0.0
      %2744 = vmatprep.subr.mxu0 0.0
      %2745 = vmatpush1.msra.mxu0 0.0
      %2746 = vmatprep.subr.mxu0 0.0
      %2747 = vmatpush1.msra.mxu0 0.0
      %2748 = vmatprep.subr.mxu0 0.0
      %2749 = vmatpush1.msra.mxu0 0.0
      %2750 = vmatprep.mubr.f32.mxu0 0.0
      %2751 = vmatmul.mubr.f32.gmra.mrb[0].mxu0 %v2647
      %v2752 = vpop.f32.mrb[0].mxu0
      %v2753 = vadd.f32 0.0, %v2752
      %v2754 = vpop.f32.mrb[0].mxu0
      %2755 = vmatprep.mubr.f32.mxu0 0.0
      %2756 = vmatmul.mubr.f32.gmra.mrb[0].mxu0 %v2650
      %v2757 = vpop.f32.mrb[0].mxu0
      %v2758 = vadd.f32 0.0, %v2757
      %v2759 = vpop.f32.mrb[0].mxu0
      %2760 = vmatprep.mubr.f32.mxu0 0.0
      %2761 = vmatmul.mubr.f32.gmra.mrb[0].mxu0 %v2653
      %v2762 = vpop.f32.mrb[0].mxu0
      %v2763 = vadd.f32 0.0, %v2762
      %v2764 = vpop.f32.mrb[0].mxu0
      %2765 = vmatprep.mubr.f32.mxu0 0.0
      %2766 = vmatmul.mubr.f32.gmra.mrb[0].mxu0 %v2656
      %v2767 = vpop.f32.mrb[0].mxu0
      %v2768 = vadd.f32 0.0, %v2767
      %v2769 = vpop.f32.mrb[0].mxu0
      %2770 = vmatprep.mubr.f32.mxu0 0.0
      %2771 = vmatmul.mubr.f32.gmra.mrb[0].mxu0 %v2659
      %v2772 = vpop.f32.mrb[0].mxu0
      %v2773 = vadd.f32 0.0, %v2772
      %v2774 = vpop.f32.mrb[0].mxu0
      %2775 = vmatprep.mubr.f32.mxu0 0.0
      %2776 = vmatmul.mubr.f32.gmra.mrb[0].mxu0 %v2662
      %v2777 = vpop.f32.mrb[0].mxu0
      %v2778 = vadd.f32 0.0, %v2777
      %v2779 = vpop.f32.mrb[0].mxu0
      %2780 = vmatprep.mubr.f32.mxu0 0.0
      %2781 = vmatmul.mubr.f32.gmra.mrb[0].mxu0 %v2665
      %v2782 = vpop.f32.mrb[0].mxu0
      %v2783 = vadd.f32 0.0, %v2782
      %v2784 = vpop.f32.mrb[0].mxu0
      %2785 = vmatprep.mubr.f32.mxu0 0.0
      %2786 = vmatmul.mubr.f32.gmra.mrb[0].mxu0 %v2668
      %v2787 = vpop.f32.mrb[0].mxu0
      %v2788 = vadd.f32 0.0, %v2787
      %v2789 = vpop.f32.mrb[0].mxu0
      %2790 = vmatprep.mubr.f32.mxu0 0.0
      %2791 = vmatmul.mubr.f32.gmra.mrb[0].mxu0 %v2671
      %v2792 = vpop.f32.mrb[0].mxu0
      %v2793 = vadd.f32 0.0, %v2792
      %v2794 = vpop.f32.mrb[0].mxu0
      %2795 = vmatprep.mubr.f32.mxu0 0.0
      %2796 = vmatmul.mubr.f32.gmra.mrb[0].mxu0 %v2674
      %v2797 = vpop.f32.mrb[0].mxu0
      %v2798 = vadd.f32 0.0, %v2797
      %v2799 = vpop.f32.mrb[0].mxu0
      %2800 = vmatprep.mubr.f32.mxu0 0.0
      %2801 = vmatmul.mubr.f32.gmra.mrb[0].mxu0 %v2677
      %v2802 = vpop.f32.mrb[0].mxu0
      %v2803 = vadd.f32 0.0, %v2802
      %v2804 = vpop.f32.mrb[0].mxu0
      %2805 = vmatprep.mubr.f32.mxu0 0.0
      %2806 = vmatmul.mubr.f32.gmra.mrb[0].mxu0 %v2680
      %v2807 = vpop.f32.mrb[0].mxu0
      %v2808 = vadd.f32 0.0, %v2807
      %v2809 = vpop.f32.mrb[0].mxu0
      %2810 = vdwg.mxu0
      %s2811 = scalar_lea.vmem %s9, 192
      %v2812 = vld [vmem:[%s2811] sm:$0xff]
      %v2813 = vld [vmem:[%s2811 + $0x8] sm:$0xff]
      %v2814 = vld [vmem:[%s2811 + $0x10] sm:$0xff]
      %v2815 = vld [vmem:[%s2811 + $0x18] sm:$0xff]
      %v2816 = vld [vmem:[%s2811 + $0x20] sm:$0xff]
      %v2817 = vld [vmem:[%s2811 + $0x28] sm:$0xff]
      %v2818 = vld [vmem:[%s2811 + $0x30] sm:$0xff]
      %v2819 = vld [vmem:[%s2811 + $0x38] sm:$0xff]
      %v2820 = vld [vmem:[%s2811 + $0x40] sm:$0xff]
      %v2821 = vld [vmem:[%s2811 + $0x48] sm:$0xff]
      %v2822 = vld [vmem:[%s2811 + $0x50] sm:$0xff]
      %v2823 = vld [vmem:[%s2811 + $0x58] sm:$0x3]
      %v2824 = vmul.f32 %v2265, %v2812
      %v2825 = vmul.f32 %v2266, %v2813
      %v2826 = vmul.f32 %v2267, %v2814
      %v2827 = vmul.f32 %v2268, %v2815
      %v2828 = vmul.f32 %v2269, %v2816
      %v2829 = vmul.f32 %v2270, %v2817
      %v2830 = vmul.f32 %v2271, %v2818
      %v2831 = vmul.f32 %v2272, %v2819
      %v2832 = vmul.f32 %v2273, %v2820
      %v2833 = vmul.f32 %v2274, %v2821
      %v2834 = vmul.f32 %v2275, %v2822
      %v2835 = vmul.f32 %v2276, %v2823
      %s2836 = scalar_lea.vmem %s9, 288
      %v2837 = vld [vmem:[%s2836] sm:$0xff]
      %v2838 = vld [vmem:[%s2836 + $0x8] sm:$0xff]
      %v2839 = vld [vmem:[%s2836 + $0x10] sm:$0xff]
      %v2840 = vld [vmem:[%s2836 + $0x18] sm:$0xff]
      %v2841 = vld [vmem:[%s2836 + $0x20] sm:$0xff]
      %v2842 = vld [vmem:[%s2836 + $0x28] sm:$0xff]
      %v2843 = vld [vmem:[%s2836 + $0x30] sm:$0xff]
      %v2844 = vld [vmem:[%s2836 + $0x38] sm:$0xff]
      %v2845 = vld [vmem:[%s2836 + $0x40] sm:$0xff]
      %v2846 = vld [vmem:[%s2836 + $0x48] sm:$0xff]
      %v2847 = vld [vmem:[%s2836 + $0x50] sm:$0xff]
      %v2848 = vld [vmem:[%s2836 + $0x58] sm:$0x3]
      %v2849 = vadd.f32 %v2824, %v2837
      %v2850 = vadd.f32 %v2825, %v2838
      %v2851 = vadd.f32 %v2826, %v2839
      %v2852 = vadd.f32 %v2827, %v2840
      %v2853 = vadd.f32 %v2828, %v2841
      %v2854 = vadd.f32 %v2829, %v2842
      %v2855 = vadd.f32 %v2830, %v2843
      %v2856 = vadd.f32 %v2831, %v2844
      %v2857 = vadd.f32 %v2832, %v2845
      %v2858 = vadd.f32 %v2833, %v2846
      %v2859 = vadd.f32 %v2834, %v2847
      %v2860 = vadd.f32 %v2835, %v2848
      %v2861 = vtanh.pop %v2849
      %v2862 = vtanh.pop %v2850
      %v2863 = vtanh.pop %v2851
      %v2864 = vtanh.pop %v2852
      %v2865 = vtanh.pop %v2853
      %v2866 = vtanh.pop %v2854
      %v2867 = vtanh.pop %v2855
      %v2868 = vtanh.pop %v2856
      %v2869 = vtanh.pop %v2857
      %v2870 = vtanh.pop %v2858
      %v2871 = vtanh.pop %v2859
      %v2872 = vtanh.pop %v2860
      %v2873 = vld [vmem:[%s10] sm:$0xff]
      %v2874 = vld [vmem:[%s10 + $0x8] sm:$0xff]
      %v2875 = vld [vmem:[%s10 + $0x10] sm:$0xff]
      %v2876 = vld [vmem:[%s10 + $0x18] sm:$0xff]
      %s2877 = scalar_lea.vmem %s9, 384
      %v2878 = vld [vmem:[%s2877] sm:$0xff]
      %v2879 = vld [vmem:[%s2877 + $0x8] sm:$0xff]
      %v2880 = vld [vmem:[%s2877 + $0x10] sm:$0xff]
      %v2881 = vld [vmem:[%s2877 + $0x18] sm:$0xff]
      %v2882 = vld [vmem:[%s2877 + $0x20] sm:$0xff]
      %v2883 = vld [vmem:[%s2877 + $0x28] sm:$0xff]
      %v2884 = vld [vmem:[%s2877 + $0x30] sm:$0xff]
      %v2885 = vld [vmem:[%s2877 + $0x38] sm:$0xff]
      %v2886 = vld [vmem:[%s2877 + $0x40] sm:$0xff]
      %v2887 = vld [vmem:[%s2877 + $0x48] sm:$0xff]
      %v2888 = vld [vmem:[%s2877 + $0x50] sm:$0xff]
      %v2889 = vld [vmem:[%s2877 + $0x58] sm:$0x3]
      %v2890 = vmul.f32 %v2753, %v2878
      %v2891 = vmul.f32 %v2758, %v2879
      %v2892 = vmul.f32 %v2763, %v2880
      %v2893 = vmul.f32 %v2768, %v2881
      %v2894 = vmul.f32 %v2773, %v2882
      %v2895 = vmul.f32 %v2778, %v2883
      %v2896 = vmul.f32 %v2783, %v2884
      %v2897 = vmul.f32 %v2788, %v2885
      %v2898 = vmul.f32 %v2793, %v2886
      %v2899 = vmul.f32 %v2798, %v2887
      %v2900 = vmul.f32 %v2803, %v2888
      %v2901 = vmul.f32 %v2808, %v2889
      %s2902 = scalar_lea.vmem %s9, 480
      %v2903 = vld [vmem:[%s2902] sm:$0xff]
      %v2904 = vld [vmem:[%s2902 + $0x8] sm:$0xff]
      %v2905 = vld [vmem:[%s2902 + $0x10] sm:$0xff]
      %v2906 = vld [vmem:[%s2902 + $0x18] sm:$0xff]
      %v2907 = vld [vmem:[%s2902 + $0x20] sm:$0xff]
      %v2908 = vld [vmem:[%s2902 + $0x28] sm:$0xff]
      %v2909 = vld [vmem:[%s2902 + $0x30] sm:$0xff]
      %v2910 = vld [vmem:[%s2902 + $0x38] sm:$0xff]
      %v2911 = vld [vmem:[%s2902 + $0x40] sm:$0xff]
      %v2912 = vld [vmem:[%s2902 + $0x48] sm:$0xff]
      %v2913 = vld [vmem:[%s2902 + $0x50] sm:$0xff]
      %v2914 = vld [vmem:[%s2902 + $0x58] sm:$0x3]
      %v2915 = vadd.f32 %v2890, %v2903
      %v2916 = vadd.f32 %v2891, %v2904
      %v2917 = vadd.f32 %v2892, %v2905
      %v2918 = vadd.f32 %v2893, %v2906
      %v2919 = vadd.f32 %v2894, %v2907
      %v2920 = vadd.f32 %v2895, %v2908
      %v2921 = vadd.f32 %v2896, %v2909
      %v2922 = vadd.f32 %v2897, %v2910
      %v2923 = vadd.f32 %v2898, %v2911
      %v2924 = vadd.f32 %v2899, %v2912
      %v2925 = vadd.f32 %v2900, %v2913
      %v2926 = vadd.f32 %v2901, %v2914
      %v2927 = vtanh.pop %v2915
      %v2928 = vtanh.pop %v2916
      %v2929 = vtanh.pop %v2917
      %v2930 = vtanh.pop %v2918
      %v2931 = vtanh.pop %v2919
      %v2932 = vtanh.pop %v2920
      %v2933 = vtanh.pop %v2921
      %v2934 = vtanh.pop %v2922
      %v2935 = vtanh.pop %v2923
      %v2936 = vtanh.pop %v2924
      %v2937 = vtanh.pop %v2925
      %v2938 = vtanh.pop %v2926
      %s2939 = scalar_lea.vmem %s10, 32
      %v2940 = vld [vmem:[%s2939] sm:$0xff]
      %v2941 = vld [vmem:[%s2939 + $0x8] sm:$0xff]
      %v2942 = vld [vmem:[%s2939 + $0x10] sm:$0xff]
      %v2943 = vld [vmem:[%s2939 + $0x18] sm:$0xff]
      %v2945 = vsel %vm2349, %v2927, 0
      %v2948 = vsel %vm2349, %v2928, 0
      %v2951 = vsel %vm2349, %v2929, 0
      %v2954 = vsel %vm2349, %v2930, 0
      %v2957 = vsel %vm2349, %v2931, 0
      %v2960 = vsel %vm2349, %v2932, 0
      %v2963 = vsel %vm2349, %v2933, 0
      %v2966 = vsel %vm2349, %v2934, 0
      %v2969 = vsel %vm2349, %v2935, 0
      %v2972 = vsel %vm2349, %v2936, 0
      %v2975 = vsel %vm2349, %v2937, 0
      %v2978 = vsel %vm2349, %v2938, 0
      %2980 = vmatprep.subr.mxu0 0.0
      %2981 = vmatpush1.msra.mxu0 %v2940
      %2982 = vmatprep.subr.mxu0 0.0
      %2983 = vmatpush1.msra.mxu0 %v2941
      %2984 = vmatprep.subr.mxu0 0.0
      %2985 = vmatpush1.msra.mxu0 %v2942
      %2986 = vmatprep.subr.mxu0 0.0
      %2987 = vmatpush1.msra.mxu0 %v2943
      %2988 = vmatprep.subr.mxu0 0.0
      %2989 = vmatpush1.msra.mxu0 0.0
      %2990 = vmatprep.subr.mxu0 0.0
      %2991 = vmatpush1.msra.mxu0 0.0
      %2992 = vmatprep.subr.mxu0 0.0
      %2993 = vmatpush1.msra.mxu0 0.0
      %2994 = vmatprep.subr.mxu0 0.0
      %2995 = vmatpush1.msra.mxu0 0.0
      %2996 = vmatprep.subr.mxu0 0.0
      %2997 = vmatpush1.msra.mxu0 0.0
      %2998 = vmatprep.subr.mxu0 0.0
      %2999 = vmatpush1.msra.mxu0 0.0
      %3000 = vmatprep.subr.mxu0 0.0
      %3001 = vmatpush1.msra.mxu0 0.0
      %3002 = vmatprep.subr.mxu0 0.0
      %3003 = vmatpush1.msra.mxu0 0.0
      %3004 = vmatprep.subr.mxu0 0.0
      %3005 = vmatpush1.msra.mxu0 0.0
      %3006 = vmatprep.subr.mxu0 0.0
      %3007 = vmatpush1.msra.mxu0 0.0
      %3008 = vmatprep.subr.mxu0 0.0
      %3009 = vmatpush1.msra.mxu0 0.0
      %3010 = vmatprep.subr.mxu0 0.0
      %3011 = vmatpush1.msra.mxu0 0.0
      %3012 = vmatprep.subr.mxu0 0.0
      %3013 = vmatpush1.msra.mxu0 0.0
      %3014 = vmatprep.subr.mxu0 0.0
      %3015 = vmatpush1.msra.mxu0 0.0
      %3016 = vmatprep.subr.mxu0 0.0
      %3017 = vmatpush1.msra.mxu0 0.0
      %3018 = vmatprep.subr.mxu0 0.0
      %3019 = vmatpush1.msra.mxu0 0.0
      %3020 = vmatprep.subr.mxu0 0.0
      %3021 = vmatpush1.msra.mxu0 0.0
      %3022 = vmatprep.subr.mxu0 0.0
      %3023 = vmatpush1.msra.mxu0 0.0
      %3024 = vmatprep.subr.mxu0 0.0
      %3025 = vmatpush1.msra.mxu0 0.0
      %3026 = vmatprep.subr.mxu0 0.0
      %3027 = vmatpush1.msra.mxu0 0.0
      %3028 = vmatprep.subr.mxu0 0.0
      %3029 = vmatpush1.msra.mxu0 0.0
      %3030 = vmatprep.subr.mxu0 0.0
      %3031 = vmatpush1.msra.mxu0 0.0
      %3032 = vmatprep.subr.mxu0 0.0
      %3033 = vmatpush1.msra.mxu0 0.0
      %3034 = vmatprep.subr.mxu0 0.0
      %3035 = vmatpush1.msra.mxu0 0.0
      %3036 = vmatprep.subr.mxu0 0.0
      %3037 = vmatpush1.msra.mxu0 0.0
      %3038 = vmatprep.subr.mxu0 0.0
      %3039 = vmatpush1.msra.mxu0 0.0
      %3040 = vmatprep.subr.mxu0 0.0
      %3041 = vmatpush1.msra.mxu0 0.0
      %3042 = vmatprep.subr.mxu0 0.0
      %3043 = vmatpush1.msra.mxu0 0.0
      %3044 = vmatprep.mubr.f32.mxu0 0.0
      %3045 = vmatmul.mubr.f32.gmra.mrb[0].mxu0 %v2945
      %v3046 = vpop.f32.mrb[0].mxu0
      %v3047 = vadd.f32 0.0, %v3046
      %v3048 = vpop.f32.mrb[0].mxu0
      %3049 = vmatprep.mubr.f32.mxu0 0.0
      %3050 = vmatmul.mubr.f32.gmra.mrb[0].mxu0 %v2948
      %v3051 = vpop.f32.mrb[0].mxu0
      %v3052 = vadd.f32 0.0, %v3051
      %v3053 = vpop.f32.mrb[0].mxu0
      %3054 = vmatprep.mubr.f32.mxu0 0.0
      %3055 = vmatmul.mubr.f32.gmra.mrb[0].mxu0 %v2951
      %v3056 = vpop.f32.mrb[0].mxu0
      %v3057 = vadd.f32 0.0, %v3056
      %v3058 = vpop.f32.mrb[0].mxu0
      %3059 = vmatprep.mubr.f32.mxu0 0.0
      %3060 = vmatmul.mubr.f32.gmra.mrb[0].mxu0 %v2954
      %v3061 = vpop.f32.mrb[0].mxu0
      %v3062 = vadd.f32 0.0, %v3061
      %v3063 = vpop.f32.mrb[0].mxu0
      %3064 = vmatprep.mubr.f32.mxu0 0.0
      %3065 = vmatmul.mubr.f32.gmra.mrb[0].mxu0 %v2957
      %v3066 = vpop.f32.mrb[0].mxu0
      %v3067 = vadd.f32 0.0, %v3066
      %v3068 = vpop.f32.mrb[0].mxu0
      %3069 = vmatprep.mubr.f32.mxu0 0.0
      %3070 = vmatmul.mubr.f32.gmra.mrb[0].mxu0 %v2960
      %v3071 = vpop.f32.mrb[0].mxu0
      %v3072 = vadd.f32 0.0, %v3071
      %v3073 = vpop.f32.mrb[0].mxu0
      %3074 = vmatprep.mubr.f32.mxu0 0.0
      %3075 = vmatmul.mubr.f32.gmra.mrb[0].mxu0 %v2963
      %v3076 = vpop.f32.mrb[0].mxu0
      %v3077 = vadd.f32 0.0, %v3076
      %v3078 = vpop.f32.mrb[0].mxu0
      %3079 = vmatprep.mubr.f32.mxu0 0.0
      %3080 = vmatmul.mubr.f32.gmra.mrb[0].mxu0 %v2966
      %v3081 = vpop.f32.mrb[0].mxu0
      %v3082 = vadd.f32 0.0, %v3081
      %v3083 = vpop.f32.mrb[0].mxu0
      %3084 = vmatprep.mubr.f32.mxu0 0.0
      %3085 = vmatmul.mubr.f32.gmra.mrb[0].mxu0 %v2969
      %v3086 = vpop.f32.mrb[0].mxu0
      %v3087 = vadd.f32 0.0, %v3086
      %v3088 = vpop.f32.mrb[0].mxu0
      %3089 = vmatprep.mubr.f32.mxu0 0.0
      %3090 = vmatmul.mubr.f32.gmra.mrb[0].mxu0 %v2972
      %v3091 = vpop.f32.mrb[0].mxu0
      %v3092 = vadd.f32 0.0, %v3091
      %v3093 = vpop.f32.mrb[0].mxu0
      %3094 = vmatprep.mubr.f32.mxu0 0.0
      %3095 = vmatmul.mubr.f32.gmra.mrb[0].mxu0 %v2975
      %v3096 = vpop.f32.mrb[0].mxu0
      %v3097 = vadd.f32 0.0, %v3096
      %v3098 = vpop.f32.mrb[0].mxu0
      %3099 = vmatprep.mubr.f32.mxu0 0.0
      %3100 = vmatmul.mubr.f32.gmra.mrb[0].mxu0 %v2978
      %v3101 = vpop.f32.mrb[0].mxu0
      %v3102 = vadd.f32 0.0, %v3101
      %v3103 = vpop.f32.mrb[0].mxu0
      %3104 = vdwg.mxu0
      %v3106 = vsel %vm2349, %v2861, 0
      %v3109 = vsel %vm2349, %v2862, 0
      %v3112 = vsel %vm2349, %v2863, 0
      %v3115 = vsel %vm2349, %v2864, 0
      %v3118 = vsel %vm2349, %v2865, 0
      %v3121 = vsel %vm2349, %v2866, 0
      %v3124 = vsel %vm2349, %v2867, 0
      %v3127 = vsel %vm2349, %v2868, 0
      %v3130 = vsel %vm2349, %v2869, 0
      %v3133 = vsel %vm2349, %v2870, 0
      %v3136 = vsel %vm2349, %v2871, 0
      %v3139 = vsel %vm2349, %v2872, 0
      %3141 = vmatprep.subr.mxu0 0.0
      %3142 = vmatpush1.msra.mxu0 %v2873
      %3143 = vmatprep.subr.mxu0 0.0
      %3144 = vmatpush1.msra.mxu0 %v2874
      %3145 = vmatprep.subr.mxu0 0.0
      %3146 = vmatpush1.msra.mxu0 %v2875
      %3147 = vmatprep.subr.mxu0 0.0
      %3148 = vmatpush1.msra.mxu0 %v2876
      %3149 = vmatprep.subr.mxu0 0.0
      %3150 = vmatpush1.msra.mxu0 0.0
      %3151 = vmatprep.subr.mxu0 0.0
      %3152 = vmatpush1.msra.mxu0 0.0
      %3153 = vmatprep.subr.mxu0 0.0
      %3154 = vmatpush1.msra.mxu0 0.0
      %3155 = vmatprep.subr.mxu0 0.0
      %3156 = vmatpush1.msra.mxu0 0.0
      %3157 = vmatprep.subr.mxu0 0.0
      %3158 = vmatpush1.msra.mxu0 0.0
      %3159 = vmatprep.subr.mxu0 0.0
      %3160 = vmatpush1.msra.mxu0 0.0
      %3161 = vmatprep.subr.mxu0 0.0
      %3162 = vmatpush1.msra.mxu0 0.0
      %3163 = vmatprep.subr.mxu0 0.0
      %3164 = vmatpush1.msra.mxu0 0.0
      %3165 = vmatprep.subr.mxu0 0.0
      %3166 = vmatpush1.msra.mxu0 0.0
      %3167 = vmatprep.subr.mxu0 0.0
      %3168 = vmatpush1.msra.mxu0 0.0
      %3169 = vmatprep.subr.mxu0 0.0
      %3170 = vmatpush1.msra.mxu0 0.0
      %3171 = vmatprep.subr.mxu0 0.0
      %3172 = vmatpush1.msra.mxu0 0.0
      %3173 = vmatprep.subr.mxu0 0.0
      %3174 = vmatpush1.msra.mxu0 0.0
      %3175 = vmatprep.subr.mxu0 0.0
      %3176 = vmatpush1.msra.mxu0 0.0
      %3177 = vmatprep.subr.mxu0 0.0
      %3178 = vmatpush1.msra.mxu0 0.0
      %3179 = vmatprep.subr.mxu0 0.0
      %3180 = vmatpush1.msra.mxu0 0.0
      %3181 = vmatprep.subr.mxu0 0.0
      %3182 = vmatpush1.msra.mxu0 0.0
      %3183 = vmatprep.subr.mxu0 0.0
      %3184 = vmatpush1.msra.mxu0 0.0
      %3185 = vmatprep.subr.mxu0 0.0
      %3186 = vmatpush1.msra.mxu0 0.0
      %3187 = vmatprep.subr.mxu0 0.0
      %3188 = vmatpush1.msra.mxu0 0.0
      %3189 = vmatprep.subr.mxu0 0.0
      %3190 = vmatpush1.msra.mxu0 0.0
      %3191 = vmatprep.subr.mxu0 0.0
      %3192 = vmatpush1.msra.mxu0 0.0
      %3193 = vmatprep.subr.mxu0 0.0
      %3194 = vmatpush1.msra.mxu0 0.0
      %3195 = vmatprep.subr.mxu0 0.0
      %3196 = vmatpush1.msra.mxu0 0.0
      %3197 = vmatprep.subr.mxu0 0.0
      %3198 = vmatpush1.msra.mxu0 0.0
      %3199 = vmatprep.subr.mxu0 0.0
      %3200 = vmatpush1.msra.mxu0 0.0
      %3201 = vmatprep.subr.mxu0 0.0
      %3202 = vmatpush1.msra.mxu0 0.0
      %3203 = vmatprep.subr.mxu0 0.0
      %3204 = vmatpush1.msra.mxu0 0.0
      %3205 = vmatprep.mubr.f32.mxu0 0.0
      %3206 = vmatmul.mubr.f32.gmra.mrb[0].mxu0 %v3106
      %v3207 = vpop.f32.mrb[0].mxu0
      %v3208 = vadd.f32 %v3047, %v3207
      %v3209 = vpop.f32.mrb[0].mxu0
      %3210 = vmatprep.mubr.f32.mxu0 0.0
      %3211 = vmatmul.mubr.f32.gmra.mrb[0].mxu0 %v3109
      %v3212 = vpop.f32.mrb[0].mxu0
      %v3213 = vadd.f32 %v3052, %v3212
      %v3214 = vpop.f32.mrb[0].mxu0
      %3215 = vmatprep.mubr.f32.mxu0 0.0
      %3216 = vmatmul.mubr.f32.gmra.mrb[0].mxu0 %v3112
      %v3217 = vpop.f32.mrb[0].mxu0
      %v3218 = vadd.f32 %v3057, %v3217
      %v3219 = vpop.f32.mrb[0].mxu0
      %3220 = vmatprep.mubr.f32.mxu0 0.0
      %3221 = vmatmul.mubr.f32.gmra.mrb[0].mxu0 %v3115
      %v3222 = vpop.f32.mrb[0].mxu0
      %v3223 = vadd.f32 %v3062, %v3222
      %v3224 = vpop.f32.mrb[0].mxu0
      %3225 = vmatprep.mubr.f32.mxu0 0.0
      %3226 = vmatmul.mubr.f32.gmra.mrb[0].mxu0 %v3118
      %v3227 = vpop.f32.mrb[0].mxu0
      %v3228 = vadd.f32 %v3067, %v3227
      %v3229 = vpop.f32.mrb[0].mxu0
      %3230 = vmatprep.mubr.f32.mxu0 0.0
      %3231 = vmatmul.mubr.f32.gmra.mrb[0].mxu0 %v3121
      %v3232 = vpop.f32.mrb[0].mxu0
      %v3233 = vadd.f32 %v3072, %v3232
      %v3234 = vpop.f32.mrb[0].mxu0
      %3235 = vmatprep.mubr.f32.mxu0 0.0
      %3236 = vmatmul.mubr.f32.gmra.mrb[0].mxu0 %v3124
      %v3237 = vpop.f32.mrb[0].mxu0
      %v3238 = vadd.f32 %v3077, %v3237
      %v3239 = vpop.f32.mrb[0].mxu0
      %3240 = vmatprep.mubr.f32.mxu0 0.0
      %3241 = vmatmul.mubr.f32.gmra.mrb[0].mxu0 %v3127
      %v3242 = vpop.f32.mrb[0].mxu0
      %v3243 = vadd.f32 %v3082, %v3242
      %v3244 = vpop.f32.mrb[0].mxu0
      %3245 = vmatprep.mubr.f32.mxu0 0.0
      %3246 = vmatmul.mubr.f32.gmra.mrb[0].mxu0 %v3130
      %v3247 = vpop.f32.mrb[0].mxu0
      %v3248 = vadd.f32 %v3087, %v3247
      %v3249 = vpop.f32.mrb[0].mxu0
      %3250 = vmatprep.mubr.f32.mxu0 0.0
      %3251 = vmatmul.mubr.f32.gmra.mrb[0].mxu0 %v3133
      %v3252 = vpop.f32.mrb[0].mxu0
      %v3253 = vadd.f32 %v3092, %v3252
      %v3254 = vpop.f32.mrb[0].mxu0
      %3255 = vmatprep.mubr.f32.mxu0 0.0
      %3256 = vmatmul.mubr.f32.gmra.mrb[0].mxu0 %v3136
      %v3257 = vpop.f32.mrb[0].mxu0
      %v3258 = vadd.f32 %v3097, %v3257
      %v3259 = vpop.f32.mrb[0].mxu0
      %3260 = vmatprep.mubr.f32.mxu0 0.0
      %3261 = vmatmul.mubr.f32.gmra.mrb[0].mxu0 %v3139
      %v3262 = vpop.f32.mrb[0].mxu0
      %v3263 = vadd.f32 %v3102, %v3262
      %v3264 = vpop.f32.mrb[0].mxu0
      %3265 = vdwg.mxu0
      %v3266 = vld [vmem:[%s11] sm:$0x1]
      %v3268 = vlaneseq
      %v3269 = vshrl.u32 %v3268, 7
      %v3270 = vsub.s32 0, %v3269
      %v3271 = vrot.slane %v3266, %v3270
      %v3273 = vadd.f32 %v3208, %v3271
      %v3274 = vadd.f32 %v3213, %v3271
      %v3275 = vadd.f32 %v3218, %v3271
      %v3276 = vadd.f32 %v3223, %v3271
      %v3277 = vadd.f32 %v3228, %v3271
      %v3278 = vadd.f32 %v3233, %v3271
      %v3279 = vadd.f32 %v3238, %v3271
      %v3280 = vadd.f32 %v3243, %v3271
      %v3281 = vadd.f32 %v3248, %v3271
      %v3282 = vadd.f32 %v3253, %v3271
      %v3283 = vadd.f32 %v3258, %v3271
      %v3284 = vadd.f32 %v3263, %v3271
      %vm3285 = vcmask 171008
      %v3286 = vsel %vm3285, %v3273, -inf
      %3287 = vmax.xlane.f32.xlu0 %v3286
      %v3288 = vpop.xlane.xlu0 %3287
      %v3289 = vsel %vm3285, %v3274, -inf
      %3290 = vmax.xlane.f32.xlu0 %v3289
      %v3291 = vpop.xlane.xlu0 %3290
      %v3292 = vsel %vm3285, %v3275, -inf
      %3293 = vmax.xlane.f32.xlu0 %v3292
      %v3294 = vpop.xlane.xlu0 %3293
      %v3295 = vsel %vm3285, %v3276, -inf
      %3296 = vmax.xlane.f32.xlu0 %v3295
      %v3297 = vpop.xlane.xlu0 %3296
      %v3298 = vsel %vm3285, %v3277, -inf
      %3299 = vmax.xlane.f32.xlu0 %v3298
      %v3300 = vpop.xlane.xlu0 %3299
      %v3301 = vsel %vm3285, %v3278, -inf
      %3302 = vmax.xlane.f32.xlu0 %v3301
      %v3303 = vpop.xlane.xlu0 %3302
      %v3304 = vsel %vm3285, %v3279, -inf
      %3305 = vmax.xlane.f32.xlu0 %v3304
      %v3306 = vpop.xlane.xlu0 %3305
      %v3307 = vsel %vm3285, %v3280, -inf
      %3308 = vmax.xlane.f32.xlu0 %v3307
      %v3309 = vpop.xlane.xlu0 %3308
      %v3310 = vsel %vm3285, %v3281, -inf
      %3311 = vmax.xlane.f32.xlu0 %v3310
      %v3312 = vpop.xlane.xlu0 %3311
      %v3313 = vsel %vm3285, %v3282, -inf
      %3314 = vmax.xlane.f32.xlu0 %v3313
      %v3315 = vpop.xlane.xlu0 %3314
      %v3316 = vsel %vm3285, %v3283, -inf
      %3317 = vmax.xlane.f32.xlu0 %v3316
      %v3318 = vpop.xlane.xlu0 %3317
      %vm3319 = vcmask 164864
      %v3320 = vsel %vm3319, %v3284, -inf
      %3321 = vmax.xlane.f32.xlu0 %v3320
      %v3322 = vpop.xlane.xlu0 %3321
      %v3323 = vmax.f32 %v3288, %v2514
      %v3324 = vmax.f32 %v3291, %v2517
      %v3325 = vmax.f32 %v3294, %v2520
      %v3326 = vmax.f32 %v3297, %v2523
      %v3327 = vmax.f32 %v3300, %v2526
      %v3328 = vmax.f32 %v3303, %v2529
      %v3329 = vmax.f32 %v3306, %v2532
      %v3330 = vmax.f32 %v3309, %v2535
      %v3331 = vmax.f32 %v3312, %v2538
      %v3332 = vmax.f32 %v3315, %v2541
      %v3333 = vmax.f32 %v3318, %v2544
      %v3334 = vmax.f32 %v3322, %v2548
      %v3335 = vsub.f32 %v3273, %v3323
      %v3336 = vsub.f32 %v3274, %v3324
      %v3337 = vsub.f32 %v3275, %v3325
      %v3338 = vsub.f32 %v3276, %v3326
      %v3339 = vsub.f32 %v3277, %v3327
      %v3340 = vsub.f32 %v3278, %v3328
      %v3341 = vsub.f32 %v3279, %v3329
      %v3342 = vsub.f32 %v3280, %v3330
      %v3343 = vsub.f32 %v3281, %v3331
      %v3344 = vsub.f32 %v3282, %v3332
      %v3345 = vsub.f32 %v3283, %v3333
      %v3346 = vsub.f32 %v3284, %v3334
      %v3347 = vmul.f32 %v3335, 1.442695
      %v3348 = vpow.pop %v3347
      %v3349 = vmul.f32 %v3336, 1.442695
      %v3350 = vpow.pop %v3349
      %v3351 = vmul.f32 %v3337, 1.442695
      %v3352 = vpow.pop %v3351
      %v3353 = vmul.f32 %v3338, 1.442695
      %v3354 = vpow.pop %v3353
      %v3355 = vmul.f32 %v3339, 1.442695
      %v3356 = vpow.pop %v3355
      %v3357 = vmul.f32 %v3340, 1.442695
      %v3358 = vpow.pop %v3357
      %v3359 = vmul.f32 %v3341, 1.442695
      %v3360 = vpow.pop %v3359
      %v3361 = vmul.f32 %v3342, 1.442695
      %v3362 = vpow.pop %v3361
      %v3363 = vmul.f32 %v3343, 1.442695
      %v3364 = vpow.pop %v3363
      %v3365 = vmul.f32 %v3344, 1.442695
      %v3366 = vpow.pop %v3365
      %v3367 = vmul.f32 %v3345, 1.442695
      %v3368 = vpow.pop %v3367
      %v3369 = vmul.f32 %v3346, 1.442695
      %v3370 = vpow.pop %v3369
      %v3371 = vsel %vm3285, %v3348, 0.0
      %3372 = vadd.xlane.f32.xlu0 %v3371
      %v3373 = vpop.xlane.xlu0 %3372
      %v3374 = vsel %vm3285, %v3350, 0.0
      %3375 = vadd.xlane.f32.xlu0 %v3374
      %v3376 = vpop.xlane.xlu0 %3375
      %v3377 = vsel %vm3285, %v3352, 0.0
      %3378 = vadd.xlane.f32.xlu0 %v3377
      %v3379 = vpop.xlane.xlu0 %3378
      %v3380 = vsel %vm3285, %v3354, 0.0
      %3381 = vadd.xlane.f32.xlu0 %v3380
      %v3382 = vpop.xlane.xlu0 %3381
      %v3383 = vsel %vm3285, %v3356, 0.0
      %3384 = vadd.xlane.f32.xlu0 %v3383
      %v3385 = vpop.xlane.xlu0 %3384
      %v3386 = vsel %vm3285, %v3358, 0.0
      %3387 = vadd.xlane.f32.xlu0 %v3386
      %v3388 = vpop.xlane.xlu0 %3387
      %v3389 = vsel %vm3285, %v3360, 0.0
      %3390 = vadd.xlane.f32.xlu0 %v3389
      %v3391 = vpop.xlane.xlu0 %3390
      %v3392 = vsel %vm3285, %v3362, 0.0
      %3393 = vadd.xlane.f32.xlu0 %v3392
      %v3394 = vpop.xlane.xlu0 %3393
      %v3395 = vsel %vm3285, %v3364, 0.0
      %3396 = vadd.xlane.f32.xlu0 %v3395
      %v3397 = vpop.xlane.xlu0 %3396
      %v3398 = vsel %vm3285, %v3366, 0.0
      %3399 = vadd.xlane.f32.xlu0 %v3398
      %v3400 = vpop.xlane.xlu0 %3399
      %v3401 = vsel %vm3285, %v3368, 0.0
      %3402 = vadd.xlane.f32.xlu0 %v3401
      %v3403 = vpop.xlane.xlu0 %3402
      %v3404 = vsel %vm3319, %v3370, 0.0
      %3405 = vadd.xlane.f32.xlu0 %v3404
      %v3406 = vpop.xlane.xlu0 %3405
      %v3407 = vsub.f32 %v2453, %v3323
      %v3408 = vsub.f32 %v2458, %v3324
      %v3409 = vsub.f32 %v2463, %v3325
      %v3410 = vsub.f32 %v2468, %v3326
      %v3411 = vsub.f32 %v2473, %v3327
      %v3412 = vsub.f32 %v2478, %v3328
      %v3413 = vsub.f32 %v2483, %v3329
      %v3414 = vsub.f32 %v2488, %v3330
      %v3415 = vsub.f32 %v2493, %v3331
      %v3416 = vsub.f32 %v2498, %v3332
      %v3417 = vsub.f32 %v2503, %v3333
      %v3418 = vsub.f32 %v2508, %v3334
      %v3419 = vmul.f32 %v3407, 1.442695
      %v3420 = vpow.pop %v3419
      %v3421 = vmul.f32 %v3408, 1.442695
      %v3422 = vpow.pop %v3421
      %v3423 = vmul.f32 %v3409, 1.442695
      %v3424 = vpow.pop %v3423
      %v3425 = vmul.f32 %v3410, 1.442695
      %v3426 = vpow.pop %v3425
      %v3427 = vmul.f32 %v3411, 1.442695
      %v3428 = vpow.pop %v3427
      %v3429 = vmul.f32 %v3412, 1.442695
      %v3430 = vpow.pop %v3429
      %v3431 = vmul.f32 %v3413, 1.442695
      %v3432 = vpow.pop %v3431
      %v3433 = vmul.f32 %v3414, 1.442695
      %v3434 = vpow.pop %v3433
      %v3435 = vmul.f32 %v3415, 1.442695
      %v3436 = vpow.pop %v3435
      %v3437 = vmul.f32 %v3416, 1.442695
      %v3438 = vpow.pop %v3437
      %v3439 = vmul.f32 %v3417, 1.442695
      %v3440 = vpow.pop %v3439
      %v3441 = vmul.f32 %v3418, 1.442695
      %v3442 = vpow.pop %v3441
      %v3443 = vsel %vm2511, %v3420, 0.0
      %3444 = vadd.xlane.f32.xlu0 %v3443
      %v3445 = vpop.xlane.xlu0 %3444
      %v3446 = vsel %vm2511, %v3422, 0.0
      %3447 = vadd.xlane.f32.xlu0 %v3446
      %v3448 = vpop.xlane.xlu0 %3447
      %v3449 = vsel %vm2511, %v3424, 0.0
      %3450 = vadd.xlane.f32.xlu0 %v3449
      %v3451 = vpop.xlane.xlu0 %3450
      %v3452 = vsel %vm2511, %v3426, 0.0
      %3453 = vadd.xlane.f32.xlu0 %v3452
      %v3454 = vpop.xlane.xlu0 %3453
      %v3455 = vsel %vm2511, %v3428, 0.0
      %3456 = vadd.xlane.f32.xlu0 %v3455
      %v3457 = vpop.xlane.xlu0 %3456
      %v3458 = vsel %vm2511, %v3430, 0.0
      %3459 = vadd.xlane.f32.xlu0 %v3458
      %v3460 = vpop.xlane.xlu0 %3459
      %v3461 = vsel %vm2511, %v3432, 0.0
      %3462 = vadd.xlane.f32.xlu0 %v3461
      %v3463 = vpop.xlane.xlu0 %3462
      %v3464 = vsel %vm2511, %v3434, 0.0
      %3465 = vadd.xlane.f32.xlu0 %v3464
      %v3466 = vpop.xlane.xlu0 %3465
      %v3467 = vsel %vm2511, %v3436, 0.0
      %3468 = vadd.xlane.f32.xlu0 %v3467
      %v3469 = vpop.xlane.xlu0 %3468
      %v3470 = vsel %vm2511, %v3438, 0.0
      %3471 = vadd.xlane.f32.xlu0 %v3470
      %v3472 = vpop.xlane.xlu0 %3471
      %v3473 = vsel %vm2511, %v3440, 0.0
      %3474 = vadd.xlane.f32.xlu0 %v3473
      %v3475 = vpop.xlane.xlu0 %3474
      %v3476 = vsel %vm2545, %v3442, 0.0
      %3477 = vadd.xlane.f32.xlu0 %v3476
      %v3478 = vpop.xlane.xlu0 %3477
      %v3479 = vadd.f32 %v3373, %v3445
      %v3480 = vadd.f32 %v3376, %v3448
      %v3481 = vadd.f32 %v3379, %v3451
      %v3482 = vadd.f32 %v3382, %v3454
      %v3483 = vadd.f32 %v3385, %v3457
      %v3484 = vadd.f32 %v3388, %v3460
      %v3485 = vadd.f32 %v3391, %v3463
      %v3486 = vadd.f32 %v3394, %v3466
      %v3487 = vadd.f32 %v3397, %v3469
      %v3488 = vadd.f32 %v3400, %v3472
      %v3489 = vadd.f32 %v3403, %v3475
      %v3490 = vadd.f32 %v3406, %v3478
      %v3491 = vlog2.pop %v3479
      %v3492 = vmul.f32 %v3491, 0.6931472
      %v3493 = vlog2.pop %v3480
      %v3494 = vmul.f32 %v3493, 0.6931472
      %v3495 = vlog2.pop %v3481
      %v3496 = vmul.f32 %v3495, 0.6931472
      %v3497 = vlog2.pop %v3482
      %v3498 = vmul.f32 %v3497, 0.6931472
      %v3499 = vlog2.pop %v3483
      %v3500 = vmul.f32 %v3499, 0.6931472
      %v3501 = vlog2.pop %v3484
      %v3502 = vmul.f32 %v3501, 0.6931472
      %v3503 = vlog2.pop %v3485
      %v3504 = vmul.f32 %v3503, 0.6931472
      %v3505 = vlog2.pop %v3486
      %v3506 = vmul.f32 %v3505, 0.6931472
      %v3507 = vlog2.pop %v3487
      %v3508 = vmul.f32 %v3507, 0.6931472
      %v3509 = vlog2.pop %v3488
      %v3510 = vmul.f32 %v3509, 0.6931472
      %v3511 = vlog2.pop %v3489
      %v3512 = vmul.f32 %v3511, 0.6931472
      %v3513 = vlog2.pop %v3490
      %v3514 = vmul.f32 %v3513, 0.6931472
      %v3515 = vsub.f32 %v3335, %v3492
      %v3516 = vsub.f32 %v3336, %v3494
      %v3517 = vsub.f32 %v3337, %v3496
      %v3518 = vsub.f32 %v3338, %v3498
      %v3519 = vsub.f32 %v3339, %v3500
      %v3520 = vsub.f32 %v3340, %v3502
      %v3521 = vsub.f32 %v3341, %v3504
      %v3522 = vsub.f32 %v3342, %v3506
      %v3523 = vsub.f32 %v3343, %v3508
      %v3524 = vsub.f32 %v3344, %v3510
      %v3525 = vsub.f32 %v3345, %v3512
      %v3526 = vsub.f32 %v3346, %v3514
      %v3527 = vsub.f32 %v3407, %v3492
      %v3528 = vsub.f32 %v3408, %v3494
      %v3529 = vsub.f32 %v3409, %v3496
      %v3530 = vsub.f32 %v3410, %v3498
      %v3531 = vsub.f32 %v3411, %v3500
      %v3532 = vsub.f32 %v3412, %v3502
      %v3533 = vsub.f32 %v3413, %v3504
      %v3534 = vsub.f32 %v3414, %v3506
      %v3535 = vsub.f32 %v3415, %v3508
      %v3536 = vld [vmem:[%s499] sm:$0xff]
      %v3537 = vld [vmem:[%s499 + $0x8] sm:$0xff]
      %v3538 = vld [vmem:[%s499 + $0x10] sm:$0xff]
      %v3539 = vld [vmem:[%s499 + $0x18] sm:$0xff]
      %v3540 = vld [vmem:[%s499 + $0x20] sm:$0xff]
      %v3541 = vld [vmem:[%s499 + $0x28] sm:$0xff]
      %v3542 = vld [vmem:[%s499 + $0x30] sm:$0xff]
      %v3543 = vld [vmem:[%s499 + $0x38] sm:$0xff]
      %v3544 = vld [vmem:[%s499 + $0x40] sm:$0xff]
      %v3545 = vlaneseq
      %v3546 = vand.u32 %v3545, 127
      %v3547 = vadd.s32 %v3546, 21
      %3548 = vset.pattern.permute.xlu0 0
      %3549 = vperm.xlu0 %3548, %v3536
      %v3550 = vpop.permute.xlu0 %3549
      %3551 = vset.pattern.permute.xlu0 0
      %3552 = vperm.xlu0 %3551, %v3537
      %v3553 = vpop.permute.xlu0 %3552
      %3554 = vset.pattern.permute.xlu0 0
      %3555 = vperm.xlu0 %3554, %v3538
      %v3556 = vpop.permute.xlu0 %3555
      %3557 = vset.pattern.permute.xlu0 0
      %3558 = vperm.xlu0 %3557, %v3539
      %v3559 = vpop.permute.xlu0 %3558
      %3560 = vset.pattern.permute.xlu0 0
      %3561 = vperm.xlu0 %3560, %v3540
      %v3562 = vpop.permute.xlu0 %3561
      %3563 = vset.pattern.permute.xlu0 0
      %3564 = vperm.xlu0 %3563, %v3541
      %v3565 = vpop.permute.xlu0 %3564
      %3566 = vset.pattern.permute.xlu0 0
      %3567 = vperm.xlu0 %3566, %v3542
      %v3568 = vpop.permute.xlu0 %3567
      %3569 = vset.pattern.permute.xlu0 0
      %3570 = vperm.xlu0 %3569, %v3543
      %v3571 = vpop.permute.xlu0 %3570
      %3572 = vset.pattern.permute.xlu0 0
      %3573 = vperm.xlu0 %3572, %v3544
      %v3574 = vpop.permute.xlu0 %3573
      %vm3575 = vcmp.eq.s32.totalorder %v3546, %v3550
      %vm3576 = vcmp.eq.s32.totalorder %v3546, %v3553
      %vm3577 = vcmp.eq.s32.totalorder %v3546, %v3556
      %vm3578 = vcmp.eq.s32.totalorder %v3546, %v3559
      %vm3579 = vcmp.eq.s32.totalorder %v3546, %v3562
      %vm3580 = vcmp.eq.s32.totalorder %v3546, %v3565
      %vm3581 = vcmp.eq.s32.totalorder %v3546, %v3568
      %vm3582 = vcmp.eq.s32.totalorder %v3546, %v3571
      %vm3583 = vcmp.eq.s32.totalorder %v3546, %v3574
      %v3584 = vsel %vm3575, %v3515, -inf
      %v3585 = vsel %vm3576, %v3516, -inf
      %v3586 = vsel %vm3577, %v3517, -inf
      %v3587 = vsel %vm3578, %v3518, -inf
      %v3588 = vsel %vm3579, %v3519, -inf
      %v3589 = vsel %vm3580, %v3520, -inf
      %v3590 = vsel %vm3581, %v3521, -inf
      %v3591 = vsel %vm3582, %v3522, -inf
      %v3592 = vsel %vm3583, %v3523, -inf
      %v3593 = vsel %vm3285, %v3584, -inf
      %3594 = vmax.xlane.f32.xlu0 %v3593
      %v3595 = vpop.xlane.xlu0 %3594
      %v3596 = vsel %vm3285, %v3585, -inf
      %3597 = vmax.xlane.f32.xlu0 %v3596
      %v3598 = vpop.xlane.xlu0 %3597
      %v3599 = vsel %vm3285, %v3586, -inf
      %3600 = vmax.xlane.f32.xlu0 %v3599
      %v3601 = vpop.xlane.xlu0 %3600
      %v3602 = vsel %vm3285, %v3587, -inf
      %3603 = vmax.xlane.f32.xlu0 %v3602
      %v3604 = vpop.xlane.xlu0 %3603
      %v3605 = vsel %vm3285, %v3588, -inf
      %3606 = vmax.xlane.f32.xlu0 %v3605
      %v3607 = vpop.xlane.xlu0 %3606
      %v3608 = vsel %vm3285, %v3589, -inf
      %3609 = vmax.xlane.f32.xlu0 %v3608
      %v3610 = vpop.xlane.xlu0 %3609
      %v3611 = vsel %vm3285, %v3590, -inf
      %3612 = vmax.xlane.f32.xlu0 %v3611
      %v3613 = vpop.xlane.xlu0 %3612
      %v3614 = vsel %vm3285, %v3591, -inf
      %3615 = vmax.xlane.f32.xlu0 %v3614
      %v3616 = vpop.xlane.xlu0 %3615
      %v3617 = vsel %vm3285, %v3592, -inf
      %3618 = vmax.xlane.f32.xlu0 %v3617
      %v3619 = vpop.xlane.xlu0 %3618
      %vm3620 = vcmp.eq.s32.totalorder %v3547, %v3550
      %vm3621 = vcmp.eq.s32.totalorder %v3547, %v3553
      %vm3622 = vcmp.eq.s32.totalorder %v3547, %v3556
      %vm3623 = vcmp.eq.s32.totalorder %v3547, %v3559
      %vm3624 = vcmp.eq.s32.totalorder %v3547, %v3562
      %vm3625 = vcmp.eq.s32.totalorder %v3547, %v3565
      %vm3626 = vcmp.eq.s32.totalorder %v3547, %v3568
      %vm3627 = vcmp.eq.s32.totalorder %v3547, %v3571
      %vm3628 = vcmp.eq.s32.totalorder %v3547, %v3574
      %v3629 = vsel %vm3620, %v3527, -inf
      %v3630 = vsel %vm3621, %v3528, -inf
      %v3631 = vsel %vm3622, %v3529, -inf
      %v3632 = vsel %vm3623, %v3530, -inf
      %v3633 = vsel %vm3624, %v3531, -inf
      %v3634 = vsel %vm3625, %v3532, -inf
      %v3635 = vsel %vm3626, %v3533, -inf
      %v3636 = vsel %vm3627, %v3534, -inf
      %v3637 = vsel %vm3628, %v3535, -inf
      %v3638 = vsel %vm2511, %v3629, -inf
      %3639 = vmax.xlane.f32.xlu0 %v3638
      %v3640 = vpop.xlane.xlu0 %3639
      %v3641 = vsel %vm2511, %v3630, -inf
      %3642 = vmax.xlane.f32.xlu0 %v3641
      %v3643 = vpop.xlane.xlu0 %3642
      %v3644 = vsel %vm2511, %v3631, -inf
      %3645 = vmax.xlane.f32.xlu0 %v3644
      %v3646 = vpop.xlane.xlu0 %3645
      %v3647 = vsel %vm2511, %v3632, -inf
      %3648 = vmax.xlane.f32.xlu0 %v3647
      %v3649 = vpop.xlane.xlu0 %3648
      %v3650 = vsel %vm2511, %v3633, -inf
      %3651 = vmax.xlane.f32.xlu0 %v3650
      %v3652 = vpop.xlane.xlu0 %3651
      %v3653 = vsel %vm2511, %v3634, -inf
      %3654 = vmax.xlane.f32.xlu0 %v3653
      %v3655 = vpop.xlane.xlu0 %3654
      %v3656 = vsel %vm2511, %v3635, -inf
      %3657 = vmax.xlane.f32.xlu0 %v3656
      %v3658 = vpop.xlane.xlu0 %3657
      %v3659 = vsel %vm2511, %v3636, -inf
      %3660 = vmax.xlane.f32.xlu0 %v3659
      %v3661 = vpop.xlane.xlu0 %3660
      %v3662 = vsel %vm2511, %v3637, -inf
      %3663 = vmax.xlane.f32.xlu0 %v3662
      %v3664 = vpop.xlane.xlu0 %3663
      %v3665 = vmax.f32 %v3595, %v3640
      %v3666 = vmax.f32 %v3598, %v3643
      %v3667 = vmax.f32 %v3601, %v3646
      %v3668 = vmax.f32 %v3604, %v3649
      %v3669 = vmax.f32 %v3607, %v3652
      %v3670 = vmax.f32 %v3610, %v3655
      %v3671 = vmax.f32 %v3613, %v3658
      %v3672 = vmax.f32 %v3616, %v3661
      %v3673 = vmax.f32 %v3619, %v3664
      %3674 = vset.pattern.permute.xlu0 1
      %3675 = vperm.xlu0 %3674, %v3536
      %v3676 = vpop.permute.xlu0 %3675
      %3677 = vset.pattern.permute.xlu0 1
      %3678 = vperm.xlu0 %3677, %v3537
      %v3679 = vpop.permute.xlu0 %3678
      %3680 = vset.pattern.permute.xlu0 1
      %3681 = vperm.xlu0 %3680, %v3538
      %v3682 = vpop.permute.xlu0 %3681
      %3683 = vset.pattern.permute.xlu0 1
      %3684 = vperm.xlu0 %3683, %v3539
      %v3685 = vpop.permute.xlu0 %3684
      %3686 = vset.pattern.permute.xlu0 1
      %3687 = vperm.xlu0 %3686, %v3540
      %v3688 = vpop.permute.xlu0 %3687
      %3689 = vset.pattern.permute.xlu0 1
      %3690 = vperm.xlu0 %3689, %v3541
      %v3691 = vpop.permute.xlu0 %3690
      %3692 = vset.pattern.permute.xlu0 1
      %3693 = vperm.xlu0 %3692, %v3542
      %v3694 = vpop.permute.xlu0 %3693
      %3695 = vset.pattern.permute.xlu0 1
      %3696 = vperm.xlu0 %3695, %v3543
      %v3697 = vpop.permute.xlu0 %3696
      %3698 = vset.pattern.permute.xlu0 1
      %3699 = vperm.xlu0 %3698, %v3544
      %v3700 = vpop.permute.xlu0 %3699
      %vm3701 = vcmp.eq.s32.totalorder %v3546, %v3676
      %vm3702 = vcmp.eq.s32.totalorder %v3546, %v3679
      %vm3703 = vcmp.eq.s32.totalorder %v3546, %v3682
      %vm3704 = vcmp.eq.s32.totalorder %v3546, %v3685
      %vm3705 = vcmp.eq.s32.totalorder %v3546, %v3688
      %vm3706 = vcmp.eq.s32.totalorder %v3546, %v3691
      %vm3707 = vcmp.eq.s32.totalorder %v3546, %v3694
      %vm3708 = vcmp.eq.s32.totalorder %v3546, %v3697
      %vm3709 = vcmp.eq.s32.totalorder %v3546, %v3700
      %v3710 = vsel %vm3701, %v3515, -inf
      %v3711 = vsel %vm3702, %v3516, -inf
      %v3712 = vsel %vm3703, %v3517, -inf
      %v3713 = vsel %vm3704, %v3518, -inf
      %v3714 = vsel %vm3705, %v3519, -inf
      %v3715 = vsel %vm3706, %v3520, -inf
      %v3716 = vsel %vm3707, %v3521, -inf
      %v3717 = vsel %vm3708, %v3522, -inf
      %v3718 = vsel %vm3709, %v3523, -inf
      %v3719 = vsel %vm3285, %v3710, -inf
      %3720 = vmax.xlane.f32.xlu0 %v3719
      %v3721 = vpop.xlane.xlu0 %3720
      %v3722 = vsel %vm3285, %v3711, -inf
      %3723 = vmax.xlane.f32.xlu0 %v3722
      %v3724 = vpop.xlane.xlu0 %3723
      %v3725 = vsel %vm3285, %v3712, -inf
      %3726 = vmax.xlane.f32.xlu0 %v3725
      %v3727 = vpop.xlane.xlu0 %3726
      %v3728 = vsel %vm3285, %v3713, -inf
      %3729 = vmax.xlane.f32.xlu0 %v3728
      %v3730 = vpop.xlane.xlu0 %3729
      %v3731 = vsel %vm3285, %v3714, -inf
      %3732 = vmax.xlane.f32.xlu0 %v3731
      %v3733 = vpop.xlane.xlu0 %3732
      %v3734 = vsel %vm3285, %v3715, -inf
      %3735 = vmax.xlane.f32.xlu0 %v3734
      %v3736 = vpop.xlane.xlu0 %3735
      %v3737 = vsel %vm3285, %v3716, -inf
      %3738 = vmax.xlane.f32.xlu0 %v3737
      %v3739 = vpop.xlane.xlu0 %3738
      %v3740 = vsel %vm3285, %v3717, -inf
      %3741 = vmax.xlane.f32.xlu0 %v3740
      %v3742 = vpop.xlane.xlu0 %3741
      %v3743 = vsel %vm3285, %v3718, -inf
      %3744 = vmax.xlane.f32.xlu0 %v3743
      %v3745 = vpop.xlane.xlu0 %3744
      %vm3746 = vcmp.eq.s32.totalorder %v3547, %v3676
      %vm3747 = vcmp.eq.s32.totalorder %v3547, %v3679
      %vm3748 = vcmp.eq.s32.totalorder %v3547, %v3682
      %vm3749 = vcmp.eq.s32.totalorder %v3547, %v3685
      %vm3750 = vcmp.eq.s32.totalorder %v3547, %v3688
      %vm3751 = vcmp.eq.s32.totalorder %v3547, %v3691
      %vm3752 = vcmp.eq.s32.totalorder %v3547, %v3694
      %vm3753 = vcmp.eq.s32.totalorder %v3547, %v3697
      %vm3754 = vcmp.eq.s32.totalorder %v3547, %v3700
      %v3755 = vsel %vm3746, %v3527, -inf
      %v3756 = vsel %vm3747, %v3528, -inf
      %v3757 = vsel %vm3748, %v3529, -inf
      %v3758 = vsel %vm3749, %v3530, -inf
      %v3759 = vsel %vm3750, %v3531, -inf
      %v3760 = vsel %vm3751, %v3532, -inf
      %v3761 = vsel %vm3752, %v3533, -inf
      %v3762 = vsel %vm3753, %v3534, -inf
      %v3763 = vsel %vm3754, %v3535, -inf
      %v3764 = vsel %vm2511, %v3755, -inf
      %3765 = vmax.xlane.f32.xlu0 %v3764
      %v3766 = vpop.xlane.xlu0 %3765
      %v3767 = vsel %vm2511, %v3756, -inf
      %3768 = vmax.xlane.f32.xlu0 %v3767
      %v3769 = vpop.xlane.xlu0 %3768
      %v3770 = vsel %vm2511, %v3757, -inf
      %3771 = vmax.xlane.f32.xlu0 %v3770
      %v3772 = vpop.xlane.xlu0 %3771
      %v3773 = vsel %vm2511, %v3758, -inf
      %3774 = vmax.xlane.f32.xlu0 %v3773
      %v3775 = vpop.xlane.xlu0 %3774
      %v3776 = vsel %vm2511, %v3759, -inf
      %3777 = vmax.xlane.f32.xlu0 %v3776
      %v3778 = vpop.xlane.xlu0 %3777
      %v3779 = vsel %vm2511, %v3760, -inf
      %3780 = vmax.xlane.f32.xlu0 %v3779
      %v3781 = vpop.xlane.xlu0 %3780
      %v3782 = vsel %vm2511, %v3761, -inf
      %3783 = vmax.xlane.f32.xlu0 %v3782
      %v3784 = vpop.xlane.xlu0 %3783
      %v3785 = vsel %vm2511, %v3762, -inf
      %3786 = vmax.xlane.f32.xlu0 %v3785
      %v3787 = vpop.xlane.xlu0 %3786
      %v3788 = vsel %vm2511, %v3763, -inf
      %3789 = vmax.xlane.f32.xlu0 %v3788
      %v3790 = vpop.xlane.xlu0 %3789
      %v3791 = vmax.f32 %v3721, %v3766
      %v3792 = vmax.f32 %v3724, %v3769
      %v3793 = vmax.f32 %v3727, %v3772
      %v3794 = vmax.f32 %v3730, %v3775
      %v3795 = vmax.f32 %v3733, %v3778
      %v3796 = vmax.f32 %v3736, %v3781
      %v3797 = vmax.f32 %v3739, %v3784
      %v3798 = vmax.f32 %v3742, %v3787
      %v3799 = vmax.f32 %v3745, %v3790
      %vm3800 = vcmask 7168
      %v3801 = vsel %vm3800, %v3665, %v3791
      %v3802 = vsel %vm3800, %v3666, %v3792
      %v3803 = vsel %vm3800, %v3667, %v3793
      %v3804 = vsel %vm3800, %v3668, %v3794
      %v3805 = vsel %vm3800, %v3669, %v3795
      %v3806 = vsel %vm3800, %v3670, %v3796
      %v3807 = vsel %vm3800, %v3671, %v3797
      %v3808 = vsel %vm3800, %v3672, %v3798
      %v3809 = vsel %vm3800, %v3673, %v3799
      %vm3810 = vcmask 15360
      %v3811 = vsel %vm3810, %v3801, -inf
      %3812 = vmax.xlane.f32.xlu0 %v3811
      %v3813 = vpop.xlane.xlu0 %3812
      %v3814 = vsel %vm3810, %v3802, -inf
      %3815 = vmax.xlane.f32.xlu0 %v3814
      %v3816 = vpop.xlane.xlu0 %3815
      %v3817 = vsel %vm3810, %v3803, -inf
      %3818 = vmax.xlane.f32.xlu0 %v3817
      %v3819 = vpop.xlane.xlu0 %3818
      %v3820 = vsel %vm3810, %v3804, -inf
      %3821 = vmax.xlane.f32.xlu0 %v3820
      %v3822 = vpop.xlane.xlu0 %3821
      %v3823 = vsel %vm3810, %v3805, -inf
      %3824 = vmax.xlane.f32.xlu0 %v3823
      %v3825 = vpop.xlane.xlu0 %3824
      %v3826 = vsel %vm3810, %v3806, -inf
      %3827 = vmax.xlane.f32.xlu0 %v3826
      %v3828 = vpop.xlane.xlu0 %3827
      %v3829 = vsel %vm3810, %v3807, -inf
      %3830 = vmax.xlane.f32.xlu0 %v3829
      %v3831 = vpop.xlane.xlu0 %3830
      %v3832 = vsel %vm3810, %v3808, -inf
      %3833 = vmax.xlane.f32.xlu0 %v3832
      %v3834 = vpop.xlane.xlu0 %3833
      %v3835 = vsel %vm3810, %v3809, -inf
      %3836 = vmax.xlane.f32.xlu0 %v3835
      %v3837 = vpop.xlane.xlu0 %3836
      %v3838 = vmax.f32 %v3813, -1e+30
      %v3839 = vmax.f32 %v3816, -1e+30
      %v3840 = vmax.f32 %v3819, -1e+30
      %v3841 = vmax.f32 %v3822, -1e+30
      %v3842 = vmax.f32 %v3825, -1e+30
      %v3843 = vmax.f32 %v3828, -1e+30
      %v3844 = vmax.f32 %v3831, -1e+30
      %v3845 = vmax.f32 %v3834, -1e+30
      %v3846 = vmax.f32 %v3837, -1e+30
      %v3847 = vsub.f32 %v3801, %v3838
      %v3848 = vsub.f32 %v3802, %v3839
      %v3849 = vsub.f32 %v3803, %v3840
      %v3850 = vsub.f32 %v3804, %v3841
      %v3851 = vsub.f32 %v3805, %v3842
      %v3852 = vsub.f32 %v3806, %v3843
      %v3853 = vsub.f32 %v3807, %v3844
      %v3854 = vsub.f32 %v3808, %v3845
      %v3855 = vsub.f32 %v3809, %v3846
      %v3856 = vmul.f32 %v3847, 1.442695
      %v3857 = vpow.pop %v3856
      %v3858 = vmul.f32 %v3848, 1.442695
      %v3859 = vpow.pop %v3858
      %v3860 = vmul.f32 %v3849, 1.442695
      %v3861 = vpow.pop %v3860
      %v3862 = vmul.f32 %v3850, 1.442695
      %v3863 = vpow.pop %v3862
      %v3864 = vmul.f32 %v3851, 1.442695
      %v3865 = vpow.pop %v3864
      %v3866 = vmul.f32 %v3852, 1.442695
      %v3867 = vpow.pop %v3866
      %v3868 = vmul.f32 %v3853, 1.442695
      %v3869 = vpow.pop %v3868
      %v3870 = vmul.f32 %v3854, 1.442695
      %v3871 = vpow.pop %v3870
      %v3872 = vmul.f32 %v3855, 1.442695
      %v3873 = vpow.pop %v3872
      %v3874 = vsel %vm3810, %v3857, 0.0
      %3875 = vadd.xlane.f32.xlu0 %v3874
      %v3876 = vpop.xlane.xlu0 %3875
      %v3877 = vsel %vm3810, %v3859, 0.0
      %3878 = vadd.xlane.f32.xlu0 %v3877
      %v3879 = vpop.xlane.xlu0 %3878
      %v3880 = vsel %vm3810, %v3861, 0.0
      %3881 = vadd.xlane.f32.xlu0 %v3880
      %v3882 = vpop.xlane.xlu0 %3881
      %v3883 = vsel %vm3810, %v3863, 0.0
      %3884 = vadd.xlane.f32.xlu0 %v3883
      %v3885 = vpop.xlane.xlu0 %3884
      %v3886 = vsel %vm3810, %v3865, 0.0
      %3887 = vadd.xlane.f32.xlu0 %v3886
      %v3888 = vpop.xlane.xlu0 %3887
      %v3889 = vsel %vm3810, %v3867, 0.0
      %3890 = vadd.xlane.f32.xlu0 %v3889
      %v3891 = vpop.xlane.xlu0 %3890
      %v3892 = vsel %vm3810, %v3869, 0.0
      %3893 = vadd.xlane.f32.xlu0 %v3892
      %v3894 = vpop.xlane.xlu0 %3893
      %v3895 = vsel %vm3810, %v3871, 0.0
      %3896 = vadd.xlane.f32.xlu0 %v3895
      %v3897 = vpop.xlane.xlu0 %3896
      %v3898 = vsel %vm3810, %v3873, 0.0
      %3899 = vadd.xlane.f32.xlu0 %v3898
      %v3900 = vpop.xlane.xlu0 %3899
      %v3901 = vlog2.pop %v3876
      %v3902 = vmul.f32 %v3901, 0.6931472
      %v3903 = vlog2.pop %v3879
      %v3904 = vmul.f32 %v3903, 0.6931472
      %v3905 = vlog2.pop %v3882
      %v3906 = vmul.f32 %v3905, 0.6931472
      %v3907 = vlog2.pop %v3885
      %v3908 = vmul.f32 %v3907, 0.6931472
      %v3909 = vlog2.pop %v3888
      %v3910 = vmul.f32 %v3909, 0.6931472
      %v3911 = vlog2.pop %v3891
      %v3912 = vmul.f32 %v3911, 0.6931472
      %v3913 = vlog2.pop %v3894
      %v3914 = vmul.f32 %v3913, 0.6931472
      %v3915 = vlog2.pop %v3897
      %v3916 = vmul.f32 %v3915, 0.6931472
      %v3917 = vlog2.pop %v3900
      %v3918 = vmul.f32 %v3917, 0.6931472
      %v3919 = vadd.f32 %v3813, %v3902
      %v3920 = vadd.f32 %v3816, %v3904
      %v3921 = vadd.f32 %v3819, %v3906
      %v3922 = vadd.f32 %v3822, %v3908
      %v3923 = vadd.f32 %v3825, %v3910
      %v3924 = vadd.f32 %v3828, %v3912
      %v3925 = vadd.f32 %v3831, %v3914
      %v3926 = vadd.f32 %v3834, %v3916
      %v3927 = vadd.f32 %v3837, %v3918
      %v3928 = vadd.f32 %v3919, 0.0
      %v3929 = vadd.f32 %v3920, 0.0
      %v3930 = vadd.f32 %v3921, 0.0
      %v3934 = vrot.slane %v3517, 2
      %v3935 = vrot.slane %v3518, 2
      %v3936 = vsel %vm1607, %v3934, %v3935
      %v3937 = vrot.slane %v3519, 2
      %v3938 = vsel %vm1607, %v3935, %v3937
      %3939 = vrot.lane.b32.xlu0 %v3936, 108
      %v3940 = vpop.permute.xlu0 %3939
      %3941 = vrot.lane.b32.xlu0 %v3938, 108
      %v3942 = vpop.permute.xlu0 %3941
      %3943 = vrot.lane.b32.xlu0 %v3937, 108
      %v3944 = vpop.permute.xlu0 %3943
      %v3948 = vadd.f32 %v3928, %v3940
      %v3949 = vadd.f32 %v3929, %v3942
      %v3950 = vadd.f32 %v3930, %v3944
      %v3954 = vrot.slane %v3921, 2
      %v3955 = vrot.slane %v3922, 2
      %v3956 = vsel %vm1607, %v3954, %v3955
      %v3957 = vrot.slane %v3923, 2
      %v3958 = vsel %vm1607, %v3955, %v3957
      %v3962 = vadd.f32 %v3928, %v3956
      %v3963 = vadd.f32 %v3929, %v3958
      %v3964 = vadd.f32 %v3930, %v3957
      %v3967 = vrot.slane %v3519, 4
      %v3968 = vrot.slane %v3520, 4
      %v3969 = vsel %vm1738, %v3967, %v3968
      %v3970 = vrot.slane %v3521, 4
      %v3971 = vsel %vm1738, %v3968, %v3970
      %3972 = vrot.lane.b32.xlu0 %v3969, 108
      %v3973 = vpop.permute.xlu0 %3972
      %3974 = vrot.lane.b32.xlu0 %v3971, 108
      %v3975 = vpop.permute.xlu0 %3974
      %3976 = vrot.lane.b32.xlu0 %v3970, 108
      %v3977 = vpop.permute.xlu0 %3976
      %v3981 = vadd.f32 %v3962, %v3973
      %v3982 = vadd.f32 %v3963, %v3975
      %v3983 = vadd.f32 %v3964, %v3977
      %v3986 = vrot.slane %v3923, 4
      %v3987 = vrot.slane %v3924, 4
      %v3988 = vsel %vm1738, %v3986, %v3987
      %v3989 = vrot.slane %v3925, 4
      %v3990 = vsel %vm1738, %v3987, %v3989
      %v3994 = vadd.f32 %v3962, %v3988
      %v3995 = vadd.f32 %v3963, %v3990
      %v3996 = vadd.f32 %v3964, %v3989
      %v3999 = vrot.slane %v3521, 6
      %v4000 = vrot.slane %v3522, 6
      %v4001 = vsel %vm1376, %v3999, %v4000
      %v4002 = vrot.slane %v3523, 6
      %v4003 = vsel %vm1376, %v4000, %v4002
      %4004 = vrot.lane.b32.xlu0 %v4001, 108
      %v4005 = vpop.permute.xlu0 %4004
      %4006 = vrot.lane.b32.xlu0 %v4003, 108
      %v4007 = vpop.permute.xlu0 %4006
      %4008 = vrot.lane.b32.xlu0 %v4002, 108
      %v4009 = vpop.permute.xlu0 %4008
      %v4013 = vadd.f32 %v3994, %v4005
      %v4014 = vadd.f32 %v3995, %v4007
      %v4015 = vadd.f32 %v3996, %v4009
      %v4018 = vrot.slane %v3925, 6
      %v4019 = vrot.slane %v3926, 6
      %v4020 = vsel %vm1376, %v4018, %v4019
      %v4021 = vrot.slane %v3927, 6
      %v4022 = vsel %vm1376, %v4019, %v4021
      %v4026 = vadd.f32 %v3994, %v4020
      %v4027 = vadd.f32 %v3995, %v4022
      %v4028 = vadd.f32 %v3996, %v4021
      %4032 = vrot.lane.b32.xlu0 %v3524, 108
      %v4033 = vpop.permute.xlu0 %4032
      %4034 = vrot.lane.b32.xlu0 %v3525, 108
      %v4035 = vpop.permute.xlu0 %4034
      %4036 = vrot.lane.b32.xlu0 %v3526, 108
      %v4037 = vpop.permute.xlu0 %4036
      %v4041 = vadd.f32 %v4026, %v4033
      %v4042 = vadd.f32 %v4027, %v4035
      %v4043 = vadd.f32 %v4028, %v4037
      %4047 = vrot.lane.b32.xlu0 %v3981, 1
      %v4048 = vpop.permute.xlu0 %4047
      %4049 = vrot.lane.b32.xlu0 %v3982, 1
      %v4050 = vpop.permute.xlu0 %4049
      %4051 = vrot.lane.b32.xlu0 %v3983, 1
      %v4052 = vpop.permute.xlu0 %4051
      %4059 = vrot.lane.b32.xlu0 %v4013, 2
      %v4060 = vpop.permute.xlu0 %4059
      %4061 = vrot.lane.b32.xlu0 %v4014, 2
      %v4062 = vpop.permute.xlu0 %4061
      %4063 = vrot.lane.b32.xlu0 %v4015, 2
      %v4064 = vpop.permute.xlu0 %4063
      %4071 = vrot.lane.b32.xlu0 %v4041, 3
      %v4072 = vpop.permute.xlu0 %4071
      %4073 = vrot.lane.b32.xlu0 %v4042, 3
      %v4074 = vpop.permute.xlu0 %4073
      %4075 = vrot.lane.b32.xlu0 %v4043, 3
      %v4076 = vpop.permute.xlu0 %4075
      %v4080 = vsel %vm3800, %v3948, %v4048
      %v4081 = vsel %vm3800, %v3949, %v4050
      %v4082 = vsel %vm3800, %v3950, %v4052
      %v4083 = vsel %vm3810, %v4080, %v4060
      %v4084 = vsel %vm3810, %v4081, %v4062
      %v4085 = vsel %vm3810, %v4082, %v4064
      %vm4086 = vcmask 23552
      %v4087 = vsel %vm4086, %v4083, %v4072
      %v4088 = vsel %vm4086, %v4084, %v4074
      %v4089 = vsel %vm4086, %v4085, %v4076
      %vm4090 = vcmask 31744
      %4091 = vst.msk [vmem:[%s504] sm:$0xff] %vm4090, %v4087
      %4092 = vst.msk [vmem:[%s504 + $0x8] sm:$0xff] %vm4090, %v4088
      %vm4093 = vcmask 25600
      %4094 = vst.msk [vmem:[%s504 + $0x10] sm:$0x3] %vm4093, %v4089
      %p4095 = scmp.lt.s32.totalorder %s23, 1
      %s4096 = scalar_select %p4095, %s23, 1
      %s4097 = smul.addr %s4096, 3
      %s4098 = smul.addr %s4097, 8
      %s4099 = scalar_lea.vmem %s12, %s4098
      // Predicated region
      $region69: #{hsmm_forward.1} parent=67 // pred_check
        %p4100 = pneg %p323
      $region70: #{hsmm_forward.1} parent=67 // pred_check_branch
        %4102 = sbr.rel (%p4100) target = $region72
      $region71: #{hsmm_forward.1} parent=67 // pred_region
        _
      $region72: #{hsmm_forward.1} parent=67 // pred_fallthru
        _
    $region68: #{hsmm_forward.1} parent=5 // pred_fallthru
      _
    %p4103 = scmp.le.s32.totalorder 2, %s18
    // Predicated region
    $region73: #{hsmm_forward.1} parent=5 // pred_check
      %p4104 = pneg %p4103
    $region74: #{hsmm_forward.1} parent=5 // pred_check_branch
      %4106 = sbr.rel (%p4104) target = $region76
    $region75: #{hsmm_forward.1} parent=5 // pred_region
      %s4107 = ssub.s32 %s18, 2
      // Predicated region
      $region77: #{hsmm_forward.1} parent=75 // pred_check
        %p4108 = pneg %p329
      $region78: #{hsmm_forward.1} parent=75 // pred_check_branch
        %4110 = sbr.rel (%p4108) target = $region80
      $region79: #{hsmm_forward.1} parent=75 // pred_region
        %p4111 = scmp.lt.s32.totalorder %s24, 1
        %s4112 = scalar_select %p4111, %s24, 1
        %s4113 = smul.addr %s4112, 3
        %s4114 = smul.addr %s4113, 8
        %s4115 = scalar_lea.vmem %s12, %s4114
      $region80: #{hsmm_forward.1} parent=75 // pred_fallthru
        _
    $region76: #{hsmm_forward.1} parent=5 // pred_fallthru
      _
  $region6: #{hsmm_forward.1} parent=0 // loop_footer
    %s22 = sadd.s32 1, %s18
  $region7: #{hsmm_forward.1} parent=0 // loop_footer_branch
    %17 = sbr.rel target = $region3
  $region8: #{hsmm_forward.1} parent=0 // loop_exit
    _

</llo_original>
